<compile_context>
chip_gen: v5e
topology: v5e:2x2
jax: 0.10.0
libtpu: 0.0.40
codegen_flags: <defaults>
</compile_context>

<pallas_src>
import functools
import numpy as np

import jax
import jax.numpy as jnp
from jax.experimental import pallas as pl
from jax.experimental.pallas import tpu as pltpu


# ----------------------------------------------------------------------------
# helpers
# ----------------------------------------------------------------------------
def _pick_tile(dim, target, align):
    """Largest tile <= target that is a multiple of `align` and divides `dim`.
    Falls back to the full dimension (block == full dim is always legal)."""
    if dim <= target:
        return dim
    t = (target // align) * align
    while t >= align:
        if dim % t == 0:
            return t
        t -= align
    return dim


@functools.lru_cache(maxsize=None)
def _vmem_limit_bytes():
    """Scoped-VMEM budget: 3/4 of physical per-core VMEM (64 MiB on v7x,
    128 MiB on v5e/v6e).  Falls back to 48 MiB if the query is unavailable."""
    cap = 64 * 1024 * 1024
    try:
        cap = int(pltpu.get_tpu_info().vmem_capacity_bytes)
    except Exception:
        pass
    return (cap * 3) // 4


# ----------------------------------------------------------------------------
# Kernel 1: tiled matmul (+ bias, optional ReLU, optional scalar scale)
# ----------------------------------------------------------------------------
def _matmul_kernel(x_ref, w_ref, b_ref, o_ref, acc_ref, *, activation, scale):
    @pl.when(pl.program_id(2) == 0)
    def _():
        acc_ref[...] = jnp.zeros_like(acc_ref)

    acc_ref[...] += jnp.dot(x_ref[...], w_ref[...],
                            preferred_element_type=jnp.float32)

    @pl.when(pl.program_id(2) == pl.num_programs(2) - 1)
    def _():
        out = acc_ref[...] + b_ref[...]
        if activation == "relu":
            out = jnp.maximum(out, 0.0)
        if scale != 1.0:
            out = out * scale
        o_ref[...] = out.astype(o_ref.dtype)


def matmul(x, w, b=None, *, activation=None, scale=1.0,
           out_dtype=jnp.float32, tm=512, tn=1024, tk=512):
    """x:(M,K) @ w:(K,N) + b with bf16 MXU operands and a f32 VMEM accumulator."""
    M, K = x.shape
    N = w.shape[1]
    if b is None:
        b = jnp.zeros((N,), jnp.float32)
    b2 = b.reshape(1, N).astype(jnp.float32)

    tm = _pick_tile(M, tm, 8)
    tn = _pick_tile(N, tn, 128)
    tk = _pick_tile(K, tk, 128)
    grid = (M // tm, N // tn, K // tk)

    return pl.pallas_call(
        functools.partial(_matmul_kernel, activation=activation,
                          scale=float(scale)),
        out_shape=jax.ShapeDtypeStruct((M, N), out_dtype),
        grid_spec=pltpu.PrefetchScalarGridSpec(
            num_scalar_prefetch=0,
            grid=grid,
            in_specs=[pl.BlockSpec((tm, tk), lambda i, j, k: (i, k)),
                      pl.BlockSpec((tk, tn), lambda i, j, k: (k, j)),
                      pl.BlockSpec((1, tn), lambda i, j, k: (0, j))],
            out_specs=pl.BlockSpec((tm, tn), lambda i, j, k: (i, j)),
            scratch_shapes=[pltpu.VMEM((tm, tn), jnp.float32)]),
        compiler_params=pltpu.CompilerParams(
            dimension_semantics=("parallel", "parallel", "arbitrary"),
            vmem_limit_bytes=_vmem_limit_bytes()),
    )(x.astype(jnp.bfloat16), w.astype(jnp.bfloat16), b2)


# ----------------------------------------------------------------------------
# Kernel 2: fused multi-head attention core
#   grid = (B, Lq_tiles); per step: all heads' scores->softmax->context into a
#   VMEM ctx scratch, then ONE fc matmul + residual + LayerNorm + non-pad mask.
# ----------------------------------------------------------------------------
def _mha_core_kernel(q_ref, k_ref, v_ref, kbias_ref, resid_ref, npm_ref,
                     w_fc_ref, b_fc_ref, g_ref, beta_ref, o_ref, ctx_ref,
                     *, n_head, d_v, causal):
    tq = q_ref.shape[2]
    Lk = k_ref.shape[2]
    kbias = kbias_ref[0]                              # (1, Lk) f32 key-pad bias

    if causal:
        row0 = pl.program_id(1) * tq
        iq = row0 + jax.lax.broadcasted_iota(jnp.int32, (tq, Lk), 0)
        ik = jax.lax.broadcasted_iota(jnp.int32, (tq, Lk), 1)
        causal_bias = jnp.where(ik > iq, jnp.float32(-1e30), jnp.float32(0.0))

    # Static head unroll; no value is carried across iterations (per-head
    # context goes straight to VMEM scratch), so live ranges stay tight.
    for h in range(n_head):
        qh = q_ref[0, h]                              # (tq, Dk) bf16, lane-aligned
        kh = k_ref[0, h]                              # (Lk, Dk) bf16
        vh = v_ref[0, h]                              # (Lk, Dv) bf16

        s = jax.lax.dot_general(qh, kh, (((1,), (1,)), ((), ())),
                                preferred_element_type=jnp.float32)  # (tq, Lk)
        s = s + kbias
        if causal:
            s = s + causal_bias

        m = jnp.max(s, axis=-1, keepdims=True)
        p = jnp.exp(s - m)
        denom = jnp.sum(p, axis=-1, keepdims=True)
        p = p * pl.reciprocal(denom, approx=True)

        ctx = jnp.dot(p.astype(jnp.bfloat16), vh,
                      preferred_element_type=jnp.float32)            # (tq, Dv)
        ctx_ref[:, h * d_v:(h + 1) * d_v] = ctx.astype(jnp.bfloat16)

    # Single K = H*Dv output-projection matmul, then bias + residual + LN + mask.
    fc = jnp.dot(ctx_ref[...], w_fc_ref[...],
                 preferred_element_type=jnp.float32)                 # (tq, D)
    z = fc + b_fc_ref[...] + resid_ref[0].astype(jnp.float32)
    mu = jnp.mean(z, axis=-1, keepdims=True)
    var = jnp.mean(jnp.square(z - mu), axis=-1, keepdims=True)
    z = (z - mu) * jax.lax.rsqrt(var + 1e-5)
    z = z * g_ref[...] + beta_ref[...]
    o_ref[0] = (z * npm_ref[0]).astype(o_ref.dtype)


def _mha_core_call(q4, k4, v4, kbias, residual, non_pad, p, causal):
    B, H, Lq, Dk = q4.shape
    Lk = k4.shape[2]
    Dv = v4.shape[3]
    D = residual.shape[-1]
    tq = _pick_tile(Lq, 256, 8)
    nq = Lq // tq

    return pl.pallas_call(
        functools.partial(_mha_core_kernel, n_head=H, d_v=Dv, causal=causal),
        out_shape=jax.ShapeDtypeStruct((B, Lq, D), jnp.bfloat16),
        grid_spec=pltpu.PrefetchScalarGridSpec(
            num_scalar_prefetch=0,
            grid=(B, nq),
            in_specs=[
                pl.BlockSpec((1, H, tq, Dk), lambda b, i: (b, 0, i, 0)),
                pl.BlockSpec((1, H, Lk, Dk), lambda b, i: (b, 0, 0, 0)),
                pl.BlockSpec((1, H, Lk, Dv), lambda b, i: (b, 0, 0, 0)),
                pl.BlockSpec((1, 1, Lk), lambda b, i: (b, 0, 0)),
                pl.BlockSpec((1, tq, D), lambda b, i: (b, i, 0)),
                pl.BlockSpec((1, tq, 1), lambda b, i: (b, i, 0)),
                pl.BlockSpec((H * Dv, D), lambda b, i: (0, 0)),
                pl.BlockSpec((1, D), lambda b, i: (0, 0)),
                pl.BlockSpec((1, D), lambda b, i: (0, 0)),
                pl.BlockSpec((1, D), lambda b, i: (0, 0)),
            ],
            out_specs=pl.BlockSpec((1, tq, D), lambda b, i: (b, i, 0)),
            scratch_shapes=[pltpu.VMEM((tq, H * Dv), jnp.bfloat16)]),
        compiler_params=pltpu.CompilerParams(
            dimension_semantics=("parallel", "parallel"),
            vmem_limit_bytes=_vmem_limit_bytes()),
    )(q4, k4, v4, kbias, residual, non_pad,
      p["w_fc"], p["b_fc"].reshape(1, D),
      p["ln_g"].reshape(1, D), p["ln_b"].reshape(1, D))


def multi_head_attention(q_in, kv_in, kbias, non_pad, p, causal, self_attn):
    """Fused MHA layer.  Self-attention uses a single fused QKV projection;
    cross-attention uses a Q projection (of the decoder stream) and a fused KV
    projection (of the encoder output).  1/sqrt(d_k) is folded into w_q."""
    B, Lq, D = q_in.shape
    Lk = kv_in.shape[1]
    H, Dk, Dv = p["n_head"], p["d_k"], p["d_v"]

    if self_attn:
        qkv = matmul(q_in.reshape(B * Lq, D), p["w_qkv"], p["b_qkv"],
                     out_dtype=jnp.bfloat16).reshape(B, Lq, H * (2 * Dk + Dv))
        q_p = qkv[..., :H * Dk]
        k_p = qkv[..., H * Dk:2 * H * Dk]
        v_p = qkv[..., 2 * H * Dk:]
    else:
        q_p = matmul(q_in.reshape(B * Lq, D), p["w_q"], p["b_q"],
                     out_dtype=jnp.bfloat16).reshape(B, Lq, H * Dk)
        kv = matmul(kv_in.reshape(B * Lk, D), p["w_kv"], p["b_kv"],
                    out_dtype=jnp.bfloat16).reshape(B, Lk, H * (Dk + Dv))
        k_p = kv[..., :H * Dk]
        v_p = kv[..., H * Dk:]

    # One-time wrapper relayout to lane-aligned per-head slabs (B, H, L, Dh).
    q4 = q_p.reshape(B, Lq, H, Dk).transpose(0, 2, 1, 3)
    k4 = k_p.reshape(B, Lk, H, Dk).transpose(0, 2, 1, 3)
    v4 = v_p.reshape(B, Lk, H, Dv).transpose(0, 2, 1, 3)
    return _mha_core_call(q4, k4, v4, kbias, q_in, non_pad, p, causal)


# ----------------------------------------------------------------------------
# Kernel 3: fused position-wise FFN (w1 + ReLU + w2 + residual + LN + mask)
# ----------------------------------------------------------------------------
def _ffn_kernel(x_ref, w1_ref, b1_ref, w2_ref, b2_ref, g_ref, beta_ref,
                npm_ref, o_ref):
    x = x_ref[...]                                            # (tm, D) bf16
    h = jnp.dot(x, w1_ref[...], preferred_element_type=jnp.float32) + b1_ref[...]
    h = jnp.maximum(h, 0.0)
    y = jnp.dot(h.astype(jnp.bfloat16), w2_ref[...],
                preferred_element_type=jnp.float32) + b2_ref[...]
    z = y + x.astype(jnp.float32)
    mu = jnp.mean(z, axis=-1, keepdims=True)
    var = jnp.mean(jnp.square(z - mu), axis=-1, keepdims=True)
    z = (z - mu) * jax.lax.rsqrt(var + 1e-5)
    z = z * g_ref[...] + beta_ref[...]
    o_ref[...] = (z * npm_ref[...]).astype(o_ref.dtype)


def pos_ffn(x, non_pad, p):
    B, L, D = x.shape
    M = B * L
    d_inner = p["w1"].shape[1]
    tm = _pick_tile(M, 256, 8)

    out = pl.pallas_call(
        _ffn_kernel,
        out_shape=jax.ShapeDtypeStruct((M, D), jnp.bfloat16),
        grid=(M // tm,),
        in_specs=[
            pl.BlockSpec((tm, D), lambda i: (i, 0)),
            pl.BlockSpec((D, d_inner), lambda i: (0, 0)),
            pl.BlockSpec((1, d_inner), lambda i: (0, 0)),
            pl.BlockSpec((d_inner, D), lambda i: (0, 0)),
            pl.BlockSpec((1, D), lambda i: (0, 0)),
            pl.BlockSpec((1, D), lambda i: (0, 0)),
            pl.BlockSpec((1, D), lambda i: (0, 0)),
            pl.BlockSpec((tm, 1), lambda i: (i, 0)),
        ],
        out_specs=pl.BlockSpec((tm, D), lambda i: (i, 0)),
        compiler_params=pltpu.CompilerParams(
            dimension_semantics=("parallel",),
            vmem_limit_bytes=_vmem_limit_bytes()),
    )(x.reshape(M, D).astype(jnp.bfloat16),
      p["w1"], p["b1"].reshape(1, d_inner),
      p["w2"], p["b2"].reshape(1, D),
      p["ln_g"].reshape(1, D), p["ln_b"].reshape(1, D),
      non_pad.reshape(M, 1))
    return out.reshape(B, L, D)


# ----------------------------------------------------------------------------
# Mask / positional-encoding helpers (match the PyTorch reference)
# ----------------------------------------------------------------------------
def key_padding_bias(seq_k):
    """(B, 1, Lk) additive bias: -1e30 on padded keys (finite -> no NaN rows)."""
    return jnp.where(seq_k == 0, -1e30, 0.0).astype(jnp.float32)[:, None, :]


def get_non_pad_mask(seq):
    assert seq.ndim == 2
    return (seq != 0).astype(jnp.float32)[:, :, None]


def get_sinusoid_encoding_table_np(n_position, d_hid, padding_idx=None):
    def cal_angle(position, hid_idx):
        return position / np.power(10000, 2 * (hid_idx // 2) / d_hid)

    table = np.array(
        [[cal_angle(p, j) for j in range(d_hid)] for p in range(n_position)])
    table[:, 0::2] = np.sin(table[:, 0::2])
    table[:, 1::2] = np.cos(table[:, 1::2])
    if padding_idx is not None:
        table[padding_idx] = 0.0
    return table.astype(np.float32)


# ----------------------------------------------------------------------------
# Layers
# ----------------------------------------------------------------------------
def encoder_layer(x, src_kbias, non_pad, lp):
    x = multi_head_attention(x, x, src_kbias, non_pad, lp["slf"],
                             causal=False, self_attn=True)
    x = pos_ffn(x, non_pad, lp["ffn"])
    return x


def decoder_layer(y, enc_output, tgt_kbias, src_kbias, non_pad, lp):
    y = multi_head_attention(y, y, tgt_kbias, non_pad, lp["slf"],
                             causal=True, self_attn=True)
    y = multi_head_attention(y, enc_output, src_kbias, non_pad, lp["enc"],
                             causal=False, self_attn=False)
    y = pos_ffn(y, non_pad, lp["ffn"])
    return y


# ----------------------------------------------------------------------------
# Parameters (deterministic synthetic init; matmul weights stored as bf16)
# ----------------------------------------------------------------------------
def init_params(key, n_src_vocab, n_tgt_vocab, max_len, d_model, d_inner,
                n_layers, n_head):
    d_k = d_v = d_model // n_head
    temp_inv = 1.0 / float(np.sqrt(d_k))
    keys = iter(jax.random.split(key, 4096))

    def nrm(shape, scale=0.05):
        return scale * jax.random.normal(next(keys), shape, jnp.float32)

    def mha_params(self_attn):
        w_q = nrm((d_model, n_head * d_k)) * temp_inv   # 1/sqrt(d_k) folded in
        w_k = nrm((d_model, n_head * d_k))
        w_v = nrm((d_model, n_head * d_v))
        p = dict(
            n_head=n_head, d_k=d_k, d_v=d_v,
            w_fc=nrm((n_head * d_v, d_model)).astype(jnp.bfloat16),
            b_fc=jnp.zeros((d_model,), jnp.float32),
            ln_g=jnp.ones((d_model,), jnp.float32),
            ln_b=jnp.zeros((d_model,), jnp.float32),
        )
        if self_attn:
            p["w_qkv"] = jnp.concatenate([w_q, w_k, w_v], axis=1).astype(jnp.bfloat16)
            p["b_qkv"] = jnp.zeros((n_head * (2 * d_k + d_v),), jnp.float32)
        else:
            p["w_q"] = w_q.astype(jnp.bfloat16)
            p["b_q"] = jnp.zeros((n_head * d_k,), jnp.float32)
            p["w_kv"] = jnp.concatenate([w_k, w_v], axis=1).astype(jnp.bfloat16)
            p["b_kv"] = jnp.zeros((n_head * (d_k + d_v),), jnp.float32)
        return p

    def ffn_params():
        # Conv1d(d, d_inner, 1) == Linear(d, d_inner); stored pre-transposed.
        return dict(
            w1=nrm((d_model, d_inner)).astype(jnp.bfloat16),
            b1=jnp.zeros((d_inner,), jnp.float32),
            w2=nrm((d_inner, d_model)).astype(jnp.bfloat16),
            b2=jnp.zeros((d_model,), jnp.float32),
            ln_g=jnp.ones((d_model,), jnp.float32),
            ln_b=jnp.zeros((d_model,), jnp.float32),
        )

    enc_layers = [dict(slf=mha_params(True), ffn=ffn_params())
                  for _ in range(n_layers)]
    dec_layers = [dict(slf=mha_params(True), enc=mha_params(False),
                       ffn=ffn_params()) for _ in range(n_layers)]

    # Embeddings, padding_idx=0 row zeroed; tgt_emb doubles as the tied predictor.
    src_emb = nrm((n_src_vocab, d_model), 0.1).at[0].set(0.0)
    tgt_emb = nrm((n_tgt_vocab, d_model), 0.1).at[0].set(0.0)

    # Tied predictor weight: pre-transposed (D, V_pad) bf16 copy; vocab padded
    # to a multiple of 128 so the logits matmul keeps lane-dense tn tiles.
    v_pad = ((n_tgt_vocab + 127) // 128) * 128
    tgt_emb_t = jnp.zeros((d_model, v_pad), jnp.bfloat16)
    tgt_emb_t = tgt_emb_t.at[:, :n_tgt_vocab].set(tgt_emb.T.astype(jnp.bfloat16))

    pos_table = jnp.asarray(
        get_sinusoid_encoding_table_np(max_len + 1, d_model, padding_idx=0))

    return dict(src_emb=src_emb, tgt_emb=tgt_emb, tgt_emb_t=tgt_emb_t,
                n_tgt_vocab=int(n_tgt_vocab), pos_table=pos_table,
                enc_layers=enc_layers, dec_layers=dec_layers)


# ----------------------------------------------------------------------------
# Full Transformer forward
# ----------------------------------------------------------------------------
def transformer_forward(params, source_seq, source_pos, target_seq, target_pos):
    target_seq = target_seq[:, :-1]
    target_pos = target_pos[:, :-1]

    # ---- Encoder ----
    src_kbias = key_padding_bias(source_seq)          # (B, 1, Ls)
    enc_non_pad = get_non_pad_mask(source_seq)        # (B, Ls, 1)
    x = (params["src_emb"][source_seq]
         + params["pos_table"][source_pos]).astype(jnp.bfloat16)
    for lp in params["enc_layers"]:
        x = encoder_layer(x, src_kbias, enc_non_pad, lp)
    enc_output = x

    # ---- Decoder ----
    tgt_kbias = key_padding_bias(target_seq)          # (B, 1, Lt-1)
    dec_non_pad = get_non_pad_mask(target_seq)        # (B, Lt-1, 1)
    y = (params["tgt_emb"][target_seq]
         + params["pos_table"][target_pos]).astype(jnp.bfloat16)
    for lp in params["dec_layers"]:
        y = decoder_layer(y, enc_output, tgt_kbias, src_kbias, dec_non_pad, lp)

    # ---- Tied predictor: logits = y @ tgt_emb.T * d_model**-0.5 ----
    B, Lt, D = y.shape
    logits = matmul(y.reshape(B * Lt, D), params["tgt_emb_t"],
                    scale=float(D) ** -0.5, out_dtype=jnp.float32)
    return logits[:, :params["n_tgt_vocab"]]          # (B*(Lt-1), n_target_vocab)


# ----------------------------------------------------------------------------
if __name__ == "__main__":
    B = 2
    Ls = 8          # source sequence length
    Lt = 8          # target sequence length (decoder sees Lt-1 = 7 tokens)
    n_src_vocab = 20
    n_tgt_vocab = 20
    max_len = 16
    d_word_vec = 32
    d_inner = 64
    n_layers = 2
    n_head = 4

    key = jax.random.PRNGKey(0)
    pkey, skey, tkey = jax.random.split(key, 3)

    params = init_params(pkey, n_src_vocab, n_tgt_vocab, max_len,
                         d_word_vec, d_inner, n_layers, n_head)

    # Tokens in [1, vocab) to avoid padding-id 0 everywhere in the demo.
    source_seq = jax.random.randint(skey, (B, Ls), 1, n_src_vocab, dtype=jnp.int32)
    target_seq = jax.random.randint(tkey, (B, Lt), 1, n_tgt_vocab, dtype=jnp.int32)
    source_pos = jnp.broadcast_to(jnp.arange(1, Ls + 1, dtype=jnp.int32)[None], (B, Ls))
    target_pos = jnp.broadcast_to(jnp.arange(1, Lt + 1, dtype=jnp.int32)[None], (B, Lt))

    # Jit the whole forward (params closed over -> hyperparam ints stay static).
    fwd = jax.jit(lambda ss, sp, ts, tp: transformer_forward(params, ss, sp, ts, tp))
    logits = fwd(source_seq, source_pos, target_seq, target_pos)
    logits = jax.block_until_ready(logits)

    assert logits.shape == (B * (Lt - 1), n_tgt_vocab), logits.shape
    assert logits.dtype == jnp.float32
    assert not bool(jnp.any(jnp.isnan(logits)))
    print("KERNEL_OK")
</pallas_src>

<mosaic_0001>
module attributes {stable_mosaic.version = 11 : i64} {
  func.func @_matmul_kernel(%arg0: i32, %arg1: i32, %arg2: i32, %arg3: memref<16x32xbf16, #tpu.memory_space<vmem>>, %arg4: memref<32x96xbf16, #tpu.memory_space<vmem>>, %arg5: memref<1x96xf32, #tpu.memory_space<vmem>>, %arg6: memref<16x96xbf16, #tpu.memory_space<vmem>>, %arg7: memref<16x96xf32, #tpu.memory_space<vmem>>) attributes {dimension_semantics = [#tpu.dimension_semantics<parallel>, #tpu.dimension_semantics<parallel>, #tpu.dimension_semantics<arbitrary>], iteration_bounds = array<i64: 1, 1, 1>, scalar_prefetch = 0 : i64, scratch_operands = 1 : i64, tpu.core_type = #tpu.core_type<tc>, window_params = [{transform_indices = @transform_0, window_bounds = array<i64: 16, 32>}, {transform_indices = @transform_1, window_bounds = array<i64: 32, 96>}, {transform_indices = @transform_2, window_bounds = array<i64: 1, 96>}, {transform_indices = @transform_3, window_bounds = array<i64: 16, 96>}]} {
    %c0_i32 = arith.constant 0 : i32
    %0 = arith.cmpi eq, %arg2, %c0_i32 : i32
    %1 = arith.extui %0 : i1 to i32
    %c0_i32_0 = arith.constant 0 : i32
    %2 = arith.cmpi ne, %1, %c0_i32_0 : i32
    scf.if %2 {
      %cst_10 = arith.constant 0.000000e+00 : f32
      %12 = vector.broadcast %cst_10 : f32 to vector<16x96xf32>
      %c0_11 = arith.constant 0 : index
      %c0_12 = arith.constant 0 : index
      %13 = vector.load %arg7[%c0_11, %c0_12] : memref<16x96xf32, #tpu.memory_space<vmem>>, vector<16x96xf32>
      tpu.vector_store %arg7[%c0_11, %c0_12], %12 {strides = array<i32>} : memref<16x96xf32, #tpu.memory_space<vmem>>, vector<16x96xf32>,
    } else {
    }
    %c0 = arith.constant 0 : index
    %c0_1 = arith.constant 0 : index
    %3 = vector.load %arg7[%c0, %c0_1] : memref<16x96xf32, #tpu.memory_space<vmem>>, vector<16x96xf32>
    %c0_2 = arith.constant 0 : index
    %c0_3 = arith.constant 0 : index
    %4 = vector.load %arg3[%c0_2, %c0_3] : memref<16x32xbf16, #tpu.memory_space<vmem>>, vector<16x32xbf16>
    %c0_4 = arith.constant 0 : index
    %c0_5 = arith.constant 0 : index
    %5 = vector.load %arg4[%c0_4, %c0_5] : memref<32x96xbf16, #tpu.memory_space<vmem>>, vector<32x96xbf16>
    %cst = arith.constant dense<0.000000e+00> : vector<16x96xf32>
    %6 = tpu.matmul %4, %5, %cst {dimension_numbers = #tpu.dot_dimension_numbers<[1], [0], [0], [1], [0, 0, 1, 1], [], []>} : vector<16x32xbf16>, vector<32x96xbf16>, vector<16x96xf32> -> vector<16x96xf32>
    %7 = arith.addf %3, %6 : vector<16x96xf32>
    %c0_6 = arith.constant 0 : index
    %c0_7 = arith.constant 0 : index
    %8 = vector.load %arg7[%c0_6, %c0_7] : memref<16x96xf32, #tpu.memory_space<vmem>>, vector<16x96xf32>
    tpu.vector_store %arg7[%c0_6, %c0_7], %7 {strides = array<i32>} : memref<16x96xf32, #tpu.memory_space<vmem>>, vector<16x96xf32>,
    %c0_i32_8 = arith.constant 0 : i32
    %9 = arith.cmpi eq, %arg2, %c0_i32_8 : i32
    %10 = arith.extui %9 : i1 to i32
    %c0_i32_9 = arith.constant 0 : i32
    %11 = arith.cmpi ne, %10, %c0_i32_9 : i32
    scf.if %11 {
      %c0_10 = arith.constant 0 : index
      %c0_11 = arith.constant 0 : index
      %12 = vector.load %arg7[%c0_10, %c0_11] : memref<16x96xf32, #tpu.memory_space<vmem>>, vector<16x96xf32>
      %c0_12 = arith.constant 0 : index
      %c0_13 = arith.constant 0 : index
      %13 = vector.load %arg5[%c0_12, %c0_13] : memref<1x96xf32, #tpu.memory_space<vmem>>, vector<1x96xf32>
      %14 = vector.broadcast %13 : vector<1x96xf32> to vector<16x96xf32>
      %15 = arith.addf %12, %14 : vector<16x96xf32>
      %16 = arith.truncf %15 : vector<16x96xf32> to vector<16x96xbf16>
      %c0_14 = arith.constant 0 : index
      %c0_15 = arith.constant 0 : index
      %17 = vector.load %arg6[%c0_14, %c0_15] : memref<16x96xbf16, #tpu.memory_space<vmem>>, vector<16x96xbf16>
      tpu.vector_store %arg6[%c0_14, %c0_15], %16 {strides = array<i32>} : memref<16x96xbf16, #tpu.memory_space<vmem>>, vector<16x96xbf16>,
    } else {
    }
    return
  }
  func.func @transform_0(%arg0: i32, %arg1: i32, %arg2: i32) -> (i32, i32) {
    %c0_i32 = arith.constant 0 : i32
    return %arg0, %arg2 : i32, i32
  }
  func.func @transform_1(%arg0: i32, %arg1: i32, %arg2: i32) -> (i32, i32) {
    %c0_i32 = arith.constant 0 : i32
    return %arg2, %arg1 : i32, i32
  }
  func.func @transform_2(%arg0: i32, %arg1: i32, %arg2: i32) -> (i32, i32) {
    %c0_i32 = arith.constant 0 : i32
    %c0_i32_0 = arith.constant 0 : i32
    return %c0_i32, %arg1 : i32, i32
  }
  func.func @transform_3(%arg0: i32, %arg1: i32, %arg2: i32) -> (i32, i32) {
    %c0_i32 = arith.constant 0 : i32
    return %arg0, %arg1 : i32, i32
  }
}

module attributes {stable_mosaic.version = 11 : i64} {
  func.func @_mha_core_kernel(%arg0: i32, %arg1: i32, %arg2: memref<1x4x8x8xbf16, #tpu.memory_space<vmem>>, %arg3: memref<1x4x8x8xbf16, #tpu.memory_space<vmem>>, %arg4: memref<1x4x8x8xbf16, #tpu.memory_space<vmem>>, %arg5: memref<1x1x8xf32, #tpu.memory_space<vmem>>, %arg6: memref<1x8x32xbf16, #tpu.memory_space<vmem>>, %arg7: memref<1x8x1xf32, #tpu.memory_space<vmem>>, %arg8: memref<32x32xbf16, #tpu.memory_space<vmem>>, %arg9: memref<1x32xf32, #tpu.memory_space<vmem>>, %arg10: memref<1x32xf32, #tpu.memory_space<vmem>>, %arg11: memref<1x32xf32, #tpu.memory_space<vmem>>, %arg12: memref<1x8x32xbf16, #tpu.memory_space<vmem>>, %arg13: memref<8x32xbf16, #tpu.memory_space<vmem>>) attributes {dimension_semantics = [#tpu.dimension_semantics<parallel>, #tpu.dimension_semantics<parallel>], iteration_bounds = array<i64: 2, 1>, scalar_prefetch = 0 : i64, scratch_operands = 1 : i64, tpu.core_type = #tpu.core_type<tc>, window_params = [{transform_indices = @transform_0, window_bounds = array<i64: 1, 4, 8, 8>}, {transform_indices = @transform_1, window_bounds = array<i64: 1, 4, 8, 8>}, {transform_indices = @transform_2, window_bounds = array<i64: 1, 4, 8, 8>}, {transform_indices = @transform_3, window_bounds = array<i64: 1, 1, 8>}, {transform_indices = @transform_4, window_bounds = array<i64: 1, 8, 32>}, {transform_indices = @transform_5, window_bounds = array<i64: 1, 8, 1>}, {pipeline_mode = #tpu.pipeline_mode<synchronous>, transform_indices = @transform_6, window_bounds = array<i64: 32, 32>}, {pipeline_mode = #tpu.pipeline_mode<synchronous>, transform_indices = @transform_7, window_bounds = array<i64: 1, 32>}, {pipeline_mode = #tpu.pipeline_mode<synchronous>, transform_indices = @transform_8, window_bounds = array<i64: 1, 32>}, {pipeline_mode = #tpu.pipeline_mode<synchronous>, transform_indices = @transform_9, window_bounds = array<i64: 1, 32>}, {transform_indices = @transform_10, window_bounds = array<i64: 1, 8, 32>}]} {
    %c0 = arith.constant 0 : index
    %c0_0 = arith.constant 0 : index
    %c0_1 = arith.constant 0 : index
    %0 = vector.load %arg5[%c0, %c0_0, %c0_1] : memref<1x1x8xf32, #tpu.memory_space<vmem>>, vector<1x1x8xf32>
    %1 = vector.shape_cast %0 : vector<1x1x8xf32> to vector<1x8xf32>
    %c0_2 = arith.constant 0 : index
    %c0_3 = arith.constant 0 : index
    %c0_4 = arith.constant 0 : index
    %c0_5 = arith.constant 0 : index
    %2 = vector.load %arg2[%c0_2, %c0_3, %c0_4, %c0_5] : memref<1x4x8x8xbf16, #tpu.memory_space<vmem>>, vector<1x1x8x8xbf16>
    %3 = vector.shape_cast %2 : vector<1x1x8x8xbf16> to vector<8x8xbf16>
    %c0_6 = arith.constant 0 : index
    %c0_7 = arith.constant 0 : index
    %c0_8 = arith.constant 0 : index
    %c0_9 = arith.constant 0 : index
    %4 = vector.load %arg3[%c0_6, %c0_7, %c0_8, %c0_9] : memref<1x4x8x8xbf16, #tpu.memory_space<vmem>>, vector<1x1x8x8xbf16>
    %5 = vector.shape_cast %4 : vector<1x1x8x8xbf16> to vector<8x8xbf16>
    %c0_10 = arith.constant 0 : index
    %c0_11 = arith.constant 0 : index
    %c0_12 = arith.constant 0 : index
    %c0_13 = arith.constant 0 : index
    %6 = vector.load %arg4[%c0_10, %c0_11, %c0_12, %c0_13] : memref<1x4x8x8xbf16, #tpu.memory_space<vmem>>, vector<1x1x8x8xbf16>
    %7 = vector.shape_cast %6 : vector<1x1x8x8xbf16> to vector<8x8xbf16>
    %cst = arith.constant dense<0.000000e+00> : vector<8x8xf32>
    %8 = tpu.matmul %3, %5, %cst {dimension_numbers = #tpu.dot_dimension_numbers<[1], [1], [0], [0], [0, 0, 1, 0], [], []>} : vector<8x8xbf16>, vector<8x8xbf16>, vector<8x8xf32> -> vector<8x8xf32>
    %9 = vector.broadcast %1 : vector<1x8xf32> to vector<8x8xf32>
    %10 = arith.addf %8, %9 : vector<8x8xf32>
    %cst_14 = arith.constant dense<0xFF800000> : vector<8xf32>
    %11 = vector.multi_reduction <maximumf>, %10, %cst_14 [1] : vector<8x8xf32> to vector<8xf32>
    %12 = vector.shape_cast %11 : vector<8xf32> to vector<8x1xf32>
    %13 = vector.broadcast %12 : vector<8x1xf32> to vector<8x8xf32>
    %14 = arith.subf %10, %13 : vector<8x8xf32>
    %15 = math.exp %14 : vector<8x8xf32>
    %cst_15 = arith.constant dense<0.000000e+00> : vector<8xf32>
    %16 = vector.multi_reduction <add>, %15, %cst_15 [1] : vector<8x8xf32> to vector<8xf32>
    %17 = vector.shape_cast %16 : vector<8xf32> to vector<8x1xf32>
    %18 = tpu.reciprocal %17 {approx = true} : vector<8x1xf32> -> vector<8x1xf32>
    %19 = vector.broadcast %18 : vector<8x1xf32> to vector<8x8xf32>
    %20 = arith.mulf %15, %19 : vector<8x8xf32>
    %21 = arith.truncf %20 : vector<8x8xf32> to vector<8x8xbf16>
    %cst_16 = arith.constant dense<0.000000e+00> : vector<8x8xf32>
    %22 = tpu.matmul %21, %7, %cst_16 {dimension_numbers = #tpu.dot_dimension_numbers<[1], [0], [0], [1], [0, 0, 1, 1], [], []>} : vector<8x8xbf16>, vector<8x8xbf16>, vector<8x8xf32> -> vector<8x8xf32>
    %23 = arith.truncf %22 : vector<8x8xf32> to vector<8x8xbf16>
    %c0_17 = arith.constant 0 : index
    %c0_18 = arith.constant 0 : index
    %24 = vector.load %arg13[%c0_17, %c0_18] : memref<8x32xbf16, #tpu.memory_space<vmem>>, vector<8x8xbf16>
    tpu.vector_store %arg13[%c0_17, %c0_18], %23 {strides = array<i32>} : memref<8x32xbf16, #tpu.memory_space<vmem>>, vector<8x8xbf16>,
    %c0_19 = arith.constant 0 : index
    %c1 = arith.constant 1 : index
    %c0_20 = arith.constant 0 : index
    %c0_21 = arith.constant 0 : index
    %25 = vector.load %arg2[%c0_19, %c1, %c0_20, %c0_21] : memref<1x4x8x8xbf16, #tpu.memory_space<vmem>>, vector<1x1x8x8xbf16>
    %26 = vector.shape_cast %25 : vector<1x1x8x8xbf16> to vector<8x8xbf16>
    %c0_22 = arith.constant 0 : index
    %c1_23 = arith.constant 1 : index
    %c0_24 = arith.constant 0 : index
    %c0_25 = arith.constant 0 : index
    %27 = vector.load %arg3[%c0_22, %c1_23, %c0_24, %c0_25] : memref<1x4x8x8xbf16, #tpu.memory_space<vmem>>, vector<1x1x8x8xbf16>
    %28 = vector.shape_cast %27 : vector<1x1x8x8xbf16> to vector<8x8xbf16>
    %c0_26 = arith.constant 0 : index
    %c1_27 = arith.constant 1 : index
    %c0_28 = arith.constant 0 : index
    %c0_29 = arith.constant 0 : index
    %29 = vector.load %arg4[%c0_26, %c1_27, %c0_28, %c0_29] : memref<1x4x8x8xbf16, #tpu.memory_space<vmem>>, vector<1x1x8x8xbf16>
    %30 = vector.shape_cast %29 : vector<1x1x8x8xbf16> to vector<8x8xbf16>
    %cst_30 = arith.constant dense<0.000000e+00> : vector<8x8xf32>
    %31 = tpu.matmul %26, %28, %cst_30 {dimension_numbers = #tpu.dot_dimension_numbers<[1], [1], [0], [0], [0, 0, 1, 0], [], []>} : vector<8x8xbf16>, vector<8x8xbf16>, vector<8x8xf32> -> vector<8x8xf32>
    %32 = vector.broadcast %1 : vector<1x8xf32> to vector<8x8xf32>
    %33 = arith.addf %31, %32 : vector<8x8xf32>
    %cst_31 = arith.constant dense<0xFF800000> : vector<8xf32>
    %34 = vector.multi_reduction <maximumf>, %33, %cst_31 [1] : vector<8x8xf32> to vector<8xf32>
    %35 = vector.shape_cast %34 : vector<8xf32> to vector<8x1xf32>
    %36 = vector.broadcast %35 : vector<8x1xf32> to vector<8x8xf32>
    %37 = arith.subf %33, %36 : vector<8x8xf32>
    %38 = math.exp %37 : vector<8x8xf32>
    %cst_32 = arith.constant dense<0.000000e+00> : vector<8xf32>
    %39 = vector.multi_reduction <add>, %38, %cst_32 [1] : vector<8x8xf32> to vector<8xf32>
    %40 = vector.shape_cast %39 : vector<8xf32> to vector<8x1xf32>
    %41 = tpu.reciprocal %40 {approx = true} : vector<8x1xf32> -> vector<8x1xf32>
    %42 = vector.broadcast %41 : vector<8x1xf32> to vector<8x8xf32>
    %43 = arith.mulf %38, %42 : vector<8x8xf32>
    %44 = arith.truncf %43 : vector<8x8xf32> to vector<8x8xbf16>
    %cst_33 = arith.constant dense<0.000000e+00> : vector<8x8xf32>
    %45 = tpu.matmul %44, %30, %cst_33 {dimension_numbers = #tpu.dot_dimension_numbers<[1], [0], [0], [1], [0, 0, 1, 1], [], []>} : vector<8x8xbf16>, vector<8x8xbf16>, vector<8x8xf32> -> vector<8x8xf32>
    %46 = arith.truncf %45 : vector<8x8xf32> to vector<8x8xbf16>
    %c0_34 = arith.constant 0 : index
    %c8 = arith.constant 8 : index
    %47 = vector.load %arg13[%c0_34, %c8] : memref<8x32xbf16, #tpu.memory_space<vmem>>, vector<8x8xbf16>
    tpu.vector_store %arg13[%c0_34, %c8], %46 {strides = array<i32>} : memref<8x32xbf16, #tpu.memory_space<vmem>>, vector<8x8xbf16>,
    %c0_35 = arith.constant 0 : index
    %c2 = arith.constant 2 : index
    %c0_36 = arith.constant 0 : index
    %c0_37 = arith.constant 0 : index
    %48 = vector.load %arg2[%c0_35, %c2, %c0_36, %c0_37] : memref<1x4x8x8xbf16, #tpu.memory_space<vmem>>, vector<1x1x8x8xbf16>
    %49 = vector.shape_cast %48 : vector<1x1x8x8xbf16> to vector<8x8xbf16>
    %c0_38 = arith.constant 0 : index
    %c2_39 = arith.constant 2 : index
    %c0_40 = arith.constant 0 : index
    %c0_41 = arith.constant 0 : index
    %50 = vector.load %arg3[%c0_38, %c2_39, %c0_40, %c0_41] : memref<1x4x8x8xbf16, #tpu.memory_space<vmem>>, vector<1x1x8x8xbf16>
    %51 = vector.shape_cast %50 : vector<1x1x8x8xbf16> to vector<8x8xbf16>
    %c0_42 = arith.constant 0 : index
    %c2_43 = arith.constant 2 : index
    %c0_44 = arith.constant 0 : index
    %c0_45 = arith.constant 0 : index
    %52 = vector.load %arg4[%c0_42, %c2_43, %c0_44, %c0_45] : memref<1x4x8x8xbf16, #tpu.memory_space<vmem>>, vector<1x1x8x8xbf16>
    %53 = vector.shape_cast %52 : vector<1x1x8x8xbf16> to vector<8x8xbf16>
    %cst_46 = arith.constant dense<0.000000e+00> : vector<8x8xf32>
    %54 = tpu.matmul %49, %51, %cst_46 {dimension_numbers = #tpu.dot_dimension_numbers<[1], [1], [0], [0], [0, 0, 1, 0], [], []>} : vector<8x8xbf16>, vector<8x8xbf16>, vector<8x8xf32> -> vector<8x8xf32>
    %55 = vector.broadcast %1 : vector<1x8xf32> to vector<8x8xf32>
    %56 = arith.addf %54, %55 : vector<8x8xf32>
    %cst_47 = arith.constant dense<0xFF800000> : vector<8xf32>
    %57 = vector.multi_reduction <maximumf>, %56, %cst_47 [1] : vector<8x8xf32> to vector<8xf32>
    %58 = vector.shape_cast %57 : vector<8xf32> to vector<8x1xf32>
    %59 = vector.broadcast %58 : vector<8x1xf32> to vector<8x8xf32>
    %60 = arith.subf %56, %59 : vector<8x8xf32>
    %61 = math.exp %60 : vector<8x8xf32>
    %cst_48 = arith.constant dense<0.000000e+00> : vector<8xf32>
    %62 = vector.multi_reduction <add>, %61, %cst_48 [1] : vector<8x8xf32> to vector<8xf32>
    %63 = vector.shape_cast %62 : vector<8xf32> to vector<8x1xf32>
    %64 = tpu.reciprocal %63 {approx = true} : vector<8x1xf32> -> vector<8x1xf32>
    %65 = vector.broadcast %64 : vector<8x1xf32> to vector<8x8xf32>
    %66 = arith.mulf %61, %65 : vector<8x8xf32>
    %67 = arith.truncf %66 : vector<8x8xf32> to vector<8x8xbf16>
    %cst_49 = arith.constant dense<0.000000e+00> : vector<8x8xf32>
    %68 = tpu.matmul %67, %53, %cst_49 {dimension_numbers = #tpu.dot_dimension_numbers<[1], [0], [0], [1], [0, 0, 1, 1], [], []>} : vector<8x8xbf16>, vector<8x8xbf16>, vector<8x8xf32> -> vector<8x8xf32>
    %69 = arith.truncf %68 : vector<8x8xf32> to vector<8x8xbf16>
    %c0_50 = arith.constant 0 : index
    %c16 = arith.constant 16 : index
    %70 = vector.load %arg13[%c0_50, %c16] : memref<8x32xbf16, #tpu.memory_space<vmem>>, vector<8x8xbf16>
    tpu.vector_store %arg13[%c0_50, %c16], %69 {strides = array<i32>} : memref<8x32xbf16, #tpu.memory_space<vmem>>, vector<8x8xbf16>,
    %c0_51 = arith.constant 0 : index
    %c3 = arith.constant 3 : index
    %c0_52 = arith.constant 0 : index
    %c0_53 = arith.constant 0 : index
    %71 = vector.load %arg2[%c0_51, %c3, %c0_52, %c0_53] : memref<1x4x8x8xbf16, #tpu.memory_space<vmem>>, vector<1x1x8x8xbf16>
    %72 = vector.shape_cast %71 : vector<1x1x8x8xbf16> to vector<8x8xbf16>
    %c0_54 = arith.constant 0 : index
    %c3_55 = arith.constant 3 : index
    %c0_56 = arith.constant 0 : index
    %c0_57 = arith.constant 0 : index
    %73 = vector.load %arg3[%c0_54, %c3_55, %c0_56, %c0_57] : memref<1x4x8x8xbf16, #tpu.memory_space<vmem>>, vector<1x1x8x8xbf16>
    %74 = vector.shape_cast %73 : vector<1x1x8x8xbf16> to vector<8x8xbf16>
    %c0_58 = arith.constant 0 : index
    %c3_59 = arith.constant 3 : index
    %c0_60 = arith.constant 0 : index
    %c0_61 = arith.constant 0 : index
    %75 = vector.load %arg4[%c0_58, %c3_59, %c0_60, %c0_61] : memref<1x4x8x8xbf16, #tpu.memory_space<vmem>>, vector<1x1x8x8xbf16>
    %76 = vector.shape_cast %75 : vector<1x1x8x8xbf16> to vector<8x8xbf16>
    %cst_62 = arith.constant dense<0.000000e+00> : vector<8x8xf32>
    %77 = tpu.matmul %72, %74, %cst_62 {dimension_numbers = #tpu.dot_dimension_numbers<[1], [1], [0], [0], [0, 0, 1, 0], [], []>} : vector<8x8xbf16>, vector<8x8xbf16>, vector<8x8xf32> -> vector<8x8xf32>
    %78 = vector.broadcast %1 : vector<1x8xf32> to vector<8x8xf32>
    %79 = arith.addf %77, %78 : vector<8x8xf32>
    %cst_63 = arith.constant dense<0xFF800000> : vector<8xf32>
    %80 = vector.multi_reduction <maximumf>, %79, %cst_63 [1] : vector<8x8xf32> to vector<8xf32>
    %81 = vector.shape_cast %80 : vector<8xf32> to vector<8x1xf32>
    %82 = vector.broadcast %81 : vector<8x1xf32> to vector<8x8xf32>
    %83 = arith.subf %79, %82 : vector<8x8xf32>
    %84 = math.exp %83 : vector<8x8xf32>
    %cst_64 = arith.constant dense<0.000000e+00> : vector<8xf32>
    %85 = vector.multi_reduction <add>, %84, %cst_64 [1] : vector<8x8xf32> to vector<8xf32>
    %86 = vector.shape_cast %85 : vector<8xf32> to vector<8x1xf32>
    %87 = tpu.reciprocal %86 {approx = true} : vector<8x1xf32> -> vector<8x1xf32>
    %88 = vector.broadcast %87 : vector<8x1xf32> to vector<8x8xf32>
    %89 = arith.mulf %84, %88 : vector<8x8xf32>
    %90 = arith.truncf %89 : vector<8x8xf32> to vector<8x8xbf16>
    %cst_65 = arith.constant dense<0.000000e+00> : vector<8x8xf32>
    %91 = tpu.matmul %90, %76, %cst_65 {dimension_numbers = #tpu.dot_dimension_numbers<[1], [0], [0], [1], [0, 0, 1, 1], [], []>} : vector<8x8xbf16>, vector<8x8xbf16>, vector<8x8xf32> -> vector<8x8xf32>
    %92 = arith.truncf %91 : vector<8x8xf32> to vector<8x8xbf16>
    %c0_66 = arith.constant 0 : index
    %c24 = arith.constant 24 : index
    %93 = vector.load %arg13[%c0_66, %c24] : memref<8x32xbf16, #tpu.memory_space<vmem>>, vector<8x8xbf16>
    tpu.vector_store %arg13[%c0_66, %c24], %92 {strides = array<i32>} : memref<8x32xbf16, #tpu.memory_space<vmem>>, vector<8x8xbf16>,
    %c0_67 = arith.constant 0 : index
    %c0_68 = arith.constant 0 : index
    %94 = vector.load %arg13[%c0_67, %c0_68] : memref<8x32xbf16, #tpu.memory_space<vmem>>, vector<8x32xbf16>
    %c0_69 = arith.constant 0 : index
    %c0_70 = arith.constant 0 : index
    %95 = vector.load %arg8[%c0_69, %c0_70] : memref<32x32xbf16, #tpu.memory_space<vmem>>, vector<32x32xbf16>
    %cst_71 = arith.constant dense<0.000000e+00> : vector<8x32xf32>
    %96 = tpu.matmul %94, %95, %cst_71 {dimension_numbers = #tpu.dot_dimension_numbers<[1], [0], [0], [1], [0, 0, 1, 1], [], []>} : vector<8x32xbf16>, vector<32x32xbf16>, vector<8x32xf32> -> vector<8x32xf32>
    %c0_72 = arith.constant 0 : index
    %c0_73 = arith.constant 0 : index
    %97 = vector.load %arg9[%c0_72, %c0_73] : memref<1x32xf32, #tpu.memory_space<vmem>>, vector<1x32xf32>
    %98 = vector.broadcast %97 : vector<1x32xf32> to vector<8x32xf32>
    %99 = arith.addf %96, %98 : vector<8x32xf32>
    %c0_74 = arith.constant 0 : index
    %c0_75 = arith.constant 0 : index
    %c0_76 = arith.constant 0 : index
    %100 = vector.load %arg6[%c0_74, %c0_75, %c0_76] : memref<1x8x32xbf16, #tpu.memory_space<vmem>>, vector<1x8x32xbf16>
    %101 = vector.shape_cast %100 : vector<1x8x32xbf16> to vector<8x32xbf16>
    %102 = arith.extf %101 : vector<8x32xbf16> to vector<8x32xf32>
    %103 = arith.addf %99, %102 : vector<8x32xf32>
    %cst_77 = arith.constant dense<0.000000e+00> : vector<8xf32>
    %104 = vector.multi_reduction <add>, %103, %cst_77 [1] : vector<8x32xf32> to vector<8xf32>
    %105 = vector.shape_cast %104 : vector<8xf32> to vector<8x1xf32>
    %cst_78 = arith.constant 3.200000e+01 : f32
    %106 = vector.broadcast %cst_78 : f32 to vector<8x1xf32>
    %107 = arith.divf %105, %106 : vector<8x1xf32>
    %108 = vector.broadcast %107 : vector<8x1xf32> to vector<8x32xf32>
    %109 = arith.subf %103, %108 : vector<8x32xf32>
    %110 = arith.mulf %109, %109 : vector<8x32xf32>
    %cst_79 = arith.constant dense<0.000000e+00> : vector<8xf32>
    %111 = vector.multi_reduction <add>, %110, %cst_79 [1] : vector<8x32xf32> to vector<8xf32>
    %112 = vector.shape_cast %111 : vector<8xf32> to vector<8x1xf32>
    %cst_80 = arith.constant 3.200000e+01 : f32
    %113 = vector.broadcast %cst_80 : f32 to vector<8x1xf32>
    %114 = arith.divf %112, %113 : vector<8x1xf32>
    %115 = vector.broadcast %107 : vector<8x1xf32> to vector<8x32xf32>
    %116 = arith.subf %103, %115 : vector<8x32xf32>
    %cst_81 = arith.constant 9.99999974E-6 : f32
    %117 = vector.broadcast %cst_81 : f32 to vector<8x1xf32>
    %118 = arith.addf %114, %117 : vector<8x1xf32>
    %119 = math.rsqrt %118 : vector<8x1xf32>
    %120 = vector.broadcast %119 : vector<8x1xf32> to vector<8x32xf32>
    %121 = arith.mulf %116, %120 : vector<8x32xf32>
    %c0_82 = arith.constant 0 : index
    %c0_83 = arith.constant 0 : index
    %122 = vector.load %arg10[%c0_82, %c0_83] : memref<1x32xf32, #tpu.memory_space<vmem>>, vector<1x32xf32>
    %123 = vector.broadcast %122 : vector<1x32xf32> to vector<8x32xf32>
    %124 = arith.mulf %121, %123 : vector<8x32xf32>
    %c0_84 = arith.constant 0 : index
    %c0_85 = arith.constant 0 : index
    %125 = vector.load %arg11[%c0_84, %c0_85] : memref<1x32xf32, #tpu.memory_space<vmem>>, vector<1x32xf32>
    %126 = vector.broadcast %125 : vector<1x32xf32> to vector<8x32xf32>
    %127 = arith.addf %124, %126 : vector<8x32xf32>
    %c0_86 = arith.constant 0 : index
    %c0_87 = arith.constant 0 : index
    %c0_88 = arith.constant 0 : index
    %128 = vector.load %arg7[%c0_86, %c0_87, %c0_88] : memref<1x8x1xf32, #tpu.memory_space<vmem>>, vector<1x8x1xf32>
    %129 = vector.shape_cast %128 : vector<1x8x1xf32> to vector<8x1xf32>
    %130 = vector.broadcast %129 : vector<8x1xf32> to vector<8x32xf32>
    %131 = arith.mulf %127, %130 : vector<8x32xf32>
    %132 = arith.truncf %131 : vector<8x32xf32> to vector<8x32xbf16>
    %c0_89 = arith.constant 0 : index
    %c0_90 = arith.constant 0 : index
    %c0_91 = arith.constant 0 : index
    %133 = vector.load %arg12[%c0_89, %c0_90, %c0_91] : memref<1x8x32xbf16, #tpu.memory_space<vmem>>, vector<1x8x32xbf16>
    %134 = vector.shape_cast %133 : vector<1x8x32xbf16> to vector<8x32xbf16>
    %135 = vector.shape_cast %132 : vector<8x32xbf16> to vector<1x8x32xbf16>
    tpu.vector_store %arg12[%c0_89, %c0_90, %c0_91], %135 {strides = array<i32>} : memref<1x8x32xbf16, #tpu.memory_space<vmem>>, vector<1x8x32xbf16>,
    return
  }
  func.func @transform_0(%arg0: i32, %arg1: i32) -> (i32, i32, i32, i32) {
    %c0_i32 = arith.constant 0 : i32
    %c0_i32_0 = arith.constant 0 : i32
    %c0_i32_1 = arith.constant 0 : i32
    return %arg0, %c0_i32, %arg1, %c0_i32_0 : i32, i32, i32, i32
  }
  func.func @transform_1(%arg0: i32, %arg1: i32) -> (i32, i32, i32, i32) {
    %c0_i32 = arith.constant 0 : i32
    %c0_i32_0 = arith.constant 0 : i32
    %c0_i32_1 = arith.constant 0 : i32
    %c0_i32_2 = arith.constant 0 : i32
    return %arg0, %c0_i32, %c0_i32_0, %c0_i32_1 : i32, i32, i32, i32
  }
  func.func @transform_2(%arg0: i32, %arg1: i32) -> (i32, i32, i32, i32) {
    %c0_i32 = arith.constant 0 : i32
    %c0_i32_0 = arith.constant 0 : i32
    %c0_i32_1 = arith.constant 0 : i32
    %c0_i32_2 = arith.constant 0 : i32
    return %arg0, %c0_i32, %c0_i32_0, %c0_i32_1 : i32, i32, i32, i32
  }
  func.func @transform_3(%arg0: i32, %arg1: i32) -> (i32, i32, i32) {
    %c0_i32 = arith.constant 0 : i32
    %c0_i32_0 = arith.constant 0 : i32
    %c0_i32_1 = arith.constant 0 : i32
    return %arg0, %c0_i32, %c0_i32_0 : i32, i32, i32
  }
  func.func @transform_4(%arg0: i32, %arg1: i32) -> (i32, i32, i32) {
    %c0_i32 = arith.constant 0 : i32
    %c0_i32_0 = arith.constant 0 : i32
    return %arg0, %arg1, %c0_i32 : i32, i32, i32
  }
  func.func @transform_5(%arg0: i32, %arg1: i32) -> (i32, i32, i32) {
    %c0_i32 = arith.constant 0 : i32
    %c0_i32_0 = arith.constant 0 : i32
    return %arg0, %arg1, %c0_i32 : i32, i32, i32
  }
  func.func @transform_6(%arg0: i32, %arg1: i32) -> (i32, i32) {
    %c0_i32 = arith.constant 0 : i32
    %c0_i32_0 = arith.constant 0 : i32
    %c0_i32_1 = arith.constant 0 : i32
    return %c0_i32, %c0_i32_0 : i32, i32
  }
  func.func @transform_7(%arg0: i32, %arg1: i32) -> (i32, i32) {
    %c0_i32 = arith.constant 0 : i32
    %c0_i32_0 = arith.constant 0 : i32
    %c0_i32_1 = arith.constant 0 : i32
    return %c0_i32, %c0_i32_0 : i32, i32
  }
  func.func @transform_8(%arg0: i32, %arg1: i32) -> (i32, i32) {
    %c0_i32 = arith.constant 0 : i32
    %c0_i32_0 = arith.constant 0 : i32
    %c0_i32_1 = arith.constant 0 : i32
    return %c0_i32, %c0_i32_0 : i32, i32
  }
  func.func @transform_9(%arg0: i32, %arg1: i32) -> (i32, i32) {
    %c0_i32 = arith.constant 0 : i32
    %c0_i32_0 = arith.constant 0 : i32
    %c0_i32_1 = arith.constant 0 : i32
    return %c0_i32, %c0_i32_0 : i32, i32
  }
  func.func @transform_10(%arg0: i32, %arg1: i32) -> (i32, i32, i32) {
    %c0_i32 = arith.constant 0 : i32
    %c0_i32_0 = arith.constant 0 : i32
    return %arg0, %arg1, %c0_i32 : i32, i32, i32
  }
}

module attributes {stable_mosaic.version = 11 : i64} {
  func.func @_matmul_kernel(%arg0: i32, %arg1: i32, %arg2: i32, %arg3: memref<16x32xbf16, #tpu.memory_space<vmem>>, %arg4: memref<32x64xbf16, #tpu.memory_space<vmem>>, %arg5: memref<1x64xf32, #tpu.memory_space<vmem>>, %arg6: memref<16x64xbf16, #tpu.memory_space<vmem>>, %arg7: memref<16x64xf32, #tpu.memory_space<vmem>>) attributes {dimension_semantics = [#tpu.dimension_semantics<parallel>, #tpu.dimension_semantics<parallel>, #tpu.dimension_semantics<arbitrary>], iteration_bounds = array<i64: 1, 1, 1>, scalar_prefetch = 0 : i64, scratch_operands = 1 : i64, tpu.core_type = #tpu.core_type<tc>, window_params = [{transform_indices = @transform_0, window_bounds = array<i64: 16, 32>}, {transform_indices = @transform_1, window_bounds = array<i64: 32, 64>}, {transform_indices = @transform_2, window_bounds = array<i64: 1, 64>}, {transform_indices = @transform_3, window_bounds = array<i64: 16, 64>}]} {
    %c0_i32 = arith.constant 0 : i32
    %0 = arith.cmpi eq, %arg2, %c0_i32 : i32
    %1 = arith.extui %0 : i1 to i32
    %c0_i32_0 = arith.constant 0 : i32
    %2 = arith.cmpi ne, %1, %c0_i32_0 : i32
    scf.if %2 {
      %cst_10 = arith.constant 0.000000e+00 : f32
      %12 = vector.broadcast %cst_10 : f32 to vector<16x64xf32>
      %c0_11 = arith.constant 0 : index
      %c0_12 = arith.constant 0 : index
      %13 = vector.load %arg7[%c0_11, %c0_12] : memref<16x64xf32, #tpu.memory_space<vmem>>, vector<16x64xf32>
      tpu.vector_store %arg7[%c0_11, %c0_12], %12 {strides = array<i32>} : memref<16x64xf32, #tpu.memory_space<vmem>>, vector<16x64xf32>,
    } else {
    }
    %c0 = arith.constant 0 : index
    %c0_1 = arith.constant 0 : index
    %3 = vector.load %arg7[%c0, %c0_1] : memref<16x64xf32, #tpu.memory_space<vmem>>, vector<16x64xf32>
    %c0_2 = arith.constant 0 : index
    %c0_3 = arith.constant 0 : index
    %4 = vector.load %arg3[%c0_2, %c0_3] : memref<16x32xbf16, #tpu.memory_space<vmem>>, vector<16x32xbf16>
    %c0_4 = arith.constant 0 : index
    %c0_5 = arith.constant 0 : index
    %5 = vector.load %arg4[%c0_4, %c0_5] : memref<32x64xbf16, #tpu.memory_space<vmem>>, vector<32x64xbf16>
    %cst = arith.constant dense<0.000000e+00> : vector<16x64xf32>
    %6 = tpu.matmul %4, %5, %cst {dimension_numbers = #tpu.dot_dimension_numbers<[1], [0], [0], [1], [0, 0, 1, 1], [], []>} : vector<16x32xbf16>, vector<32x64xbf16>, vector<16x64xf32> -> vector<16x64xf32>
    %7 = arith.addf %3, %6 : vector<16x64xf32>
    %c0_6 = arith.constant 0 : index
    %c0_7 = arith.constant 0 : index
    %8 = vector.load %arg7[%c0_6, %c0_7] : memref<16x64xf32, #tpu.memory_space<vmem>>, vector<16x64xf32>
    tpu.vector_store %arg7[%c0_6, %c0_7], %7 {strides = array<i32>} : memref<16x64xf32, #tpu.memory_space<vmem>>, vector<16x64xf32>,
    %c0_i32_8 = arith.constant 0 : i32
    %9 = arith.cmpi eq, %arg2, %c0_i32_8 : i32
    %10 = arith.extui %9 : i1 to i32
    %c0_i32_9 = arith.constant 0 : i32
    %11 = arith.cmpi ne, %10, %c0_i32_9 : i32
    scf.if %11 {
      %c0_10 = arith.constant 0 : index
      %c0_11 = arith.constant 0 : index
      %12 = vector.load %arg7[%c0_10, %c0_11] : memref<16x64xf32, #tpu.memory_space<vmem>>, vector<16x64xf32>
      %c0_12 = arith.constant 0 : index
      %c0_13 = arith.constant 0 : index
      %13 = vector.load %arg5[%c0_12, %c0_13] : memref<1x64xf32, #tpu.memory_space<vmem>>, vector<1x64xf32>
      %14 = vector.broadcast %13 : vector<1x64xf32> to vector<16x64xf32>
      %15 = arith.addf %12, %14 : vector<16x64xf32>
      %16 = arith.truncf %15 : vector<16x64xf32> to vector<16x64xbf16>
      %c0_14 = arith.constant 0 : index
      %c0_15 = arith.constant 0 : index
      %17 = vector.load %arg6[%c0_14, %c0_15] : memref<16x64xbf16, #tpu.memory_space<vmem>>, vector<16x64xbf16>
      tpu.vector_store %arg6[%c0_14, %c0_15], %16 {strides = array<i32>} : memref<16x64xbf16, #tpu.memory_space<vmem>>, vector<16x64xbf16>,
    } else {
    }
    return
  }
  func.func @transform_0(%arg0: i32, %arg1: i32, %arg2: i32) -> (i32, i32) {
    %c0_i32 = arith.constant 0 : i32
    return %arg0, %arg2 : i32, i32
  }
  func.func @transform_1(%arg0: i32, %arg1: i32, %arg2: i32) -> (i32, i32) {
    %c0_i32 = arith.constant 0 : i32
    return %arg2, %arg1 : i32, i32
  }
  func.func @transform_2(%arg0: i32, %arg1: i32, %arg2: i32) -> (i32, i32) {
    %c0_i32 = arith.constant 0 : i32
    %c0_i32_0 = arith.constant 0 : i32
    return %c0_i32, %arg1 : i32, i32
  }
  func.func @transform_3(%arg0: i32, %arg1: i32, %arg2: i32) -> (i32, i32) {
    %c0_i32 = arith.constant 0 : i32
    return %arg0, %arg1 : i32, i32
  }
}

module attributes {stable_mosaic.version = 11 : i64} {
  func.func @_ffn_kernel(%arg0: i32, %arg1: memref<16x32xbf16, #tpu.memory_space<vmem>>, %arg2: memref<32x64xbf16, #tpu.memory_space<vmem>>, %arg3: memref<1x64xf32, #tpu.memory_space<vmem>>, %arg4: memref<64x32xbf16, #tpu.memory_space<vmem>>, %arg5: memref<1x32xf32, #tpu.memory_space<vmem>>, %arg6: memref<1x32xf32, #tpu.memory_space<vmem>>, %arg7: memref<1x32xf32, #tpu.memory_space<vmem>>, %arg8: memref<16x1xf32, #tpu.memory_space<vmem>>, %arg9: memref<16x32xbf16, #tpu.memory_space<vmem>>) attributes {dimension_semantics = [#tpu.dimension_semantics<parallel>], iteration_bounds = array<i64: 1>, scalar_prefetch = 0 : i64, scratch_operands = 0 : i64, tpu.core_type = #tpu.core_type<tc>, window_params = [{transform_indices = @transform_0, window_bounds = array<i64: 16, 32>}, {pipeline_mode = #tpu.pipeline_mode<synchronous>, transform_indices = @transform_1, window_bounds = array<i64: 32, 64>}, {pipeline_mode = #tpu.pipeline_mode<synchronous>, transform_indices = @transform_2, window_bounds = array<i64: 1, 64>}, {pipeline_mode = #tpu.pipeline_mode<synchronous>, transform_indices = @transform_3, window_bounds = array<i64: 64, 32>}, {pipeline_mode = #tpu.pipeline_mode<synchronous>, transform_indices = @transform_4, window_bounds = array<i64: 1, 32>}, {pipeline_mode = #tpu.pipeline_mode<synchronous>, transform_indices = @transform_5, window_bounds = array<i64: 1, 32>}, {pipeline_mode = #tpu.pipeline_mode<synchronous>, transform_indices = @transform_6, window_bounds = array<i64: 1, 32>}, {transform_indices = @transform_7, window_bounds = array<i64: 16, 1>}, {transform_indices = @transform_8, window_bounds = array<i64: 16, 32>}]} {
    %c0 = arith.constant 0 : index
    %c0_0 = arith.constant 0 : index
    %0 = vector.load %arg1[%c0, %c0_0] : memref<16x32xbf16, #tpu.memory_space<vmem>>, vector<16x32xbf16>
    %c0_1 = arith.constant 0 : index
    %c0_2 = arith.constant 0 : index
    %1 = vector.load %arg2[%c0_1, %c0_2] : memref<32x64xbf16, #tpu.memory_space<vmem>>, vector<32x64xbf16>
    %cst = arith.constant dense<0.000000e+00> : vector<16x64xf32>
    %2 = tpu.matmul %0, %1, %cst {dimension_numbers = #tpu.dot_dimension_numbers<[1], [0], [0], [1], [0, 0, 1, 1], [], []>} : vector<16x32xbf16>, vector<32x64xbf16>, vector<16x64xf32> -> vector<16x64xf32>
    %c0_3 = arith.constant 0 : index
    %c0_4 = arith.constant 0 : index
    %3 = vector.load %arg3[%c0_3, %c0_4] : memref<1x64xf32, #tpu.memory_space<vmem>>, vector<1x64xf32>
    %4 = vector.broadcast %3 : vector<1x64xf32> to vector<16x64xf32>
    %5 = arith.addf %2, %4 : vector<16x64xf32>
    %cst_5 = arith.constant 0.000000e+00 : f32
    %6 = vector.broadcast %cst_5 : f32 to vector<16x64xf32>
    %7 = arith.maximumf %5, %6 : vector<16x64xf32>
    %8 = arith.truncf %7 : vector<16x64xf32> to vector<16x64xbf16>
    %c0_6 = arith.constant 0 : index
    %c0_7 = arith.constant 0 : index
    %9 = vector.load %arg4[%c0_6, %c0_7] : memref<64x32xbf16, #tpu.memory_space<vmem>>, vector<64x32xbf16>
    %cst_8 = arith.constant dense<0.000000e+00> : vector<16x32xf32>
    %10 = tpu.matmul %8, %9, %cst_8 {dimension_numbers = #tpu.dot_dimension_numbers<[1], [0], [0], [1], [0, 0, 1, 1], [], []>} : vector<16x64xbf16>, vector<64x32xbf16>, vector<16x32xf32> -> vector<16x32xf32>
    %c0_9 = arith.constant 0 : index
    %c0_10 = arith.constant 0 : index
    %11 = vector.load %arg5[%c0_9, %c0_10] : memref<1x32xf32, #tpu.memory_space<vmem>>, vector<1x32xf32>
    %12 = vector.broadcast %11 : vector<1x32xf32> to vector<16x32xf32>
    %13 = arith.addf %10, %12 : vector<16x32xf32>
    %14 = arith.extf %0 : vector<16x32xbf16> to vector<16x32xf32>
    %15 = arith.addf %13, %14 : vector<16x32xf32>
    %cst_11 = arith.constant dense<0.000000e+00> : vector<16xf32>
    %16 = vector.multi_reduction <add>, %15, %cst_11 [1] : vector<16x32xf32> to vector<16xf32>
    %17 = vector.shape_cast %16 : vector<16xf32> to vector<16x1xf32>
    %cst_12 = arith.constant 3.200000e+01 : f32
    %18 = vector.broadcast %cst_12 : f32 to vector<16x1xf32>
    %19 = arith.divf %17, %18 : vector<16x1xf32>
    %20 = vector.broadcast %19 : vector<16x1xf32> to vector<16x32xf32>
    %21 = arith.subf %15, %20 : vector<16x32xf32>
    %22 = arith.mulf %21, %21 : vector<16x32xf32>
    %cst_13 = arith.constant dense<0.000000e+00> : vector<16xf32>
    %23 = vector.multi_reduction <add>, %22, %cst_13 [1] : vector<16x32xf32> to vector<16xf32>
    %24 = vector.shape_cast %23 : vector<16xf32> to vector<16x1xf32>
    %cst_14 = arith.constant 3.200000e+01 : f32
    %25 = vector.broadcast %cst_14 : f32 to vector<16x1xf32>
    %26 = arith.divf %24, %25 : vector<16x1xf32>
    %27 = vector.broadcast %19 : vector<16x1xf32> to vector<16x32xf32>
    %28 = arith.subf %15, %27 : vector<16x32xf32>
    %cst_15 = arith.constant 9.99999974E-6 : f32
    %29 = vector.broadcast %cst_15 : f32 to vector<16x1xf32>
    %30 = arith.addf %26, %29 : vector<16x1xf32>
    %31 = math.rsqrt %30 : vector<16x1xf32>
    %32 = vector.broadcast %31 : vector<16x1xf32> to vector<16x32xf32>
    %33 = arith.mulf %28, %32 : vector<16x32xf32>
    %c0_16 = arith.constant 0 : index
    %c0_17 = arith.constant 0 : index
    %34 = vector.load %arg6[%c0_16, %c0_17] : memref<1x32xf32, #tpu.memory_space<vmem>>, vector<1x32xf32>
    %35 = vector.broadcast %34 : vector<1x32xf32> to vector<16x32xf32>
    %36 = arith.mulf %33, %35 : vector<16x32xf32>
    %c0_18 = arith.constant 0 : index
    %c0_19 = arith.constant 0 : index
    %37 = vector.load %arg7[%c0_18, %c0_19] : memref<1x32xf32, #tpu.memory_space<vmem>>, vector<1x32xf32>
    %38 = vector.broadcast %37 : vector<1x32xf32> to vector<16x32xf32>
    %39 = arith.addf %36, %38 : vector<16x32xf32>
    %c0_20 = arith.constant 0 : index
    %c0_21 = arith.constant 0 : index
    %40 = vector.load %arg8[%c0_20, %c0_21] : memref<16x1xf32, #tpu.memory_space<vmem>>, vector<16x1xf32>
    %41 = vector.broadcast %40 : vector<16x1xf32> to vector<16x32xf32>
    %42 = arith.mulf %39, %41 : vector<16x32xf32>
    %43 = arith.truncf %42 : vector<16x32xf32> to vector<16x32xbf16>
    %c0_22 = arith.constant 0 : index
    %c0_23 = arith.constant 0 : index
    %44 = vector.load %arg9[%c0_22, %c0_23] : memref<16x32xbf16, #tpu.memory_space<vmem>>, vector<16x32xbf16>
    tpu.vector_store %arg9[%c0_22, %c0_23], %43 {strides = array<i32>} : memref<16x32xbf16, #tpu.memory_space<vmem>>, vector<16x32xbf16>,
    return
  }
  func.func @transform_0(%arg0: i32) -> (i32, i32) {
    %c0_i32 = arith.constant 0 : i32
    %c0_i32_0 = arith.constant 0 : i32
    return %arg0, %c0_i32 : i32, i32
  }
  func.func @transform_1(%arg0: i32) -> (i32, i32) {
    %c0_i32 = arith.constant 0 : i32
    %c0_i32_0 = arith.constant 0 : i32
    %c0_i32_1 = arith.constant 0 : i32
    return %c0_i32, %c0_i32_0 : i32, i32
  }
  func.func @transform_2(%arg0: i32) -> (i32, i32) {
    %c0_i32 = arith.constant 0 : i32
    %c0_i32_0 = arith.constant 0 : i32
    %c0_i32_1 = arith.constant 0 : i32
    return %c0_i32, %c0_i32_0 : i32, i32
  }
  func.func @transform_3(%arg0: i32) -> (i32, i32) {
    %c0_i32 = arith.constant 0 : i32
    %c0_i32_0 = arith.constant 0 : i32
    %c0_i32_1 = arith.constant 0 : i32
    return %c0_i32, %c0_i32_0 : i32, i32
  }
  func.func @transform_4(%arg0: i32) -> (i32, i32) {
    %c0_i32 = arith.constant 0 : i32
    %c0_i32_0 = arith.constant 0 : i32
    %c0_i32_1 = arith.constant 0 : i32
    return %c0_i32, %c0_i32_0 : i32, i32
  }
  func.func @transform_5(%arg0: i32) -> (i32, i32) {
    %c0_i32 = arith.constant 0 : i32
    %c0_i32_0 = arith.constant 0 : i32
    %c0_i32_1 = arith.constant 0 : i32
    return %c0_i32, %c0_i32_0 : i32, i32
  }
  func.func @transform_6(%arg0: i32) -> (i32, i32) {
    %c0_i32 = arith.constant 0 : i32
    %c0_i32_0 = arith.constant 0 : i32
    %c0_i32_1 = arith.constant 0 : i32
    return %c0_i32, %c0_i32_0 : i32, i32
  }
  func.func @transform_7(%arg0: i32) -> (i32, i32) {
    %c0_i32 = arith.constant 0 : i32
    %c0_i32_0 = arith.constant 0 : i32
    return %arg0, %c0_i32 : i32, i32
  }
  func.func @transform_8(%arg0: i32) -> (i32, i32) {
    %c0_i32 = arith.constant 0 : i32
    %c0_i32_0 = arith.constant 0 : i32
    return %arg0, %c0_i32 : i32, i32
  }
}

module attributes {stable_mosaic.version = 11 : i64} {
  func.func @_matmul_kernel(%arg0: i32, %arg1: i32, %arg2: i32, %arg3: memref<14x32xbf16, #tpu.memory_space<vmem>>, %arg4: memref<32x96xbf16, #tpu.memory_space<vmem>>, %arg5: memref<1x96xf32, #tpu.memory_space<vmem>>, %arg6: memref<14x96xbf16, #tpu.memory_space<vmem>>, %arg7: memref<14x96xf32, #tpu.memory_space<vmem>>) attributes {dimension_semantics = [#tpu.dimension_semantics<parallel>, #tpu.dimension_semantics<parallel>, #tpu.dimension_semantics<arbitrary>], iteration_bounds = array<i64: 1, 1, 1>, scalar_prefetch = 0 : i64, scratch_operands = 1 : i64, tpu.core_type = #tpu.core_type<tc>, window_params = [{transform_indices = @transform_0, window_bounds = array<i64: 14, 32>}, {transform_indices = @transform_1, window_bounds = array<i64: 32, 96>}, {transform_indices = @transform_2, window_bounds = array<i64: 1, 96>}, {transform_indices = @transform_3, window_bounds = array<i64: 14, 96>}]} {
    %c0_i32 = arith.constant 0 : i32
    %0 = arith.cmpi eq, %arg2, %c0_i32 : i32
    %1 = arith.extui %0 : i1 to i32
    %c0_i32_0 = arith.constant 0 : i32
    %2 = arith.cmpi ne, %1, %c0_i32_0 : i32
    scf.if %2 {
      %cst_10 = arith.constant 0.000000e+00 : f32
      %12 = vector.broadcast %cst_10 : f32 to vector<14x96xf32>
      %c0_11 = arith.constant 0 : index
      %c0_12 = arith.constant 0 : index
      %13 = vector.load %arg7[%c0_11, %c0_12] : memref<14x96xf32, #tpu.memory_space<vmem>>, vector<14x96xf32>
      tpu.vector_store %arg7[%c0_11, %c0_12], %12 {strides = array<i32>} : memref<14x96xf32, #tpu.memory_space<vmem>>, vector<14x96xf32>,
    } else {
    }
    %c0 = arith.constant 0 : index
    %c0_1 = arith.constant 0 : index
    %3 = vector.load %arg7[%c0, %c0_1] : memref<14x96xf32, #tpu.memory_space<vmem>>, vector<14x96xf32>
    %c0_2 = arith.constant 0 : index
    %c0_3 = arith.constant 0 : index
    %4 = vector.load %arg3[%c0_2, %c0_3] : memref<14x32xbf16, #tpu.memory_space<vmem>>, vector<14x32xbf16>
    %c0_4 = arith.constant 0 : index
    %c0_5 = arith.constant 0 : index
    %5 = vector.load %arg4[%c0_4, %c0_5] : memref<32x96xbf16, #tpu.memory_space<vmem>>, vector<32x96xbf16>
    %cst = arith.constant dense<0.000000e+00> : vector<14x96xf32>
    %6 = tpu.matmul %4, %5, %cst {dimension_numbers = #tpu.dot_dimension_numbers<[1], [0], [0], [1], [0, 0, 1, 1], [], []>} : vector<14x32xbf16>, vector<32x96xbf16>, vector<14x96xf32> -> vector<14x96xf32>
    %7 = arith.addf %3, %6 : vector<14x96xf32>
    %c0_6 = arith.constant 0 : index
    %c0_7 = arith.constant 0 : index
    %8 = vector.load %arg7[%c0_6, %c0_7] : memref<14x96xf32, #tpu.memory_space<vmem>>, vector<14x96xf32>
    tpu.vector_store %arg7[%c0_6, %c0_7], %7 {strides = array<i32>} : memref<14x96xf32, #tpu.memory_space<vmem>>, vector<14x96xf32>,
    %c0_i32_8 = arith.constant 0 : i32
    %9 = arith.cmpi eq, %arg2, %c0_i32_8 : i32
    %10 = arith.extui %9 : i1 to i32
    %c0_i32_9 = arith.constant 0 : i32
    %11 = arith.cmpi ne, %10, %c0_i32_9 : i32
    scf.if %11 {
      %c0_10 = arith.constant 0 : index
      %c0_11 = arith.constant 0 : index
      %12 = vector.load %arg7[%c0_10, %c0_11] : memref<14x96xf32, #tpu.memory_space<vmem>>, vector<14x96xf32>
      %c0_12 = arith.constant 0 : index
      %c0_13 = arith.constant 0 : index
      %13 = vector.load %arg5[%c0_12, %c0_13] : memref<1x96xf32, #tpu.memory_space<vmem>>, vector<1x96xf32>
      %14 = vector.broadcast %13 : vector<1x96xf32> to vector<14x96xf32>
      %15 = arith.addf %12, %14 : vector<14x96xf32>
      %16 = arith.truncf %15 : vector<14x96xf32> to vector<14x96xbf16>
      %c0_14 = arith.constant 0 : index
      %c0_15 = arith.constant 0 : index
      %17 = vector.load %arg6[%c0_14, %c0_15] : memref<14x96xbf16, #tpu.memory_space<vmem>>, vector<14x96xbf16>
      tpu.vector_store %arg6[%c0_14, %c0_15], %16 {strides = array<i32>} : memref<14x96xbf16, #tpu.memory_space<vmem>>, vector<14x96xbf16>,
    } else {
    }
    return
  }
  func.func @transform_0(%arg0: i32, %arg1: i32, %arg2: i32) -> (i32, i32) {
    %c0_i32 = arith.constant 0 : i32
    return %arg0, %arg2 : i32, i32
  }
  func.func @transform_1(%arg0: i32, %arg1: i32, %arg2: i32) -> (i32, i32) {
    %c0_i32 = arith.constant 0 : i32
    return %arg2, %arg1 : i32, i32
  }
  func.func @transform_2(%arg0: i32, %arg1: i32, %arg2: i32) -> (i32, i32) {
    %c0_i32 = arith.constant 0 : i32
    %c0_i32_0 = arith.constant 0 : i32
    return %c0_i32, %arg1 : i32, i32
  }
  func.func @transform_3(%arg0: i32, %arg1: i32, %arg2: i32) -> (i32, i32) {
    %c0_i32 = arith.constant 0 : i32
    return %arg0, %arg1 : i32, i32
  }
}

module attributes {stable_mosaic.version = 11 : i64} {
  func.func @_mha_core_kernel(%arg0: i32, %arg1: i32, %arg2: memref<1x4x7x8xbf16, #tpu.memory_space<vmem>>, %arg3: memref<1x4x7x8xbf16, #tpu.memory_space<vmem>>, %arg4: memref<1x4x7x8xbf16, #tpu.memory_space<vmem>>, %arg5: memref<1x1x7xf32, #tpu.memory_space<vmem>>, %arg6: memref<1x7x32xbf16, #tpu.memory_space<vmem>>, %arg7: memref<1x7x1xf32, #tpu.memory_space<vmem>>, %arg8: memref<32x32xbf16, #tpu.memory_space<vmem>>, %arg9: memref<1x32xf32, #tpu.memory_space<vmem>>, %arg10: memref<1x32xf32, #tpu.memory_space<vmem>>, %arg11: memref<1x32xf32, #tpu.memory_space<vmem>>, %arg12: memref<1x7x32xbf16, #tpu.memory_space<vmem>>, %arg13: memref<7x32xbf16, #tpu.memory_space<vmem>>) attributes {dimension_semantics = [#tpu.dimension_semantics<parallel>, #tpu.dimension_semantics<parallel>], iteration_bounds = array<i64: 2, 1>, scalar_prefetch = 0 : i64, scratch_operands = 1 : i64, tpu.core_type = #tpu.core_type<tc>, window_params = [{transform_indices = @transform_0, window_bounds = array<i64: 1, 4, 7, 8>}, {transform_indices = @transform_1, window_bounds = array<i64: 1, 4, 7, 8>}, {transform_indices = @transform_2, window_bounds = array<i64: 1, 4, 7, 8>}, {transform_indices = @transform_3, window_bounds = array<i64: 1, 1, 7>}, {transform_indices = @transform_4, window_bounds = array<i64: 1, 7, 32>}, {transform_indices = @transform_5, window_bounds = array<i64: 1, 7, 1>}, {pipeline_mode = #tpu.pipeline_mode<synchronous>, transform_indices = @transform_6, window_bounds = array<i64: 32, 32>}, {pipeline_mode = #tpu.pipeline_mode<synchronous>, transform_indices = @transform_7, window_bounds = array<i64: 1, 32>}, {pipeline_mode = #tpu.pipeline_mode<synchronous>, transform_indices = @transform_8, window_bounds = array<i64: 1, 32>}, {pipeline_mode = #tpu.pipeline_mode<synchronous>, transform_indices = @transform_9, window_bounds = array<i64: 1, 32>}, {transform_indices = @transform_10, window_bounds = array<i64: 1, 7, 32>}]} {
    %c0 = arith.constant 0 : index
    %c0_0 = arith.constant 0 : index
    %c0_1 = arith.constant 0 : index
    %0 = vector.load %arg5[%c0, %c0_0, %c0_1] : memref<1x1x7xf32, #tpu.memory_space<vmem>>, vector<1x1x7xf32>
    %1 = vector.shape_cast %0 : vector<1x1x7xf32> to vector<1x7xf32>
    %c7_i32 = arith.constant 7 : i32
    %2 = arith.muli %arg1, %c7_i32 : i32
    %3 = tpu.iota {dimensions = array<i32: 0>} : vector<7x7xi32>
    %4 = vector.broadcast %2 : i32 to vector<7x7xi32>
    %5 = arith.addi %4, %3 : vector<7x7xi32>
    %6 = tpu.iota {dimensions = array<i32: 1>} : vector<7x7xi32>
    %7 = arith.cmpi sgt, %6, %5 : vector<7x7xi32>
    %cst = arith.constant -1.000000e+30 : f32
    %cst_2 = arith.constant 0.000000e+00 : f32
    %8 = vector.broadcast %cst : f32 to vector<7x7xf32>
    %9 = vector.broadcast %cst_2 : f32 to vector<7x7xf32>
    %10 = arith.select %7, %8, %9 : vector<7x7xi1>, vector<7x7xf32>
    %c0_3 = arith.constant 0 : index
    %c0_4 = arith.constant 0 : index
    %c0_5 = arith.constant 0 : index
    %c0_6 = arith.constant 0 : index
    %11 = vector.load %arg2[%c0_3, %c0_4, %c0_5, %c0_6] : memref<1x4x7x8xbf16, #tpu.memory_space<vmem>>, vector<1x1x7x8xbf16>
    %12 = vector.shape_cast %11 : vector<1x1x7x8xbf16> to vector<7x8xbf16>
    %c0_7 = arith.constant 0 : index
    %c0_8 = arith.constant 0 : index
    %c0_9 = arith.constant 0 : index
    %c0_10 = arith.constant 0 : index
    %13 = vector.load %arg3[%c0_7, %c0_8, %c0_9, %c0_10] : memref<1x4x7x8xbf16, #tpu.memory_space<vmem>>, vector<1x1x7x8xbf16>
    %14 = vector.shape_cast %13 : vector<1x1x7x8xbf16> to vector<7x8xbf16>
    %c0_11 = arith.constant 0 : index
    %c0_12 = arith.constant 0 : index
    %c0_13 = arith.constant 0 : index
    %c0_14 = arith.constant 0 : index
    %15 = vector.load %arg4[%c0_11, %c0_12, %c0_13, %c0_14] : memref<1x4x7x8xbf16, #tpu.memory_space<vmem>>, vector<1x1x7x8xbf16>
    %16 = vector.shape_cast %15 : vector<1x1x7x8xbf16> to vector<7x8xbf16>
    %cst_15 = arith.constant dense<0.000000e+00> : vector<7x7xf32>
    %17 = tpu.matmul %12, %14, %cst_15 {dimension_numbers = #tpu.dot_dimension_numbers<[1], [1], [0], [0], [0, 0, 1, 0], [], []>} : vector<7x8xbf16>, vector<7x8xbf16>, vector<7x7xf32> -> vector<7x7xf32>
    %18 = vector.broadcast %1 : vector<1x7xf32> to vector<7x7xf32>
    %19 = arith.addf %17, %18 : vector<7x7xf32>
    %20 = arith.addf %19, %10 : vector<7x7xf32>
    %cst_16 = arith.constant dense<0xFF800000> : vector<7xf32>
    %21 = vector.multi_reduction <maximumf>, %20, %cst_16 [1] : vector<7x7xf32> to vector<7xf32>
    %22 = vector.shape_cast %21 : vector<7xf32> to vector<7x1xf32>
    %23 = vector.broadcast %22 : vector<7x1xf32> to vector<7x7xf32>
    %24 = arith.subf %20, %23 : vector<7x7xf32>
    %25 = math.exp %24 : vector<7x7xf32>
    %cst_17 = arith.constant dense<0.000000e+00> : vector<7xf32>
    %26 = vector.multi_reduction <add>, %25, %cst_17 [1] : vector<7x7xf32> to vector<7xf32>
    %27 = vector.shape_cast %26 : vector<7xf32> to vector<7x1xf32>
    %28 = tpu.reciprocal %27 {approx = true} : vector<7x1xf32> -> vector<7x1xf32>
    %29 = vector.broadcast %28 : vector<7x1xf32> to vector<7x7xf32>
    %30 = arith.mulf %25, %29 : vector<7x7xf32>
    %31 = arith.truncf %30 : vector<7x7xf32> to vector<7x7xbf16>
    %cst_18 = arith.constant dense<0.000000e+00> : vector<7x8xf32>
    %32 = tpu.matmul %31, %16, %cst_18 {dimension_numbers = #tpu.dot_dimension_numbers<[1], [0], [0], [1], [0, 0, 1, 1], [], []>} : vector<7x7xbf16>, vector<7x8xbf16>, vector<7x8xf32> -> vector<7x8xf32>
    %33 = arith.truncf %32 : vector<7x8xf32> to vector<7x8xbf16>
    %c0_19 = arith.constant 0 : index
    %c0_20 = arith.constant 0 : index
    %34 = vector.load %arg13[%c0_19, %c0_20] : memref<7x32xbf16, #tpu.memory_space<vmem>>, vector<7x8xbf16>
    tpu.vector_store %arg13[%c0_19, %c0_20], %33 {strides = array<i32>} : memref<7x32xbf16, #tpu.memory_space<vmem>>, vector<7x8xbf16>,
    %c0_21 = arith.constant 0 : index
    %c1 = arith.constant 1 : index
    %c0_22 = arith.constant 0 : index
    %c0_23 = arith.constant 0 : index
    %35 = vector.load %arg2[%c0_21, %c1, %c0_22, %c0_23] : memref<1x4x7x8xbf16, #tpu.memory_space<vmem>>, vector<1x1x7x8xbf16>
    %36 = vector.shape_cast %35 : vector<1x1x7x8xbf16> to vector<7x8xbf16>
    %c0_24 = arith.constant 0 : index
    %c1_25 = arith.constant 1 : index
    %c0_26 = arith.constant 0 : index
    %c0_27 = arith.constant 0 : index
    %37 = vector.load %arg3[%c0_24, %c1_25, %c0_26, %c0_27] : memref<1x4x7x8xbf16, #tpu.memory_space<vmem>>, vector<1x1x7x8xbf16>
    %38 = vector.shape_cast %37 : vector<1x1x7x8xbf16> to vector<7x8xbf16>
    %c0_28 = arith.constant 0 : index
    %c1_29 = arith.constant 1 : index
    %c0_30 = arith.constant 0 : index
    %c0_31 = arith.constant 0 : index
    %39 = vector.load %arg4[%c0_28, %c1_29, %c0_30, %c0_31] : memref<1x4x7x8xbf16, #tpu.memory_space<vmem>>, vector<1x1x7x8xbf16>
    %40 = vector.shape_cast %39 : vector<1x1x7x8xbf16> to vector<7x8xbf16>
    %cst_32 = arith.constant dense<0.000000e+00> : vector<7x7xf32>
    %41 = tpu.matmul %36, %38, %cst_32 {dimension_numbers = #tpu.dot_dimension_numbers<[1], [1], [0], [0], [0, 0, 1, 0], [], []>} : vector<7x8xbf16>, vector<7x8xbf16>, vector<7x7xf32> -> vector<7x7xf32>
    %42 = vector.broadcast %1 : vector<1x7xf32> to vector<7x7xf32>
    %43 = arith.addf %41, %42 : vector<7x7xf32>
    %44 = arith.addf %43, %10 : vector<7x7xf32>
    %cst_33 = arith.constant dense<0xFF800000> : vector<7xf32>
    %45 = vector.multi_reduction <maximumf>, %44, %cst_33 [1] : vector<7x7xf32> to vector<7xf32>
    %46 = vector.shape_cast %45 : vector<7xf32> to vector<7x1xf32>
    %47 = vector.broadcast %46 : vector<7x1xf32> to vector<7x7xf32>
    %48 = arith.subf %44, %47 : vector<7x7xf32>
    %49 = math.exp %48 : vector<7x7xf32>
    %cst_34 = arith.constant dense<0.000000e+00> : vector<7xf32>
    %50 = vector.multi_reduction <add>, %49, %cst_34 [1] : vector<7x7xf32> to vector<7xf32>
    %51 = vector.shape_cast %50 : vector<7xf32> to vector<7x1xf32>
    %52 = tpu.reciprocal %51 {approx = true} : vector<7x1xf32> -> vector<7x1xf32>
    %53 = vector.broadcast %52 : vector<7x1xf32> to vector<7x7xf32>
    %54 = arith.mulf %49, %53 : vector<7x7xf32>
    %55 = arith.truncf %54 : vector<7x7xf32> to vector<7x7xbf16>
    %cst_35 = arith.constant dense<0.000000e+00> : vector<7x8xf32>
    %56 = tpu.matmul %55, %40, %cst_35 {dimension_numbers = #tpu.dot_dimension_numbers<[1], [0], [0], [1], [0, 0, 1, 1], [], []>} : vector<7x7xbf16>, vector<7x8xbf16>, vector<7x8xf32> -> vector<7x8xf32>
    %57 = arith.truncf %56 : vector<7x8xf32> to vector<7x8xbf16>
    %c0_36 = arith.constant 0 : index
    %c8 = arith.constant 8 : index
    %58 = vector.load %arg13[%c0_36, %c8] : memref<7x32xbf16, #tpu.memory_space<vmem>>, vector<7x8xbf16>
    tpu.vector_store %arg13[%c0_36, %c8], %57 {strides = array<i32>} : memref<7x32xbf16, #tpu.memory_space<vmem>>, vector<7x8xbf16>,
    %c0_37 = arith.constant 0 : index
    %c2 = arith.constant 2 : index
    %c0_38 = arith.constant 0 : index
    %c0_39 = arith.constant 0 : index
    %59 = vector.load %arg2[%c0_37, %c2, %c0_38, %c0_39] : memref<1x4x7x8xbf16, #tpu.memory_space<vmem>>, vector<1x1x7x8xbf16>
    %60 = vector.shape_cast %59 : vector<1x1x7x8xbf16> to vector<7x8xbf16>
    %c0_40 = arith.constant 0 : index
    %c2_41 = arith.constant 2 : index
    %c0_42 = arith.constant 0 : index
    %c0_43 = arith.constant 0 : index
    %61 = vector.load %arg3[%c0_40, %c2_41, %c0_42, %c0_43] : memref<1x4x7x8xbf16, #tpu.memory_space<vmem>>, vector<1x1x7x8xbf16>
    %62 = vector.shape_cast %61 : vector<1x1x7x8xbf16> to vector<7x8xbf16>
    %c0_44 = arith.constant 0 : index
    %c2_45 = arith.constant 2 : index
    %c0_46 = arith.constant 0 : index
    %c0_47 = arith.constant 0 : index
    %63 = vector.load %arg4[%c0_44, %c2_45, %c0_46, %c0_47] : memref<1x4x7x8xbf16, #tpu.memory_space<vmem>>, vector<1x1x7x8xbf16>
    %64 = vector.shape_cast %63 : vector<1x1x7x8xbf16> to vector<7x8xbf16>
    %cst_48 = arith.constant dense<0.000000e+00> : vector<7x7xf32>
    %65 = tpu.matmul %60, %62, %cst_48 {dimension_numbers = #tpu.dot_dimension_numbers<[1], [1], [0], [0], [0, 0, 1, 0], [], []>} : vector<7x8xbf16>, vector<7x8xbf16>, vector<7x7xf32> -> vector<7x7xf32>
    %66 = vector.broadcast %1 : vector<1x7xf32> to vector<7x7xf32>
    %67 = arith.addf %65, %66 : vector<7x7xf32>
    %68 = arith.addf %67, %10 : vector<7x7xf32>
    %cst_49 = arith.constant dense<0xFF800000> : vector<7xf32>
    %69 = vector.multi_reduction <maximumf>, %68, %cst_49 [1] : vector<7x7xf32> to vector<7xf32>
    %70 = vector.shape_cast %69 : vector<7xf32> to vector<7x1xf32>
    %71 = vector.broadcast %70 : vector<7x1xf32> to vector<7x7xf32>
    %72 = arith.subf %68, %71 : vector<7x7xf32>
    %73 = math.exp %72 : vector<7x7xf32>
    %cst_50 = arith.constant dense<0.000000e+00> : vector<7xf32>
    %74 = vector.multi_reduction <add>, %73, %cst_50 [1] : vector<7x7xf32> to vector<7xf32>
    %75 = vector.shape_cast %74 : vector<7xf32> to vector<7x1xf32>
    %76 = tpu.reciprocal %75 {approx = true} : vector<7x1xf32> -> vector<7x1xf32>
    %77 = vector.broadcast %76 : vector<7x1xf32> to vector<7x7xf32>
    %78 = arith.mulf %73, %77 : vector<7x7xf32>
    %79 = arith.truncf %78 : vector<7x7xf32> to vector<7x7xbf16>
    %cst_51 = arith.constant dense<0.000000e+00> : vector<7x8xf32>
    %80 = tpu.matmul %79, %64, %cst_51 {dimension_numbers = #tpu.dot_dimension_numbers<[1], [0], [0], [1], [0, 0, 1, 1], [], []>} : vector<7x7xbf16>, vector<7x8xbf16>, vector<7x8xf32> -> vector<7x8xf32>
    %81 = arith.truncf %80 : vector<7x8xf32> to vector<7x8xbf16>
    %c0_52 = arith.constant 0 : index
    %c16 = arith.constant 16 : index
    %82 = vector.load %arg13[%c0_52, %c16] : memref<7x32xbf16, #tpu.memory_space<vmem>>, vector<7x8xbf16>
    tpu.vector_store %arg13[%c0_52, %c16], %81 {strides = array<i32>} : memref<7x32xbf16, #tpu.memory_space<vmem>>, vector<7x8xbf16>,
    %c0_53 = arith.constant 0 : index
    %c3 = arith.constant 3 : index
    %c0_54 = arith.constant 0 : index
    %c0_55 = arith.constant 0 : index
    %83 = vector.load %arg2[%c0_53, %c3, %c0_54, %c0_55] : memref<1x4x7x8xbf16, #tpu.memory_space<vmem>>, vector<1x1x7x8xbf16>
    %84 = vector.shape_cast %83 : vector<1x1x7x8xbf16> to vector<7x8xbf16>
    %c0_56 = arith.constant 0 : index
    %c3_57 = arith.constant 3 : index
    %c0_58 = arith.constant 0 : index
    %c0_59 = arith.constant 0 : index
    %85 = vector.load %arg3[%c0_56, %c3_57, %c0_58, %c0_59] : memref<1x4x7x8xbf16, #tpu.memory_space<vmem>>, vector<1x1x7x8xbf16>
    %86 = vector.shape_cast %85 : vector<1x1x7x8xbf16> to vector<7x8xbf16>
    %c0_60 = arith.constant 0 : index
    %c3_61 = arith.constant 3 : index
    %c0_62 = arith.constant 0 : index
    %c0_63 = arith.constant 0 : index
    %87 = vector.load %arg4[%c0_60, %c3_61, %c0_62, %c0_63] : memref<1x4x7x8xbf16, #tpu.memory_space<vmem>>, vector<1x1x7x8xbf16>
    %88 = vector.shape_cast %87 : vector<1x1x7x8xbf16> to vector<7x8xbf16>
    %cst_64 = arith.constant dense<0.000000e+00> : vector<7x7xf32>
    %89 = tpu.matmul %84, %86, %cst_64 {dimension_numbers = #tpu.dot_dimension_numbers<[1], [1], [0], [0], [0, 0, 1, 0], [], []>} : vector<7x8xbf16>, vector<7x8xbf16>, vector<7x7xf32> -> vector<7x7xf32>
    %90 = vector.broadcast %1 : vector<1x7xf32> to vector<7x7xf32>
    %91 = arith.addf %89, %90 : vector<7x7xf32>
    %92 = arith.addf %91, %10 : vector<7x7xf32>
    %cst_65 = arith.constant dense<0xFF800000> : vector<7xf32>
    %93 = vector.multi_reduction <maximumf>, %92, %cst_65 [1] : vector<7x7xf32> to vector<7xf32>
    %94 = vector.shape_cast %93 : vector<7xf32> to vector<7x1xf32>
    %95 = vector.broadcast %94 : vector<7x1xf32> to vector<7x7xf32>
    %96 = arith.subf %92, %95 : vector<7x7xf32>
    %97 = math.exp %96 : vector<7x7xf32>
    %cst_66 = arith.constant dense<0.000000e+00> : vector<7xf32>
    %98 = vector.multi_reduction <add>, %97, %cst_66 [1] : vector<7x7xf32> to vector<7xf32>
    %99 = vector.shape_cast %98 : vector<7xf32> to vector<7x1xf32>
    %100 = tpu.reciprocal %99 {approx = true} : vector<7x1xf32> -> vector<7x1xf32>
    %101 = vector.broadcast %100 : vector<7x1xf32> to vector<7x7xf32>
    %102 = arith.mulf %97, %101 : vector<7x7xf32>
    %103 = arith.truncf %102 : vector<7x7xf32> to vector<7x7xbf16>
    %cst_67 = arith.constant dense<0.000000e+00> : vector<7x8xf32>
    %104 = tpu.matmul %103, %88, %cst_67 {dimension_numbers = #tpu.dot_dimension_numbers<[1], [0], [0], [1], [0, 0, 1, 1], [], []>} : vector<7x7xbf16>, vector<7x8xbf16>, vector<7x8xf32> -> vector<7x8xf32>
    %105 = arith.truncf %104 : vector<7x8xf32> to vector<7x8xbf16>
    %c0_68 = arith.constant 0 : index
    %c24 = arith.constant 24 : index
    %106 = vector.load %arg13[%c0_68, %c24] : memref<7x32xbf16, #tpu.memory_space<vmem>>, vector<7x8xbf16>
    tpu.vector_store %arg13[%c0_68, %c24], %105 {strides = array<i32>} : memref<7x32xbf16, #tpu.memory_space<vmem>>, vector<7x8xbf16>,
    %c0_69 = arith.constant 0 : index
    %c0_70 = arith.constant 0 : index
    %107 = vector.load %arg13[%c0_69, %c0_70] : memref<7x32xbf16, #tpu.memory_space<vmem>>, vector<7x32xbf16>
    %c0_71 = arith.constant 0 : index
    %c0_72 = arith.constant 0 : index
    %108 = vector.load %arg8[%c0_71, %c0_72] : memref<32x32xbf16, #tpu.memory_space<vmem>>, vector<32x32xbf16>
    %cst_73 = arith.constant dense<0.000000e+00> : vector<7x32xf32>
    %109 = tpu.matmul %107, %108, %cst_73 {dimension_numbers = #tpu.dot_dimension_numbers<[1], [0], [0], [1], [0, 0, 1, 1], [], []>} : vector<7x32xbf16>, vector<32x32xbf16>, vector<7x32xf32> -> vector<7x32xf32>
    %c0_74 = arith.constant 0 : index
    %c0_75 = arith.constant 0 : index
    %110 = vector.load %arg9[%c0_74, %c0_75] : memref<1x32xf32, #tpu.memory_space<vmem>>, vector<1x32xf32>
    %111 = vector.broadcast %110 : vector<1x32xf32> to vector<7x32xf32>
    %112 = arith.addf %109, %111 : vector<7x32xf32>
    %c0_76 = arith.constant 0 : index
    %c0_77 = arith.constant 0 : index
    %c0_78 = arith.constant 0 : index
    %113 = vector.load %arg6[%c0_76, %c0_77, %c0_78] : memref<1x7x32xbf16, #tpu.memory_space<vmem>>, vector<1x7x32xbf16>
    %114 = vector.shape_cast %113 : vector<1x7x32xbf16> to vector<7x32xbf16>
    %115 = arith.extf %114 : vector<7x32xbf16> to vector<7x32xf32>
    %116 = arith.addf %112, %115 : vector<7x32xf32>
    %cst_79 = arith.constant dense<0.000000e+00> : vector<7xf32>
    %117 = vector.multi_reduction <add>, %116, %cst_79 [1] : vector<7x32xf32> to vector<7xf32>
    %118 = vector.shape_cast %117 : vector<7xf32> to vector<7x1xf32>
    %cst_80 = arith.constant 3.200000e+01 : f32
    %119 = vector.broadcast %cst_80 : f32 to vector<7x1xf32>
    %120 = arith.divf %118, %119 : vector<7x1xf32>
    %121 = vector.broadcast %120 : vector<7x1xf32> to vector<7x32xf32>
    %122 = arith.subf %116, %121 : vector<7x32xf32>
    %123 = arith.mulf %122, %122 : vector<7x32xf32>
    %cst_81 = arith.constant dense<0.000000e+00> : vector<7xf32>
    %124 = vector.multi_reduction <add>, %123, %cst_81 [1] : vector<7x32xf32> to vector<7xf32>
    %125 = vector.shape_cast %124 : vector<7xf32> to vector<7x1xf32>
    %cst_82 = arith.constant 3.200000e+01 : f32
    %126 = vector.broadcast %cst_82 : f32 to vector<7x1xf32>
    %127 = arith.divf %125, %126 : vector<7x1xf32>
    %128 = vector.broadcast %120 : vector<7x1xf32> to vector<7x32xf32>
    %129 = arith.subf %116, %128 : vector<7x32xf32>
    %cst_83 = arith.constant 9.99999974E-6 : f32
    %130 = vector.broadcast %cst_83 : f32 to vector<7x1xf32>
    %131 = arith.addf %127, %130 : vector<7x1xf32>
    %132 = math.rsqrt %131 : vector<7x1xf32>
    %133 = vector.broadcast %132 : vector<7x1xf32> to vector<7x32xf32>
    %134 = arith.mulf %129, %133 : vector<7x32xf32>
    %c0_84 = arith.constant 0 : index
    %c0_85 = arith.constant 0 : index
    %135 = vector.load %arg10[%c0_84, %c0_85] : memref<1x32xf32, #tpu.memory_space<vmem>>, vector<1x32xf32>
    %136 = vector.broadcast %135 : vector<1x32xf32> to vector<7x32xf32>
    %137 = arith.mulf %134, %136 : vector<7x32xf32>
    %c0_86 = arith.constant 0 : index
    %c0_87 = arith.constant 0 : index
    %138 = vector.load %arg11[%c0_86, %c0_87] : memref<1x32xf32, #tpu.memory_space<vmem>>, vector<1x32xf32>
    %139 = vector.broadcast %138 : vector<1x32xf32> to vector<7x32xf32>
    %140 = arith.addf %137, %139 : vector<7x32xf32>
    %c0_88 = arith.constant 0 : index
    %c0_89 = arith.constant 0 : index
    %c0_90 = arith.constant 0 : index
    %141 = vector.load %arg7[%c0_88, %c0_89, %c0_90] : memref<1x7x1xf32, #tpu.memory_space<vmem>>, vector<1x7x1xf32>
    %142 = vector.shape_cast %141 : vector<1x7x1xf32> to vector<7x1xf32>
    %143 = vector.broadcast %142 : vector<7x1xf32> to vector<7x32xf32>
    %144 = arith.mulf %140, %143 : vector<7x32xf32>
    %145 = arith.truncf %144 : vector<7x32xf32> to vector<7x32xbf16>
    %c0_91 = arith.constant 0 : index
    %c0_92 = arith.constant 0 : index
    %c0_93 = arith.constant 0 : index
    %146 = vector.load %arg12[%c0_91, %c0_92, %c0_93] : memref<1x7x32xbf16, #tpu.memory_space<vmem>>, vector<1x7x32xbf16>
    %147 = vector.shape_cast %146 : vector<1x7x32xbf16> to vector<7x32xbf16>
    %148 = vector.shape_cast %145 : vector<7x32xbf16> to vector<1x7x32xbf16>
    tpu.vector_store %arg12[%c0_91, %c0_92, %c0_93], %148 {strides = array<i32>} : memref<1x7x32xbf16, #tpu.memory_space<vmem>>, vector<1x7x32xbf16>,
    return
  }
  func.func @transform_0(%arg0: i32, %arg1: i32) -> (i32, i32, i32, i32) {
    %c0_i32 = arith.constant 0 : i32
    %c0_i32_0 = arith.constant 0 : i32
    %c0_i32_1 = arith.constant 0 : i32
    return %arg0, %c0_i32, %arg1, %c0_i32_0 : i32, i32, i32, i32
  }
  func.func @transform_1(%arg0: i32, %arg1: i32) -> (i32, i32, i32, i32) {
    %c0_i32 = arith.constant 0 : i32
    %c0_i32_0 = arith.constant 0 : i32
    %c0_i32_1 = arith.constant 0 : i32
    %c0_i32_2 = arith.constant 0 : i32
    return %arg0, %c0_i32, %c0_i32_0, %c0_i32_1 : i32, i32, i32, i32
  }
  func.func @transform_2(%arg0: i32, %arg1: i32) -> (i32, i32, i32, i32) {
    %c0_i32 = arith.constant 0 : i32
    %c0_i32_0 = arith.constant 0 : i32
    %c0_i32_1 = arith.constant 0 : i32
    %c0_i32_2 = arith.constant 0 : i32
    return %arg0, %c0_i32, %c0_i32_0, %c0_i32_1 : i32, i32, i32, i32
  }
  func.func @transform_3(%arg0: i32, %arg1: i32) -> (i32, i32, i32) {
    %c0_i32 = arith.constant 0 : i32
    %c0_i32_0 = arith.constant 0 : i32
    %c0_i32_1 = arith.constant 0 : i32
    return %arg0, %c0_i32, %c0_i32_0 : i32, i32, i32
  }
  func.func @transform_4(%arg0: i32, %arg1: i32) -> (i32, i32, i32) {
    %c0_i32 = arith.constant 0 : i32
    %c0_i32_0 = arith.constant 0 : i32
    return %arg0, %arg1, %c0_i32 : i32, i32, i32
  }
  func.func @transform_5(%arg0: i32, %arg1: i32) -> (i32, i32, i32) {
    %c0_i32 = arith.constant 0 : i32
    %c0_i32_0 = arith.constant 0 : i32
    return %arg0, %arg1, %c0_i32 : i32, i32, i32
  }
  func.func @transform_6(%arg0: i32, %arg1: i32) -> (i32, i32) {
    %c0_i32 = arith.constant 0 : i32
    %c0_i32_0 = arith.constant 0 : i32
    %c0_i32_1 = arith.constant 0 : i32
    return %c0_i32, %c0_i32_0 : i32, i32
  }
  func.func @transform_7(%arg0: i32, %arg1: i32) -> (i32, i32) {
    %c0_i32 = arith.constant 0 : i32
    %c0_i32_0 = arith.constant 0 : i32
    %c0_i32_1 = arith.constant 0 : i32
    return %c0_i32, %c0_i32_0 : i32, i32
  }
  func.func @transform_8(%arg0: i32, %arg1: i32) -> (i32, i32) {
    %c0_i32 = arith.constant 0 : i32
    %c0_i32_0 = arith.constant 0 : i32
    %c0_i32_1 = arith.constant 0 : i32
    return %c0_i32, %c0_i32_0 : i32, i32
  }
  func.func @transform_9(%arg0: i32, %arg1: i32) -> (i32, i32) {
    %c0_i32 = arith.constant 0 : i32
    %c0_i32_0 = arith.constant 0 : i32
    %c0_i32_1 = arith.constant 0 : i32
    return %c0_i32, %c0_i32_0 : i32, i32
  }
  func.func @transform_10(%arg0: i32, %arg1: i32) -> (i32, i32, i32) {
    %c0_i32 = arith.constant 0 : i32
    %c0_i32_0 = arith.constant 0 : i32
    return %arg0, %arg1, %c0_i32 : i32, i32, i32
  }
}

module attributes {stable_mosaic.version = 11 : i64} {
  func.func @_mha_core_kernel(%arg0: i32, %arg1: i32, %arg2: memref<1x4x7x8xbf16, #tpu.memory_space<vmem>>, %arg3: memref<1x4x8x8xbf16, #tpu.memory_space<vmem>>, %arg4: memref<1x4x8x8xbf16, #tpu.memory_space<vmem>>, %arg5: memref<1x1x8xf32, #tpu.memory_space<vmem>>, %arg6: memref<1x7x32xbf16, #tpu.memory_space<vmem>>, %arg7: memref<1x7x1xf32, #tpu.memory_space<vmem>>, %arg8: memref<32x32xbf16, #tpu.memory_space<vmem>>, %arg9: memref<1x32xf32, #tpu.memory_space<vmem>>, %arg10: memref<1x32xf32, #tpu.memory_space<vmem>>, %arg11: memref<1x32xf32, #tpu.memory_space<vmem>>, %arg12: memref<1x7x32xbf16, #tpu.memory_space<vmem>>, %arg13: memref<7x32xbf16, #tpu.memory_space<vmem>>) attributes {dimension_semantics = [#tpu.dimension_semantics<parallel>, #tpu.dimension_semantics<parallel>], iteration_bounds = array<i64: 2, 1>, scalar_prefetch = 0 : i64, scratch_operands = 1 : i64, tpu.core_type = #tpu.core_type<tc>, window_params = [{transform_indices = @transform_0, window_bounds = array<i64: 1, 4, 7, 8>}, {transform_indices = @transform_1, window_bounds = array<i64: 1, 4, 8, 8>}, {transform_indices = @transform_2, window_bounds = array<i64: 1, 4, 8, 8>}, {transform_indices = @transform_3, window_bounds = array<i64: 1, 1, 8>}, {transform_indices = @transform_4, window_bounds = array<i64: 1, 7, 32>}, {transform_indices = @transform_5, window_bounds = array<i64: 1, 7, 1>}, {pipeline_mode = #tpu.pipeline_mode<synchronous>, transform_indices = @transform_6, window_bounds = array<i64: 32, 32>}, {pipeline_mode = #tpu.pipeline_mode<synchronous>, transform_indices = @transform_7, window_bounds = array<i64: 1, 32>}, {pipeline_mode = #tpu.pipeline_mode<synchronous>, transform_indices = @transform_8, window_bounds = array<i64: 1, 32>}, {pipeline_mode = #tpu.pipeline_mode<synchronous>, transform_indices = @transform_9, window_bounds = array<i64: 1, 32>}, {transform_indices = @transform_10, window_bounds = array<i64: 1, 7, 32>}]} {
    %c0 = arith.constant 0 : index
    %c0_0 = arith.constant 0 : index
    %c0_1 = arith.constant 0 : index
    %0 = vector.load %arg5[%c0, %c0_0, %c0_1] : memref<1x1x8xf32, #tpu.memory_space<vmem>>, vector<1x1x8xf32>
    %1 = vector.shape_cast %0 : vector<1x1x8xf32> to vector<1x8xf32>
    %c0_2 = arith.constant 0 : index
    %c0_3 = arith.constant 0 : index
    %c0_4 = arith.constant 0 : index
    %c0_5 = arith.constant 0 : index
    %2 = vector.load %arg2[%c0_2, %c0_3, %c0_4, %c0_5] : memref<1x4x7x8xbf16, #tpu.memory_space<vmem>>, vector<1x1x7x8xbf16>
    %3 = vector.shape_cast %2 : vector<1x1x7x8xbf16> to vector<7x8xbf16>
    %c0_6 = arith.constant 0 : index
    %c0_7 = arith.constant 0 : index
    %c0_8 = arith.constant 0 : index
    %c0_9 = arith.constant 0 : index
    %4 = vector.load %arg3[%c0_6, %c0_7, %c0_8, %c0_9] : memref<1x4x8x8xbf16, #tpu.memory_space<vmem>>, vector<1x1x8x8xbf16>
    %5 = vector.shape_cast %4 : vector<1x1x8x8xbf16> to vector<8x8xbf16>
    %c0_10 = arith.constant 0 : index
    %c0_11 = arith.constant 0 : index
    %c0_12 = arith.constant 0 : index
    %c0_13 = arith.constant 0 : index
    %6 = vector.load %arg4[%c0_10, %c0_11, %c0_12, %c0_13] : memref<1x4x8x8xbf16, #tpu.memory_space<vmem>>, vector<1x1x8x8xbf16>
    %7 = vector.shape_cast %6 : vector<1x1x8x8xbf16> to vector<8x8xbf16>
    %cst = arith.constant dense<0.000000e+00> : vector<7x8xf32>
    %8 = tpu.matmul %3, %5, %cst {dimension_numbers = #tpu.dot_dimension_numbers<[1], [1], [0], [0], [0, 0, 1, 0], [], []>} : vector<7x8xbf16>, vector<8x8xbf16>, vector<7x8xf32> -> vector<7x8xf32>
    %9 = vector.broadcast %1 : vector<1x8xf32> to vector<7x8xf32>
    %10 = arith.addf %8, %9 : vector<7x8xf32>
    %cst_14 = arith.constant dense<0xFF800000> : vector<7xf32>
    %11 = vector.multi_reduction <maximumf>, %10, %cst_14 [1] : vector<7x8xf32> to vector<7xf32>
    %12 = vector.shape_cast %11 : vector<7xf32> to vector<7x1xf32>
    %13 = vector.broadcast %12 : vector<7x1xf32> to vector<7x8xf32>
    %14 = arith.subf %10, %13 : vector<7x8xf32>
    %15 = math.exp %14 : vector<7x8xf32>
    %cst_15 = arith.constant dense<0.000000e+00> : vector<7xf32>
    %16 = vector.multi_reduction <add>, %15, %cst_15 [1] : vector<7x8xf32> to vector<7xf32>
    %17 = vector.shape_cast %16 : vector<7xf32> to vector<7x1xf32>
    %18 = tpu.reciprocal %17 {approx = true} : vector<7x1xf32> -> vector<7x1xf32>
    %19 = vector.broadcast %18 : vector<7x1xf32> to vector<7x8xf32>
    %20 = arith.mulf %15, %19 : vector<7x8xf32>
    %21 = arith.truncf %20 : vector<7x8xf32> to vector<7x8xbf16>
    %cst_16 = arith.constant dense<0.000000e+00> : vector<7x8xf32>
    %22 = tpu.matmul %21, %7, %cst_16 {dimension_numbers = #tpu.dot_dimension_numbers<[1], [0], [0], [1], [0, 0, 1, 1], [], []>} : vector<7x8xbf16>, vector<8x8xbf16>, vector<7x8xf32> -> vector<7x8xf32>
    %23 = arith.truncf %22 : vector<7x8xf32> to vector<7x8xbf16>
    %c0_17 = arith.constant 0 : index
    %c0_18 = arith.constant 0 : index
    %24 = vector.load %arg13[%c0_17, %c0_18] : memref<7x32xbf16, #tpu.memory_space<vmem>>, vector<7x8xbf16>
    tpu.vector_store %arg13[%c0_17, %c0_18], %23 {strides = array<i32>} : memref<7x32xbf16, #tpu.memory_space<vmem>>, vector<7x8xbf16>,
    %c0_19 = arith.constant 0 : index
    %c1 = arith.constant 1 : index
    %c0_20 = arith.constant 0 : index
    %c0_21 = arith.constant 0 : index
    %25 = vector.load %arg2[%c0_19, %c1, %c0_20, %c0_21] : memref<1x4x7x8xbf16, #tpu.memory_space<vmem>>, vector<1x1x7x8xbf16>
    %26 = vector.shape_cast %25 : vector<1x1x7x8xbf16> to vector<7x8xbf16>
    %c0_22 = arith.constant 0 : index
    %c1_23 = arith.constant 1 : index
    %c0_24 = arith.constant 0 : index
    %c0_25 = arith.constant 0 : index
    %27 = vector.load %arg3[%c0_22, %c1_23, %c0_24, %c0_25] : memref<1x4x8x8xbf16, #tpu.memory_space<vmem>>, vector<1x1x8x8xbf16>
    %28 = vector.shape_cast %27 : vector<1x1x8x8xbf16> to vector<8x8xbf16>
    %c0_26 = arith.constant 0 : index
    %c1_27 = arith.constant 1 : index
    %c0_28 = arith.constant 0 : index
    %c0_29 = arith.constant 0 : index
    %29 = vector.load %arg4[%c0_26, %c1_27, %c0_28, %c0_29] : memref<1x4x8x8xbf16, #tpu.memory_space<vmem>>, vector<1x1x8x8xbf16>
    %30 = vector.shape_cast %29 : vector<1x1x8x8xbf16> to vector<8x8xbf16>
    %cst_30 = arith.constant dense<0.000000e+00> : vector<7x8xf32>
    %31 = tpu.matmul %26, %28, %cst_30 {dimension_numbers = #tpu.dot_dimension_numbers<[1], [1], [0], [0], [0, 0, 1, 0], [], []>} : vector<7x8xbf16>, vector<8x8xbf16>, vector<7x8xf32> -> vector<7x8xf32>
    %32 = vector.broadcast %1 : vector<1x8xf32> to vector<7x8xf32>
    %33 = arith.addf %31, %32 : vector<7x8xf32>
    %cst_31 = arith.constant dense<0xFF800000> : vector<7xf32>
    %34 = vector.multi_reduction <maximumf>, %33, %cst_31 [1] : vector<7x8xf32> to vector<7xf32>
    %35 = vector.shape_cast %34 : vector<7xf32> to vector<7x1xf32>
    %36 = vector.broadcast %35 : vector<7x1xf32> to vector<7x8xf32>
    %37 = arith.subf %33, %36 : vector<7x8xf32>
    %38 = math.exp %37 : vector<7x8xf32>
    %cst_32 = arith.constant dense<0.000000e+00> : vector<7xf32>
    %39 = vector.multi_reduction <add>, %38, %cst_32 [1] : vector<7x8xf32> to vector<7xf32>
    %40 = vector.shape_cast %39 : vector<7xf32> to vector<7x1xf32>
    %41 = tpu.reciprocal %40 {approx = true} : vector<7x1xf32> -> vector<7x1xf32>
    %42 = vector.broadcast %41 : vector<7x1xf32> to vector<7x8xf32>
    %43 = arith.mulf %38, %42 : vector<7x8xf32>
    %44 = arith.truncf %43 : vector<7x8xf32> to vector<7x8xbf16>
    %cst_33 = arith.constant dense<0.000000e+00> : vector<7x8xf32>
    %45 = tpu.matmul %44, %30, %cst_33 {dimension_numbers = #tpu.dot_dimension_numbers<[1], [0], [0], [1], [0, 0, 1, 1], [], []>} : vector<7x8xbf16>, vector<8x8xbf16>, vector<7x8xf32> -> vector<7x8xf32>
    %46 = arith.truncf %45 : vector<7x8xf32> to vector<7x8xbf16>
    %c0_34 = arith.constant 0 : index
    %c8 = arith.constant 8 : index
    %47 = vector.load %arg13[%c0_34, %c8] : memref<7x32xbf16, #tpu.memory_space<vmem>>, vector<7x8xbf16>
    tpu.vector_store %arg13[%c0_34, %c8], %46 {strides = array<i32>} : memref<7x32xbf16, #tpu.memory_space<vmem>>, vector<7x8xbf16>,
    %c0_35 = arith.constant 0 : index
    %c2 = arith.constant 2 : index
    %c0_36 = arith.constant 0 : index
    %c0_37 = arith.constant 0 : index
    %48 = vector.load %arg2[%c0_35, %c2, %c0_36, %c0_37] : memref<1x4x7x8xbf16, #tpu.memory_space<vmem>>, vector<1x1x7x8xbf16>
    %49 = vector.shape_cast %48 : vector<1x1x7x8xbf16> to vector<7x8xbf16>
    %c0_38 = arith.constant 0 : index
    %c2_39 = arith.constant 2 : index
    %c0_40 = arith.constant 0 : index
    %c0_41 = arith.constant 0 : index
    %50 = vector.load %arg3[%c0_38, %c2_39, %c0_40, %c0_41] : memref<1x4x8x8xbf16, #tpu.memory_space<vmem>>, vector<1x1x8x8xbf16>
    %51 = vector.shape_cast %50 : vector<1x1x8x8xbf16> to vector<8x8xbf16>
    %c0_42 = arith.constant 0 : index
    %c2_43 = arith.constant 2 : index
    %c0_44 = arith.constant 0 : index
    %c0_45 = arith.constant 0 : index
    %52 = vector.load %arg4[%c0_42, %c2_43, %c0_44, %c0_45] : memref<1x4x8x8xbf16, #tpu.memory_space<vmem>>, vector<1x1x8x8xbf16>
    %53 = vector.shape_cast %52 : vector<1x1x8x8xbf16> to vector<8x8xbf16>
    %cst_46 = arith.constant dense<0.000000e+00> : vector<7x8xf32>
    %54 = tpu.matmul %49, %51, %cst_46 {dimension_numbers = #tpu.dot_dimension_numbers<[1], [1], [0], [0], [0, 0, 1, 0], [], []>} : vector<7x8xbf16>, vector<8x8xbf16>, vector<7x8xf32> -> vector<7x8xf32>
    %55 = vector.broadcast %1 : vector<1x8xf32> to vector<7x8xf32>
    %56 = arith.addf %54, %55 : vector<7x8xf32>
    %cst_47 = arith.constant dense<0xFF800000> : vector<7xf32>
    %57 = vector.multi_reduction <maximumf>, %56, %cst_47 [1] : vector<7x8xf32> to vector<7xf32>
    %58 = vector.shape_cast %57 : vector<7xf32> to vector<7x1xf32>
    %59 = vector.broadcast %58 : vector<7x1xf32> to vector<7x8xf32>
    %60 = arith.subf %56, %59 : vector<7x8xf32>
    %61 = math.exp %60 : vector<7x8xf32>
    %cst_48 = arith.constant dense<0.000000e+00> : vector<7xf32>
    %62 = vector.multi_reduction <add>, %61, %cst_48 [1] : vector<7x8xf32> to vector<7xf32>
    %63 = vector.shape_cast %62 : vector<7xf32> to vector<7x1xf32>
    %64 = tpu.reciprocal %63 {approx = true} : vector<7x1xf32> -> vector<7x1xf32>
    %65 = vector.broadcast %64 : vector<7x1xf32> to vector<7x8xf32>
    %66 = arith.mulf %61, %65 : vector<7x8xf32>
    %67 = arith.truncf %66 : vector<7x8xf32> to vector<7x8xbf16>
    %cst_49 = arith.constant dense<0.000000e+00> : vector<7x8xf32>
    %68 = tpu.matmul %67, %53, %cst_49 {dimension_numbers = #tpu.dot_dimension_numbers<[1], [0], [0], [1], [0, 0, 1, 1], [], []>} : vector<7x8xbf16>, vector<8x8xbf16>, vector<7x8xf32> -> vector<7x8xf32>
    %69 = arith.truncf %68 : vector<7x8xf32> to vector<7x8xbf16>
    %c0_50 = arith.constant 0 : index
    %c16 = arith.constant 16 : index
    %70 = vector.load %arg13[%c0_50, %c16] : memref<7x32xbf16, #tpu.memory_space<vmem>>, vector<7x8xbf16>
    tpu.vector_store %arg13[%c0_50, %c16], %69 {strides = array<i32>} : memref<7x32xbf16, #tpu.memory_space<vmem>>, vector<7x8xbf16>,
    %c0_51 = arith.constant 0 : index
    %c3 = arith.constant 3 : index
    %c0_52 = arith.constant 0 : index
    %c0_53 = arith.constant 0 : index
    %71 = vector.load %arg2[%c0_51, %c3, %c0_52, %c0_53] : memref<1x4x7x8xbf16, #tpu.memory_space<vmem>>, vector<1x1x7x8xbf16>
    %72 = vector.shape_cast %71 : vector<1x1x7x8xbf16> to vector<7x8xbf16>
    %c0_54 = arith.constant 0 : index
    %c3_55 = arith.constant 3 : index
    %c0_56 = arith.constant 0 : index
    %c0_57 = arith.constant 0 : index
    %73 = vector.load %arg3[%c0_54, %c3_55, %c0_56, %c0_57] : memref<1x4x8x8xbf16, #tpu.memory_space<vmem>>, vector<1x1x8x8xbf16>
    %74 = vector.shape_cast %73 : vector<1x1x8x8xbf16> to vector<8x8xbf16>
    %c0_58 = arith.constant 0 : index
    %c3_59 = arith.constant 3 : index
    %c0_60 = arith.constant 0 : index
    %c0_61 = arith.constant 0 : index
    %75 = vector.load %arg4[%c0_58, %c3_59, %c0_60, %c0_61] : memref<1x4x8x8xbf16, #tpu.memory_space<vmem>>, vector<1x1x8x8xbf16>
    %76 = vector.shape_cast %75 : vector<1x1x8x8xbf16> to vector<8x8xbf16>
    %cst_62 = arith.constant dense<0.000000e+00> : vector<7x8xf32>
    %77 = tpu.matmul %72, %74, %cst_62 {dimension_numbers = #tpu.dot_dimension_numbers<[1], [1], [0], [0], [0, 0, 1, 0], [], []>} : vector<7x8xbf16>, vector<8x8xbf16>, vector<7x8xf32> -> vector<7x8xf32>
    %78 = vector.broadcast %1 : vector<1x8xf32> to vector<7x8xf32>
    %79 = arith.addf %77, %78 : vector<7x8xf32>
    %cst_63 = arith.constant dense<0xFF800000> : vector<7xf32>
    %80 = vector.multi_reduction <maximumf>, %79, %cst_63 [1] : vector<7x8xf32> to vector<7xf32>
    %81 = vector.shape_cast %80 : vector<7xf32> to vector<7x1xf32>
    %82 = vector.broadcast %81 : vector<7x1xf32> to vector<7x8xf32>
    %83 = arith.subf %79, %82 : vector<7x8xf32>
    %84 = math.exp %83 : vector<7x8xf32>
    %cst_64 = arith.constant dense<0.000000e+00> : vector<7xf32>
    %85 = vector.multi_reduction <add>, %84, %cst_64 [1] : vector<7x8xf32> to vector<7xf32>
    %86 = vector.shape_cast %85 : vector<7xf32> to vector<7x1xf32>
    %87 = tpu.reciprocal %86 {approx = true} : vector<7x1xf32> -> vector<7x1xf32>
    %88 = vector.broadcast %87 : vector<7x1xf32> to vector<7x8xf32>
    %89 = arith.mulf %84, %88 : vector<7x8xf32>
    %90 = arith.truncf %89 : vector<7x8xf32> to vector<7x8xbf16>
    %cst_65 = arith.constant dense<0.000000e+00> : vector<7x8xf32>
    %91 = tpu.matmul %90, %76, %cst_65 {dimension_numbers = #tpu.dot_dimension_numbers<[1], [0], [0], [1], [0, 0, 1, 1], [], []>} : vector<7x8xbf16>, vector<8x8xbf16>, vector<7x8xf32> -> vector<7x8xf32>
    %92 = arith.truncf %91 : vector<7x8xf32> to vector<7x8xbf16>
    %c0_66 = arith.constant 0 : index
    %c24 = arith.constant 24 : index
    %93 = vector.load %arg13[%c0_66, %c24] : memref<7x32xbf16, #tpu.memory_space<vmem>>, vector<7x8xbf16>
    tpu.vector_store %arg13[%c0_66, %c24], %92 {strides = array<i32>} : memref<7x32xbf16, #tpu.memory_space<vmem>>, vector<7x8xbf16>,
    %c0_67 = arith.constant 0 : index
    %c0_68 = arith.constant 0 : index
    %94 = vector.load %arg13[%c0_67, %c0_68] : memref<7x32xbf16, #tpu.memory_space<vmem>>, vector<7x32xbf16>
    %c0_69 = arith.constant 0 : index
    %c0_70 = arith.constant 0 : index
    %95 = vector.load %arg8[%c0_69, %c0_70] : memref<32x32xbf16, #tpu.memory_space<vmem>>, vector<32x32xbf16>
    %cst_71 = arith.constant dense<0.000000e+00> : vector<7x32xf32>
    %96 = tpu.matmul %94, %95, %cst_71 {dimension_numbers = #tpu.dot_dimension_numbers<[1], [0], [0], [1], [0, 0, 1, 1], [], []>} : vector<7x32xbf16>, vector<32x32xbf16>, vector<7x32xf32> -> vector<7x32xf32>
    %c0_72 = arith.constant 0 : index
    %c0_73 = arith.constant 0 : index
    %97 = vector.load %arg9[%c0_72, %c0_73] : memref<1x32xf32, #tpu.memory_space<vmem>>, vector<1x32xf32>
    %98 = vector.broadcast %97 : vector<1x32xf32> to vector<7x32xf32>
    %99 = arith.addf %96, %98 : vector<7x32xf32>
    %c0_74 = arith.constant 0 : index
    %c0_75 = arith.constant 0 : index
    %c0_76 = arith.constant 0 : index
    %100 = vector.load %arg6[%c0_74, %c0_75, %c0_76] : memref<1x7x32xbf16, #tpu.memory_space<vmem>>, vector<1x7x32xbf16>
    %101 = vector.shape_cast %100 : vector<1x7x32xbf16> to vector<7x32xbf16>
    %102 = arith.extf %101 : vector<7x32xbf16> to vector<7x32xf32>
    %103 = arith.addf %99, %102 : vector<7x32xf32>
    %cst_77 = arith.constant dense<0.000000e+00> : vector<7xf32>
    %104 = vector.multi_reduction <add>, %103, %cst_77 [1] : vector<7x32xf32> to vector<7xf32>
    %105 = vector.shape_cast %104 : vector<7xf32> to vector<7x1xf32>
    %cst_78 = arith.constant 3.200000e+01 : f32
    %106 = vector.broadcast %cst_78 : f32 to vector<7x1xf32>
    %107 = arith.divf %105, %106 : vector<7x1xf32>
    %108 = vector.broadcast %107 : vector<7x1xf32> to vector<7x32xf32>
    %109 = arith.subf %103, %108 : vector<7x32xf32>
    %110 = arith.mulf %109, %109 : vector<7x32xf32>
    %cst_79 = arith.constant dense<0.000000e+00> : vector<7xf32>
    %111 = vector.multi_reduction <add>, %110, %cst_79 [1] : vector<7x32xf32> to vector<7xf32>
    %112 = vector.shape_cast %111 : vector<7xf32> to vector<7x1xf32>
    %cst_80 = arith.constant 3.200000e+01 : f32
    %113 = vector.broadcast %cst_80 : f32 to vector<7x1xf32>
    %114 = arith.divf %112, %113 : vector<7x1xf32>
    %115 = vector.broadcast %107 : vector<7x1xf32> to vector<7x32xf32>
    %116 = arith.subf %103, %115 : vector<7x32xf32>
    %cst_81 = arith.constant 9.99999974E-6 : f32
    %117 = vector.broadcast %cst_81 : f32 to vector<7x1xf32>
    %118 = arith.addf %114, %117 : vector<7x1xf32>
    %119 = math.rsqrt %118 : vector<7x1xf32>
    %120 = vector.broadcast %119 : vector<7x1xf32> to vector<7x32xf32>
    %121 = arith.mulf %116, %120 : vector<7x32xf32>
    %c0_82 = arith.constant 0 : index
    %c0_83 = arith.constant 0 : index
    %122 = vector.load %arg10[%c0_82, %c0_83] : memref<1x32xf32, #tpu.memory_space<vmem>>, vector<1x32xf32>
    %123 = vector.broadcast %122 : vector<1x32xf32> to vector<7x32xf32>
    %124 = arith.mulf %121, %123 : vector<7x32xf32>
    %c0_84 = arith.constant 0 : index
    %c0_85 = arith.constant 0 : index
    %125 = vector.load %arg11[%c0_84, %c0_85] : memref<1x32xf32, #tpu.memory_space<vmem>>, vector<1x32xf32>
    %126 = vector.broadcast %125 : vector<1x32xf32> to vector<7x32xf32>
    %127 = arith.addf %124, %126 : vector<7x32xf32>
    %c0_86 = arith.constant 0 : index
    %c0_87 = arith.constant 0 : index
    %c0_88 = arith.constant 0 : index
    %128 = vector.load %arg7[%c0_86, %c0_87, %c0_88] : memref<1x7x1xf32, #tpu.memory_space<vmem>>, vector<1x7x1xf32>
    %129 = vector.shape_cast %128 : vector<1x7x1xf32> to vector<7x1xf32>
    %130 = vector.broadcast %129 : vector<7x1xf32> to vector<7x32xf32>
    %131 = arith.mulf %127, %130 : vector<7x32xf32>
    %132 = arith.truncf %131 : vector<7x32xf32> to vector<7x32xbf16>
    %c0_89 = arith.constant 0 : index
    %c0_90 = arith.constant 0 : index
    %c0_91 = arith.constant 0 : index
    %133 = vector.load %arg12[%c0_89, %c0_90, %c0_91] : memref<1x7x32xbf16, #tpu.memory_space<vmem>>, vector<1x7x32xbf16>
    %134 = vector.shape_cast %133 : vector<1x7x32xbf16> to vector<7x32xbf16>
    %135 = vector.shape_cast %132 : vector<7x32xbf16> to vector<1x7x32xbf16>
    tpu.vector_store %arg12[%c0_89, %c0_90, %c0_91], %135 {strides = array<i32>} : memref<1x7x32xbf16, #tpu.memory_space<vmem>>, vector<1x7x32xbf16>,
    return
  }
  func.func @transform_0(%arg0: i32, %arg1: i32) -> (i32, i32, i32, i32) {
    %c0_i32 = arith.constant 0 : i32
    %c0_i32_0 = arith.constant 0 : i32
    %c0_i32_1 = arith.constant 0 : i32
    return %arg0, %c0_i32, %arg1, %c0_i32_0 : i32, i32, i32, i32
  }
  func.func @transform_1(%arg0: i32, %arg1: i32) -> (i32, i32, i32, i32) {
    %c0_i32 = arith.constant 0 : i32
    %c0_i32_0 = arith.constant 0 : i32
    %c0_i32_1 = arith.constant 0 : i32
    %c0_i32_2 = arith.constant 0 : i32
    return %arg0, %c0_i32, %c0_i32_0, %c0_i32_1 : i32, i32, i32, i32
  }
  func.func @transform_2(%arg0: i32, %arg1: i32) -> (i32, i32, i32, i32) {
    %c0_i32 = arith.constant 0 : i32
    %c0_i32_0 = arith.constant 0 : i32
    %c0_i32_1 = arith.constant 0 : i32
    %c0_i32_2 = arith.constant 0 : i32
    return %arg0, %c0_i32, %c0_i32_0, %c0_i32_1 : i32, i32, i32, i32
  }
  func.func @transform_3(%arg0: i32, %arg1: i32) -> (i32, i32, i32) {
    %c0_i32 = arith.constant 0 : i32
    %c0_i32_0 = arith.constant 0 : i32
    %c0_i32_1 = arith.constant 0 : i32
    return %arg0, %c0_i32, %c0_i32_0 : i32, i32, i32
  }
  func.func @transform_4(%arg0: i32, %arg1: i32) -> (i32, i32, i32) {
    %c0_i32 = arith.constant 0 : i32
    %c0_i32_0 = arith.constant 0 : i32
    return %arg0, %arg1, %c0_i32 : i32, i32, i32
  }
  func.func @transform_5(%arg0: i32, %arg1: i32) -> (i32, i32, i32) {
    %c0_i32 = arith.constant 0 : i32
    %c0_i32_0 = arith.constant 0 : i32
    return %arg0, %arg1, %c0_i32 : i32, i32, i32
  }
  func.func @transform_6(%arg0: i32, %arg1: i32) -> (i32, i32) {
    %c0_i32 = arith.constant 0 : i32
    %c0_i32_0 = arith.constant 0 : i32
    %c0_i32_1 = arith.constant 0 : i32
    return %c0_i32, %c0_i32_0 : i32, i32
  }
  func.func @transform_7(%arg0: i32, %arg1: i32) -> (i32, i32) {
    %c0_i32 = arith.constant 0 : i32
    %c0_i32_0 = arith.constant 0 : i32
    %c0_i32_1 = arith.constant 0 : i32
    return %c0_i32, %c0_i32_0 : i32, i32
  }
  func.func @transform_8(%arg0: i32, %arg1: i32) -> (i32, i32) {
    %c0_i32 = arith.constant 0 : i32
    %c0_i32_0 = arith.constant 0 : i32
    %c0_i32_1 = arith.constant 0 : i32
    return %c0_i32, %c0_i32_0 : i32, i32
  }
  func.func @transform_9(%arg0: i32, %arg1: i32) -> (i32, i32) {
    %c0_i32 = arith.constant 0 : i32
    %c0_i32_0 = arith.constant 0 : i32
    %c0_i32_1 = arith.constant 0 : i32
    return %c0_i32, %c0_i32_0 : i32, i32
  }
  func.func @transform_10(%arg0: i32, %arg1: i32) -> (i32, i32, i32) {
    %c0_i32 = arith.constant 0 : i32
    %c0_i32_0 = arith.constant 0 : i32
    return %arg0, %arg1, %c0_i32 : i32, i32, i32
  }
}

module attributes {stable_mosaic.version = 11 : i64} {
  func.func @_matmul_kernel(%arg0: i32, %arg1: i32, %arg2: i32, %arg3: memref<14x32xbf16, #tpu.memory_space<vmem>>, %arg4: memref<32x32xbf16, #tpu.memory_space<vmem>>, %arg5: memref<1x32xf32, #tpu.memory_space<vmem>>, %arg6: memref<14x32xbf16, #tpu.memory_space<vmem>>, %arg7: memref<14x32xf32, #tpu.memory_space<vmem>>) attributes {dimension_semantics = [#tpu.dimension_semantics<parallel>, #tpu.dimension_semantics<parallel>, #tpu.dimension_semantics<arbitrary>], iteration_bounds = array<i64: 1, 1, 1>, scalar_prefetch = 0 : i64, scratch_operands = 1 : i64, tpu.core_type = #tpu.core_type<tc>, window_params = [{transform_indices = @transform_0, window_bounds = array<i64: 14, 32>}, {transform_indices = @transform_1, window_bounds = array<i64: 32, 32>}, {transform_indices = @transform_2, window_bounds = array<i64: 1, 32>}, {transform_indices = @transform_3, window_bounds = array<i64: 14, 32>}]} {
    %c0_i32 = arith.constant 0 : i32
    %0 = arith.cmpi eq, %arg2, %c0_i32 : i32
    %1 = arith.extui %0 : i1 to i32
    %c0_i32_0 = arith.constant 0 : i32
    %2 = arith.cmpi ne, %1, %c0_i32_0 : i32
    scf.if %2 {
      %cst_10 = arith.constant 0.000000e+00 : f32
      %12 = vector.broadcast %cst_10 : f32 to vector<14x32xf32>
      %c0_11 = arith.constant 0 : index
      %c0_12 = arith.constant 0 : index
      %13 = vector.load %arg7[%c0_11, %c0_12] : memref<14x32xf32, #tpu.memory_space<vmem>>, vector<14x32xf32>
      tpu.vector_store %arg7[%c0_11, %c0_12], %12 {strides = array<i32>} : memref<14x32xf32, #tpu.memory_space<vmem>>, vector<14x32xf32>,
    } else {
    }
    %c0 = arith.constant 0 : index
    %c0_1 = arith.constant 0 : index
    %3 = vector.load %arg7[%c0, %c0_1] : memref<14x32xf32, #tpu.memory_space<vmem>>, vector<14x32xf32>
    %c0_2 = arith.constant 0 : index
    %c0_3 = arith.constant 0 : index
    %4 = vector.load %arg3[%c0_2, %c0_3] : memref<14x32xbf16, #tpu.memory_space<vmem>>, vector<14x32xbf16>
    %c0_4 = arith.constant 0 : index
    %c0_5 = arith.constant 0 : index
    %5 = vector.load %arg4[%c0_4, %c0_5] : memref<32x32xbf16, #tpu.memory_space<vmem>>, vector<32x32xbf16>
    %cst = arith.constant dense<0.000000e+00> : vector<14x32xf32>
    %6 = tpu.matmul %4, %5, %cst {dimension_numbers = #tpu.dot_dimension_numbers<[1], [0], [0], [1], [0, 0, 1, 1], [], []>} : vector<14x32xbf16>, vector<32x32xbf16>, vector<14x32xf32> -> vector<14x32xf32>
    %7 = arith.addf %3, %6 : vector<14x32xf32>
    %c0_6 = arith.constant 0 : index
    %c0_7 = arith.constant 0 : index
    %8 = vector.load %arg7[%c0_6, %c0_7] : memref<14x32xf32, #tpu.memory_space<vmem>>, vector<14x32xf32>
    tpu.vector_store %arg7[%c0_6, %c0_7], %7 {strides = array<i32>} : memref<14x32xf32, #tpu.memory_space<vmem>>, vector<14x32xf32>,
    %c0_i32_8 = arith.constant 0 : i32
    %9 = arith.cmpi eq, %arg2, %c0_i32_8 : i32
    %10 = arith.extui %9 : i1 to i32
    %c0_i32_9 = arith.constant 0 : i32
    %11 = arith.cmpi ne, %10, %c0_i32_9 : i32
    scf.if %11 {
      %c0_10 = arith.constant 0 : index
      %c0_11 = arith.constant 0 : index
      %12 = vector.load %arg7[%c0_10, %c0_11] : memref<14x32xf32, #tpu.memory_space<vmem>>, vector<14x32xf32>
      %c0_12 = arith.constant 0 : index
      %c0_13 = arith.constant 0 : index
      %13 = vector.load %arg5[%c0_12, %c0_13] : memref<1x32xf32, #tpu.memory_space<vmem>>, vector<1x32xf32>
      %14 = vector.broadcast %13 : vector<1x32xf32> to vector<14x32xf32>
      %15 = arith.addf %12, %14 : vector<14x32xf32>
      %16 = arith.truncf %15 : vector<14x32xf32> to vector<14x32xbf16>
      %c0_14 = arith.constant 0 : index
      %c0_15 = arith.constant 0 : index
      %17 = vector.load %arg6[%c0_14, %c0_15] : memref<14x32xbf16, #tpu.memory_space<vmem>>, vector<14x32xbf16>
      tpu.vector_store %arg6[%c0_14, %c0_15], %16 {strides = array<i32>} : memref<14x32xbf16, #tpu.memory_space<vmem>>, vector<14x32xbf16>,
    } else {
    }
    return
  }
  func.func @transform_0(%arg0: i32, %arg1: i32, %arg2: i32) -> (i32, i32) {
    %c0_i32 = arith.constant 0 : i32
    return %arg0, %arg2 : i32, i32
  }
  func.func @transform_1(%arg0: i32, %arg1: i32, %arg2: i32) -> (i32, i32) {
    %c0_i32 = arith.constant 0 : i32
    return %arg2, %arg1 : i32, i32
  }
  func.func @transform_2(%arg0: i32, %arg1: i32, %arg2: i32) -> (i32, i32) {
    %c0_i32 = arith.constant 0 : i32
    %c0_i32_0 = arith.constant 0 : i32
    return %c0_i32, %arg1 : i32, i32
  }
  func.func @transform_3(%arg0: i32, %arg1: i32, %arg2: i32) -> (i32, i32) {
    %c0_i32 = arith.constant 0 : i32
    return %arg0, %arg1 : i32, i32
  }
}

module attributes {stable_mosaic.version = 11 : i64} {
  func.func @_ffn_kernel(%arg0: i32, %arg1: memref<14x32xbf16, #tpu.memory_space<vmem>>, %arg2: memref<32x64xbf16, #tpu.memory_space<vmem>>, %arg3: memref<1x64xf32, #tpu.memory_space<vmem>>, %arg4: memref<64x32xbf16, #tpu.memory_space<vmem>>, %arg5: memref<1x32xf32, #tpu.memory_space<vmem>>, %arg6: memref<1x32xf32, #tpu.memory_space<vmem>>, %arg7: memref<1x32xf32, #tpu.memory_space<vmem>>, %arg8: memref<14x1xf32, #tpu.memory_space<vmem>>, %arg9: memref<14x32xbf16, #tpu.memory_space<vmem>>) attributes {dimension_semantics = [#tpu.dimension_semantics<parallel>], iteration_bounds = array<i64: 1>, scalar_prefetch = 0 : i64, scratch_operands = 0 : i64, tpu.core_type = #tpu.core_type<tc>, window_params = [{transform_indices = @transform_0, window_bounds = array<i64: 14, 32>}, {pipeline_mode = #tpu.pipeline_mode<synchronous>, transform_indices = @transform_1, window_bounds = array<i64: 32, 64>}, {pipeline_mode = #tpu.pipeline_mode<synchronous>, transform_indices = @transform_2, window_bounds = array<i64: 1, 64>}, {pipeline_mode = #tpu.pipeline_mode<synchronous>, transform_indices = @transform_3, window_bounds = array<i64: 64, 32>}, {pipeline_mode = #tpu.pipeline_mode<synchronous>, transform_indices = @transform_4, window_bounds = array<i64: 1, 32>}, {pipeline_mode = #tpu.pipeline_mode<synchronous>, transform_indices = @transform_5, window_bounds = array<i64: 1, 32>}, {pipeline_mode = #tpu.pipeline_mode<synchronous>, transform_indices = @transform_6, window_bounds = array<i64: 1, 32>}, {transform_indices = @transform_7, window_bounds = array<i64: 14, 1>}, {transform_indices = @transform_8, window_bounds = array<i64: 14, 32>}]} {
    %c0 = arith.constant 0 : index
    %c0_0 = arith.constant 0 : index
    %0 = vector.load %arg1[%c0, %c0_0] : memref<14x32xbf16, #tpu.memory_space<vmem>>, vector<14x32xbf16>
    %c0_1 = arith.constant 0 : index
    %c0_2 = arith.constant 0 : index
    %1 = vector.load %arg2[%c0_1, %c0_2] : memref<32x64xbf16, #tpu.memory_space<vmem>>, vector<32x64xbf16>
    %cst = arith.constant dense<0.000000e+00> : vector<14x64xf32>
    %2 = tpu.matmul %0, %1, %cst {dimension_numbers = #tpu.dot_dimension_numbers<[1], [0], [0], [1], [0, 0, 1, 1], [], []>} : vector<14x32xbf16>, vector<32x64xbf16>, vector<14x64xf32> -> vector<14x64xf32>
    %c0_3 = arith.constant 0 : index
    %c0_4 = arith.constant 0 : index
    %3 = vector.load %arg3[%c0_3, %c0_4] : memref<1x64xf32, #tpu.memory_space<vmem>>, vector<1x64xf32>
    %4 = vector.broadcast %3 : vector<1x64xf32> to vector<14x64xf32>
    %5 = arith.addf %2, %4 : vector<14x64xf32>
    %cst_5 = arith.constant 0.000000e+00 : f32
    %6 = vector.broadcast %cst_5 : f32 to vector<14x64xf32>
    %7 = arith.maximumf %5, %6 : vector<14x64xf32>
    %8 = arith.truncf %7 : vector<14x64xf32> to vector<14x64xbf16>
    %c0_6 = arith.constant 0 : index
    %c0_7 = arith.constant 0 : index
    %9 = vector.load %arg4[%c0_6, %c0_7] : memref<64x32xbf16, #tpu.memory_space<vmem>>, vector<64x32xbf16>
    %cst_8 = arith.constant dense<0.000000e+00> : vector<14x32xf32>
    %10 = tpu.matmul %8, %9, %cst_8 {dimension_numbers = #tpu.dot_dimension_numbers<[1], [0], [0], [1], [0, 0, 1, 1], [], []>} : vector<14x64xbf16>, vector<64x32xbf16>, vector<14x32xf32> -> vector<14x32xf32>
    %c0_9 = arith.constant 0 : index
    %c0_10 = arith.constant 0 : index
    %11 = vector.load %arg5[%c0_9, %c0_10] : memref<1x32xf32, #tpu.memory_space<vmem>>, vector<1x32xf32>
    %12 = vector.broadcast %11 : vector<1x32xf32> to vector<14x32xf32>
    %13 = arith.addf %10, %12 : vector<14x32xf32>
    %14 = arith.extf %0 : vector<14x32xbf16> to vector<14x32xf32>
    %15 = arith.addf %13, %14 : vector<14x32xf32>
    %cst_11 = arith.constant dense<0.000000e+00> : vector<14xf32>
    %16 = vector.multi_reduction <add>, %15, %cst_11 [1] : vector<14x32xf32> to vector<14xf32>
    %17 = vector.shape_cast %16 : vector<14xf32> to vector<14x1xf32>
    %cst_12 = arith.constant 3.200000e+01 : f32
    %18 = vector.broadcast %cst_12 : f32 to vector<14x1xf32>
    %19 = arith.divf %17, %18 : vector<14x1xf32>
    %20 = vector.broadcast %19 : vector<14x1xf32> to vector<14x32xf32>
    %21 = arith.subf %15, %20 : vector<14x32xf32>
    %22 = arith.mulf %21, %21 : vector<14x32xf32>
    %cst_13 = arith.constant dense<0.000000e+00> : vector<14xf32>
    %23 = vector.multi_reduction <add>, %22, %cst_13 [1] : vector<14x32xf32> to vector<14xf32>
    %24 = vector.shape_cast %23 : vector<14xf32> to vector<14x1xf32>
    %cst_14 = arith.constant 3.200000e+01 : f32
    %25 = vector.broadcast %cst_14 : f32 to vector<14x1xf32>
    %26 = arith.divf %24, %25 : vector<14x1xf32>
    %27 = vector.broadcast %19 : vector<14x1xf32> to vector<14x32xf32>
    %28 = arith.subf %15, %27 : vector<14x32xf32>
    %cst_15 = arith.constant 9.99999974E-6 : f32
    %29 = vector.broadcast %cst_15 : f32 to vector<14x1xf32>
    %30 = arith.addf %26, %29 : vector<14x1xf32>
    %31 = math.rsqrt %30 : vector<14x1xf32>
    %32 = vector.broadcast %31 : vector<14x1xf32> to vector<14x32xf32>
    %33 = arith.mulf %28, %32 : vector<14x32xf32>
    %c0_16 = arith.constant 0 : index
    %c0_17 = arith.constant 0 : index
    %34 = vector.load %arg6[%c0_16, %c0_17] : memref<1x32xf32, #tpu.memory_space<vmem>>, vector<1x32xf32>
    %35 = vector.broadcast %34 : vector<1x32xf32> to vector<14x32xf32>
    %36 = arith.mulf %33, %35 : vector<14x32xf32>
    %c0_18 = arith.constant 0 : index
    %c0_19 = arith.constant 0 : index
    %37 = vector.load %arg7[%c0_18, %c0_19] : memref<1x32xf32, #tpu.memory_space<vmem>>, vector<1x32xf32>
    %38 = vector.broadcast %37 : vector<1x32xf32> to vector<14x32xf32>
    %39 = arith.addf %36, %38 : vector<14x32xf32>
    %c0_20 = arith.constant 0 : index
    %c0_21 = arith.constant 0 : index
    %40 = vector.load %arg8[%c0_20, %c0_21] : memref<14x1xf32, #tpu.memory_space<vmem>>, vector<14x1xf32>
    %41 = vector.broadcast %40 : vector<14x1xf32> to vector<14x32xf32>
    %42 = arith.mulf %39, %41 : vector<14x32xf32>
    %43 = arith.truncf %42 : vector<14x32xf32> to vector<14x32xbf16>
    %c0_22 = arith.constant 0 : index
    %c0_23 = arith.constant 0 : index
    %44 = vector.load %arg9[%c0_22, %c0_23] : memref<14x32xbf16, #tpu.memory_space<vmem>>, vector<14x32xbf16>
    tpu.vector_store %arg9[%c0_22, %c0_23], %43 {strides = array<i32>} : memref<14x32xbf16, #tpu.memory_space<vmem>>, vector<14x32xbf16>,
    return
  }
  func.func @transform_0(%arg0: i32) -> (i32, i32) {
    %c0_i32 = arith.constant 0 : i32
    %c0_i32_0 = arith.constant 0 : i32
    return %arg0, %c0_i32 : i32, i32
  }
  func.func @transform_1(%arg0: i32) -> (i32, i32) {
    %c0_i32 = arith.constant 0 : i32
    %c0_i32_0 = arith.constant 0 : i32
    %c0_i32_1 = arith.constant 0 : i32
    return %c0_i32, %c0_i32_0 : i32, i32
  }
  func.func @transform_2(%arg0: i32) -> (i32, i32) {
    %c0_i32 = arith.constant 0 : i32
    %c0_i32_0 = arith.constant 0 : i32
    %c0_i32_1 = arith.constant 0 : i32
    return %c0_i32, %c0_i32_0 : i32, i32
  }
  func.func @transform_3(%arg0: i32) -> (i32, i32) {
    %c0_i32 = arith.constant 0 : i32
    %c0_i32_0 = arith.constant 0 : i32
    %c0_i32_1 = arith.constant 0 : i32
    return %c0_i32, %c0_i32_0 : i32, i32
  }
  func.func @transform_4(%arg0: i32) -> (i32, i32) {
    %c0_i32 = arith.constant 0 : i32
    %c0_i32_0 = arith.constant 0 : i32
    %c0_i32_1 = arith.constant 0 : i32
    return %c0_i32, %c0_i32_0 : i32, i32
  }
  func.func @transform_5(%arg0: i32) -> (i32, i32) {
    %c0_i32 = arith.constant 0 : i32
    %c0_i32_0 = arith.constant 0 : i32
    %c0_i32_1 = arith.constant 0 : i32
    return %c0_i32, %c0_i32_0 : i32, i32
  }
  func.func @transform_6(%arg0: i32) -> (i32, i32) {
    %c0_i32 = arith.constant 0 : i32
    %c0_i32_0 = arith.constant 0 : i32
    %c0_i32_1 = arith.constant 0 : i32
    return %c0_i32, %c0_i32_0 : i32, i32
  }
  func.func @transform_7(%arg0: i32) -> (i32, i32) {
    %c0_i32 = arith.constant 0 : i32
    %c0_i32_0 = arith.constant 0 : i32
    return %arg0, %c0_i32 : i32, i32
  }
  func.func @transform_8(%arg0: i32) -> (i32, i32) {
    %c0_i32 = arith.constant 0 : i32
    %c0_i32_0 = arith.constant 0 : i32
    return %arg0, %c0_i32 : i32, i32
  }
}

module attributes {stable_mosaic.version = 11 : i64} {
  func.func @_matmul_kernel(%arg0: i32, %arg1: i32, %arg2: i32, %arg3: memref<14x32xbf16, #tpu.memory_space<vmem>>, %arg4: memref<32x128xbf16, #tpu.memory_space<vmem>>, %arg5: memref<1x128xf32, #tpu.memory_space<vmem>>, %arg6: memref<14x128xf32, #tpu.memory_space<vmem>>, %arg7: memref<14x128xf32, #tpu.memory_space<vmem>>) attributes {dimension_semantics = [#tpu.dimension_semantics<parallel>, #tpu.dimension_semantics<parallel>, #tpu.dimension_semantics<arbitrary>], iteration_bounds = array<i64: 1, 1, 1>, scalar_prefetch = 0 : i64, scratch_operands = 1 : i64, tpu.core_type = #tpu.core_type<tc>, window_params = [{transform_indices = @transform_0, window_bounds = array<i64: 14, 32>}, {transform_indices = @transform_1, window_bounds = array<i64: 32, 128>}, {transform_indices = @transform_2, window_bounds = array<i64: 1, 128>}, {transform_indices = @transform_3, window_bounds = array<i64: 14, 128>}]} {
    %c0_i32 = arith.constant 0 : i32
    %0 = arith.cmpi eq, %arg2, %c0_i32 : i32
    %1 = arith.extui %0 : i1 to i32
    %c0_i32_0 = arith.constant 0 : i32
    %2 = arith.cmpi ne, %1, %c0_i32_0 : i32
    scf.if %2 {
      %cst_10 = arith.constant 0.000000e+00 : f32
      %12 = vector.broadcast %cst_10 : f32 to vector<14x128xf32>
      %c0_11 = arith.constant 0 : index
      %c0_12 = arith.constant 0 : index
      %13 = vector.load %arg7[%c0_11, %c0_12] : memref<14x128xf32, #tpu.memory_space<vmem>>, vector<14x128xf32>
      tpu.vector_store %arg7[%c0_11, %c0_12], %12 {strides = array<i32>} : memref<14x128xf32, #tpu.memory_space<vmem>>, vector<14x128xf32>,
    } else {
    }
    %c0 = arith.constant 0 : index
    %c0_1 = arith.constant 0 : index
    %3 = vector.load %arg7[%c0, %c0_1] : memref<14x128xf32, #tpu.memory_space<vmem>>, vector<14x128xf32>
    %c0_2 = arith.constant 0 : index
    %c0_3 = arith.constant 0 : index
    %4 = vector.load %arg3[%c0_2, %c0_3] : memref<14x32xbf16, #tpu.memory_space<vmem>>, vector<14x32xbf16>
    %c0_4 = arith.constant 0 : index
    %c0_5 = arith.constant 0 : index
    %5 = vector.load %arg4[%c0_4, %c0_5] : memref<32x128xbf16, #tpu.memory_space<vmem>>, vector<32x128xbf16>
    %cst = arith.constant dense<0.000000e+00> : vector<14x128xf32>
    %6 = tpu.matmul %4, %5, %cst {dimension_numbers = #tpu.dot_dimension_numbers<[1], [0], [0], [1], [0, 0, 1, 1], [], []>} : vector<14x32xbf16>, vector<32x128xbf16>, vector<14x128xf32> -> vector<14x128xf32>
    %7 = arith.addf %3, %6 : vector<14x128xf32>
    %c0_6 = arith.constant 0 : index
    %c0_7 = arith.constant 0 : index
    %8 = vector.load %arg7[%c0_6, %c0_7] : memref<14x128xf32, #tpu.memory_space<vmem>>, vector<14x128xf32>
    tpu.vector_store %arg7[%c0_6, %c0_7], %7 {strides = array<i32>} : memref<14x128xf32, #tpu.memory_space<vmem>>, vector<14x128xf32>,
    %c0_i32_8 = arith.constant 0 : i32
    %9 = arith.cmpi eq, %arg2, %c0_i32_8 : i32
    %10 = arith.extui %9 : i1 to i32
    %c0_i32_9 = arith.constant 0 : i32
    %11 = arith.cmpi ne, %10, %c0_i32_9 : i32
    scf.if %11 {
      %c0_10 = arith.constant 0 : index
      %c0_11 = arith.constant 0 : index
      %12 = vector.load %arg7[%c0_10, %c0_11] : memref<14x128xf32, #tpu.memory_space<vmem>>, vector<14x128xf32>
      %c0_12 = arith.constant 0 : index
      %c0_13 = arith.constant 0 : index
      %13 = vector.load %arg5[%c0_12, %c0_13] : memref<1x128xf32, #tpu.memory_space<vmem>>, vector<1x128xf32>
      %14 = vector.broadcast %13 : vector<1x128xf32> to vector<14x128xf32>
      %15 = arith.addf %12, %14 : vector<14x128xf32>
      %cst_14 = arith.constant 0.176776692 : f32
      %16 = vector.broadcast %cst_14 : f32 to vector<14x128xf32>
      %17 = arith.mulf %15, %16 : vector<14x128xf32>
      %c0_15 = arith.constant 0 : index
      %c0_16 = arith.constant 0 : index
      %18 = vector.load %arg6[%c0_15, %c0_16] : memref<14x128xf32, #tpu.memory_space<vmem>>, vector<14x128xf32>
      tpu.vector_store %arg6[%c0_15, %c0_16], %17 {strides = array<i32>} : memref<14x128xf32, #tpu.memory_space<vmem>>, vector<14x128xf32>,
    } else {
    }
    return
  }
  func.func @transform_0(%arg0: i32, %arg1: i32, %arg2: i32) -> (i32, i32) {
    %c0_i32 = arith.constant 0 : i32
    return %arg0, %arg2 : i32, i32
  }
  func.func @transform_1(%arg0: i32, %arg1: i32, %arg2: i32) -> (i32, i32) {
    %c0_i32 = arith.constant 0 : i32
    return %arg2, %arg1 : i32, i32
  }
  func.func @transform_2(%arg0: i32, %arg1: i32, %arg2: i32) -> (i32, i32) {
    %c0_i32 = arith.constant 0 : i32
    %c0_i32_0 = arith.constant 0 : i32
    return %c0_i32, %arg1 : i32, i32
  }
  func.func @transform_3(%arg0: i32, %arg1: i32, %arg2: i32) -> (i32, i32) {
    %c0_i32 = arith.constant 0 : i32
    return %arg0, %arg1 : i32, i32
  }
}

</mosaic_0001>

<llo_original>
// kernel: _lambda_.28
$region0: #{_lambda_.28}
  #allocation0 [shape = 'u32[]', space=smem, size = 0x4, offset = 0x4, fixed_abs, tag = 'smem constant byte address 0x4 - core index']
  #allocation1 [shape = 'u32[72,128]{1,0:T(1,128)}', space=vmem, size = 0x9000, scoped, tag = 'internal scratch']
  #allocation2 [shape = 'f32[16,64]{1,0:T(8,128)}', space=vmem, size = 0x2000, scoped, tag = 'scratch operand']
  %s0 = inlined_call_operand.vmem [shape: bf16[16,32], index: 0, kind: input, shape index: {}]
  %s1 = inlined_call_operand.vmem [shape: bf16[32,64], index: 1, kind: input, shape index: {}]
  %s2 = inlined_call_operand.vmem [shape: f32[1,64], index: 2, kind: input, shape index: {}]
  %s3 = inlined_call_operand.vmem [shape: bf16[16,64], index: 3, kind: output, shape index: {}]
  %s4 = sld [smem:[#allocation0]]
  $region30: #{_lambda_.28} parent=0
    _
  %s6 = ssub.s32 1, %s4
  %s7 = scalar_select 0, %s6, %s4
  // Predicated region
  $region2: #{_lambda_.28} parent=0 // pred_check
    _
  $region3: #{_lambda_.28} parent=0 // pred_check_branch
    %9 = sbr.rel (0) target = $region5
  $region4: #{_lambda_.28} parent=0 // pred_region
    _
  $region5: #{_lambda_.28} parent=0 // pred_fallthru
    _
  // Predicated region
  $region6: #{_lambda_.28} parent=0 // pred_check
    _
  $region7: #{_lambda_.28} parent=0 // pred_check_branch
    %11 = sbr.rel (0) target = $region9
  $region8: #{_lambda_.28} parent=0 // pred_region
    _
  $region9: #{_lambda_.28} parent=0 // pred_fallthru
    _
  // Predicated region
  $region10: #{_lambda_.28} parent=0 // pred_check
    _
  $region11: #{_lambda_.28} parent=0 // pred_check_branch
    %13 = sbr.rel (0) target = $region13
  $region12: #{_lambda_.28} parent=0 // pred_region
    _
  $region13: #{_lambda_.28} parent=0 // pred_fallthru
    _
  %p15 = scmp.eq.s32.totalorder 0, 0
  // Predicated region
  $region14: #{_lambda_.28} parent=0 // pred_check
    %p16 = pneg %p15
  $region15: #{_lambda_.28} parent=0 // pred_check_branch
    %18 = sbr.rel (%p16) target = $region17
  $region16: #{_lambda_.28} parent=0 // pred_region
    %vm19 = vcmask 523264
    %20 = vst.msk [vmem:[#allocation2] sm:$0xff] %vm19, 0.0
    %21 = vst.msk [vmem:[#allocation2 + $0x8] sm:$0xff] %vm19, 0.0
  $region17: #{_lambda_.28} parent=0 // pred_fallthru
    _
  %v22 = vld [vmem:[#allocation2] sm:$0xff]
  %v23 = vld [vmem:[#allocation2 + $0x8] sm:$0xff]
  %v24 = vld [vmem:[%s0] sm:$0xf]
  %v25 = vld [vmem:[%s0 + $0x4] sm:$0xf]
  %v26 = vld [vmem:[%s1] sm:$0xf]
  %v27 = vld [vmem:[%s1 + $0x4] sm:$0xf]
  %v28 = vld [vmem:[%s1 + $0x8] sm:$0xf]
  %v29 = vld [vmem:[%s1 + $0xc] sm:$0xf]
  %v32 = vunpack.c.l.b16 %v24
  %v33 = vunpack.c.l.b16 %v25
  %v34 = vpack.c.b16 %v33, %v32
  %v39 = vunpack.c.l.b16 %v26
  %v40 = vunpack.c.l.b16 %v27
  %v41 = vunpack.c.l.b16 %v28
  %v42 = vunpack.c.l.b16 %v29
  %v43 = vpack.c.b16 %v40, %v39
  %v44 = vpack.c.b16 %v42, %v41
  %vm47 = vcmask 261120
  %v49 = vsel %vm47, %v34, 0
  %51 = vmatpush.bf16.msra.mxu0 0
  %52 = vmatpush.bf16.msra.mxu0 0
  %53 = vmatpush.bf16.msra.mxu0 0
  %54 = vmatpush.bf16.msra.mxu0 0
  %55 = vmatpush.bf16.msra.mxu0 0
  %56 = vmatpush.bf16.msra.mxu0 0
  %57 = vmatpush.bf16.msra.mxu0 %v44
  %58 = vmatpush.bf16.msra.mxu0 %v43
  %59 = vmatmul.bf16.gmra.mxu0 %v49
  %v60 = vpop.f32.mrf.mxu0
  %v61 = vadd.f32 0.0, %v60
  %v62 = vpop.f32.mrf.mxu0
  %v63 = vadd.f32 0.0, %v62
  %64 = vdwg.mxu0
  %v65 = vadd.f32 %v22, %v61
  %v66 = vadd.f32 %v23, %v63
  %vm67 = vcmask 523264
  %68 = vst.msk [vmem:[#allocation2] sm:$0xff] %vm67, %v65
  %69 = vst.msk [vmem:[#allocation2 + $0x8] sm:$0xff] %vm67, %v66
  // Predicated region
  $region18: #{_lambda_.28} parent=0 // pred_check
    %p70 = pneg %p15
  $region19: #{_lambda_.28} parent=0 // pred_check_branch
    %72 = sbr.rel (%p70) target = $region21
  $region20: #{_lambda_.28} parent=0 // pred_region
    %v73 = vld [vmem:[#allocation2] sm:$0xff]
    %v74 = vld [vmem:[#allocation2 + $0x8] sm:$0xff]
    %v75 = vld [vmem:[%s2] sm:$0x1]
    %v77 = vperm.slane %v75, 0
    %v79 = vadd.f32 %v73, %v77
    %v80 = vadd.f32 %v74, %v77
    %v81 = vpack.c.bf16 %v79, %v79
    %v82 = vpack.c.bf16 %v80, %v80
    %vm83 = vcmask 519168
    %84 = vst.msk [vmem:[%s3] sm:$0xf] %vm83, %v81
    %85 = vst.msk [vmem:[%s3 + $0x4] sm:$0xf] %vm83, %v82
  $region21: #{_lambda_.28} parent=0 // pred_fallthru
    _
  // Predicated region
  $region22: #{_lambda_.28} parent=0 // pred_check
    _
  $region23: #{_lambda_.28} parent=0 // pred_check_branch
    %87 = sbr.rel (0) target = $region25
  $region24: #{_lambda_.28} parent=0 // pred_region
    _
  $region25: #{_lambda_.28} parent=0 // pred_fallthru
    _
  // Predicated region
  $region26: #{_lambda_.28} parent=0 // pred_check
    _
  $region27: #{_lambda_.28} parent=0 // pred_check_branch
    %89 = sbr.rel (0) target = $region29
  $region28: #{_lambda_.28} parent=0 // pred_region
    _
  $region29: #{_lambda_.28} parent=0 // pred_fallthru
    _

// kernel: _lambda_.21
$region0: #{_lambda_.21}
  #allocation0 [shape = 'u32[]', space=smem, size = 0x4, offset = 0x4, fixed_abs, tag = 'smem constant byte address 0x4 - core index']
  #allocation1 [shape = 'u32[72,128]{1,0:T(1,128)}', space=vmem, size = 0x9000, scoped, tag = 'internal scratch']
  %s0 = inlined_call_operand.vmem [shape: bf16[16,32], index: 0, kind: input, shape index: {}]
  %s1 = inlined_call_operand.vmem [shape: bf16[32,64], index: 1, kind: input, shape index: {}]
  %s2 = inlined_call_operand.vmem [shape: f32[1,64], index: 2, kind: input, shape index: {}]
  %s3 = inlined_call_operand.vmem [shape: bf16[64,32], index: 3, kind: input, shape index: {}]
  %s4 = inlined_call_operand.vmem [shape: f32[1,32], index: 4, kind: input, shape index: {}, may-alias: {4,6}]
  %s5 = inlined_call_operand.vmem [shape: f32[1,32], index: 5, kind: input, shape index: {}]
  %s6 = inlined_call_operand.vmem [shape: f32[1,32], index: 6, kind: input, shape index: {}, may-alias: {4,6}]
  %s7 = inlined_call_operand.vmem [shape: f32[16,1], index: 7, kind: input, shape index: {}]
  %s8 = inlined_call_operand.vmem [shape: bf16[16,32], index: 8, kind: output, shape index: {}]
  %s9 = sld [smem:[#allocation0]]
  $region42: #{_lambda_.21} parent=0
    _
  %s11 = ssub.s32 1, %s9
  %s12 = scalar_select 0, %s11, %s9
  // Predicated region
  $region2: #{_lambda_.21} parent=0 // pred_check
    _
  $region3: #{_lambda_.21} parent=0 // pred_check_branch
    %14 = sbr.rel (0) target = $region5
  $region4: #{_lambda_.21} parent=0 // pred_region
    _
  $region5: #{_lambda_.21} parent=0 // pred_fallthru
    _
  // Predicated region
  $region6: #{_lambda_.21} parent=0 // pred_check
    _
  $region7: #{_lambda_.21} parent=0 // pred_check_branch
    %16 = sbr.rel (0) target = $region9
  $region8: #{_lambda_.21} parent=0 // pred_region
    _
  $region9: #{_lambda_.21} parent=0 // pred_fallthru
    _
  // Predicated region
  $region10: #{_lambda_.21} parent=0 // pred_check
    _
  $region11: #{_lambda_.21} parent=0 // pred_check_branch
    %18 = sbr.rel (0) target = $region13
  $region12: #{_lambda_.21} parent=0 // pred_region
    _
  $region13: #{_lambda_.21} parent=0 // pred_fallthru
    _
  // Predicated region
  $region14: #{_lambda_.21} parent=0 // pred_check
    _
  $region15: #{_lambda_.21} parent=0 // pred_check_branch
    %20 = sbr.rel (0) target = $region17
  $region16: #{_lambda_.21} parent=0 // pred_region
    _
  $region17: #{_lambda_.21} parent=0 // pred_fallthru
    _
  // Predicated region
  $region18: #{_lambda_.21} parent=0 // pred_check
    _
  $region19: #{_lambda_.21} parent=0 // pred_check_branch
    %22 = sbr.rel (0) target = $region21
  $region20: #{_lambda_.21} parent=0 // pred_region
    _
  $region21: #{_lambda_.21} parent=0 // pred_fallthru
    _
  // Predicated region
  $region22: #{_lambda_.21} parent=0 // pred_check
    _
  $region23: #{_lambda_.21} parent=0 // pred_check_branch
    %24 = sbr.rel (0) target = $region25
  $region24: #{_lambda_.21} parent=0 // pred_region
    _
  $region25: #{_lambda_.21} parent=0 // pred_fallthru
    _
  // Predicated region
  $region26: #{_lambda_.21} parent=0 // pred_check
    _
  $region27: #{_lambda_.21} parent=0 // pred_check_branch
    %26 = sbr.rel (0) target = $region29
  $region28: #{_lambda_.21} parent=0 // pred_region
    _
  $region29: #{_lambda_.21} parent=0 // pred_fallthru
    _
  // Predicated region
  $region30: #{_lambda_.21} parent=0 // pred_check
    _
  $region31: #{_lambda_.21} parent=0 // pred_check_branch
    %28 = sbr.rel (0) target = $region33
  $region32: #{_lambda_.21} parent=0 // pred_region
    _
  $region33: #{_lambda_.21} parent=0 // pred_fallthru
    _
  %v30 = vld [vmem:[%s0] sm:$0xf]
  %v31 = vld [vmem:[%s0 + $0x4] sm:$0xf]
  %v32 = vld [vmem:[%s1] sm:$0xf]
  %v33 = vld [vmem:[%s1 + $0x4] sm:$0xf]
  %v34 = vld [vmem:[%s1 + $0x8] sm:$0xf]
  %v35 = vld [vmem:[%s1 + $0xc] sm:$0xf]
  %v36 = vld [vmem:[%s2] sm:$0x1]
  %v38 = vperm.slane %v36, 0
  %v42 = vunpack.c.l.b16 %v30
  %v43 = vunpack.c.l.b16 %v31
  %v44 = vpack.c.b16 %v43, %v42
  %v49 = vunpack.c.l.b16 %v32
  %v50 = vunpack.c.l.b16 %v33
  %v51 = vunpack.c.l.b16 %v34
  %v52 = vunpack.c.l.b16 %v35
  %v53 = vpack.c.b16 %v50, %v49
  %v54 = vpack.c.b16 %v52, %v51
  %vm57 = vcmask 261120
  %v59 = vsel %vm57, %v44, 0
  %61 = vmatpush.bf16.msra.mxu0 0
  %62 = vmatpush.bf16.msra.mxu0 0
  %63 = vmatpush.bf16.msra.mxu0 0
  %64 = vmatpush.bf16.msra.mxu0 0
  %65 = vmatpush.bf16.msra.mxu0 0
  %66 = vmatpush.bf16.msra.mxu0 0
  %67 = vmatpush.bf16.msra.mxu0 %v54
  %68 = vmatpush.bf16.msra.mxu0 %v53
  %69 = vmatmul.bf16.gmra.mxu0 %v59
  %v70 = vpop.f32.mrf.mxu0
  %v71 = vadd.f32 %v38, %v70
  %v72 = vpop.f32.mrf.mxu0
  %v73 = vadd.f32 %v38, %v72
  %74 = vdwg.mxu0
  %v75 = vmax.f32 %v71, 0.0
  %v76 = vmax.f32 %v73, 0.0
  %v77 = vpack.c.bf16 %v76, %v75
  %v78 = vld [vmem:[%s3] sm:$0xf]
  %v79 = vld [vmem:[%s3 + $0x4] sm:$0xf]
  %v80 = vld [vmem:[%s3 + $0x8] sm:$0xf]
  %v81 = vld [vmem:[%s3 + $0xc] sm:$0xf]
  %v82 = vld [vmem:[%s3 + $0x10] sm:$0xf]
  %v83 = vld [vmem:[%s3 + $0x14] sm:$0xf]
  %v84 = vld [vmem:[%s3 + $0x18] sm:$0xf]
  %v85 = vld [vmem:[%s3 + $0x1c] sm:$0xf]
  %v86 = vld [vmem:[%s4] sm:$0x1]
  %v88 = vperm.slane %v86, 0
  %v98 = vunpack.c.l.b16 %v78
  %v99 = vunpack.c.l.b16 %v79
  %v100 = vunpack.c.l.b16 %v80
  %v101 = vunpack.c.l.b16 %v81
  %v102 = vunpack.c.l.b16 %v82
  %v103 = vunpack.c.l.b16 %v83
  %v104 = vunpack.c.l.b16 %v84
  %v105 = vunpack.c.l.b16 %v85
  %v106 = vpack.c.b16 %v99, %v98
  %v107 = vpack.c.b16 %v101, %v100
  %v108 = vpack.c.b16 %v103, %v102
  %v109 = vpack.c.b16 %v105, %v104
  %vm114 = vcmask 523264
  %v116 = vsel %vm114, %v77, 0
  %118 = vmatpush.bf16.msra.mxu0 0
  %119 = vmatpush.bf16.msra.mxu0 0
  %120 = vmatpush.bf16.msra.mxu0 0
  %121 = vmatpush.bf16.msra.mxu0 0
  %122 = vmatpush.bf16.msra.mxu0 %v109
  %123 = vmatpush.bf16.msra.mxu0 %v108
  %124 = vmatpush.bf16.msra.mxu0 %v107
  %125 = vmatpush.bf16.msra.mxu0 %v106
  %126 = vmatmul.bf16.gmra.mxu0 %v116
  %v127 = vpop.f32.mrf.mxu0
  %v128 = vadd.f32 %v88, %v127
  %v129 = vpop.f32.mrf.mxu0
  %v130 = vadd.f32 %v88, %v129
  %131 = vdwg.mxu0
  %v132 = vunpack.c.l.bf16 %v30
  %v133 = vunpack.c.l.bf16 %v31
  %v134 = vadd.f32 %v128, %v132
  %v135 = vadd.f32 %v130, %v133
  %v136 = vsel %vm57, %v134, 0.0
  %137 = vadd.xlane.f32.xlu0 %v136
  %v138 = vpop.xlane.xlu0 %137
  %v139 = vsel %vm57, %v135, 0.0
  %140 = vadd.xlane.f32.xlu0 %v139
  %v141 = vpop.xlane.xlu0 %140
  %v142 = vrcp.pop 32.0
  %v143 = vmul.f32 32.0, %v142
  %v144 = vsub.f32 1.0, %v143
  %v145 = vmul.f32 %v142, %v144
  %v146 = vadd.f32 %v142, %v145
  %vm147 = vweird.f32 %v142
  %v148 = vsel %vm147, %v142, %v146
  %v149 = vmul.f32 %v138, %v148
  %v150 = vmul.f32 %v141, %v148
  %v151 = vsub.f32 %v134, %v149
  %v152 = vsub.f32 %v135, %v150
  %v153 = vmul.f32 %v151, %v151
  %v154 = vmul.f32 %v152, %v152
  %v155 = vsel %vm57, %v153, 0.0
  %156 = vadd.xlane.f32.xlu0 %v155
  %v157 = vpop.xlane.xlu0 %156
  %v158 = vsel %vm57, %v154, 0.0
  %159 = vadd.xlane.f32.xlu0 %v158
  %v160 = vpop.xlane.xlu0 %159
  %v161 = vmul.f32 %v157, %v148
  %v162 = vmul.f32 %v160, %v148
  %v163 = vadd.f32 %v161, 1e-05
  %v164 = vadd.f32 %v162, 1e-05
  %v165 = vrsqrt.pop %v163
  %v166 = vmul.f32 %v165, %v163
  %v167 = vmul.f32 %v166, %v165
  %v168 = vmul.f32 0.5, %v167
  %v169 = vsub.f32 1.5, %v168
  %v170 = vmul.f32 %v165, %v169
  %vm171 = vweird.f32 %v163
  %vm172 = vweird.f32 %v165
  %vm173 = vmor %vm171, %vm172
  %v174 = vsel %vm173, %v165, %v170
  %v175 = vrsqrt.pop %v164
  %v176 = vmul.f32 %v175, %v164
  %v177 = vmul.f32 %v176, %v175
  %v178 = vmul.f32 0.5, %v177
  %v179 = vsub.f32 1.5, %v178
  %v180 = vmul.f32 %v175, %v179
  %vm181 = vweird.f32 %v164
  %vm182 = vweird.f32 %v175
  %vm183 = vmor %vm181, %vm182
  %v184 = vsel %vm183, %v175, %v180
  %v185 = vmul.f32 %v151, %v174
  %v186 = vmul.f32 %v152, %v184
  %v187 = vld [vmem:[%s5] sm:$0x1]
  %v189 = vperm.slane %v187, 0
  %v191 = vmul.f32 %v185, %v189
  %v192 = vmul.f32 %v186, %v189
  %v193 = vld [vmem:[%s6] sm:$0x1]
  %v195 = vperm.slane %v193, 0
  %v197 = vadd.f32 %v191, %v195
  %v198 = vadd.f32 %v192, %v195
  %v199 = vld [vmem:[%s7] sm:$0xff]
  %v200 = vld [vmem:[%s7 + $0x8] sm:$0xff]
  %202 = vset.pattern.permute.xlu0 0
  %203 = vperm.xlu0 %202, %v199
  %v204 = vpop.permute.xlu0 %203
  %207 = vset.pattern.permute.xlu0 0
  %208 = vperm.xlu0 %207, %v200
  %v209 = vpop.permute.xlu0 %208
  %v211 = vmul.f32 %v197, %v204
  %v212 = vmul.f32 %v198, %v209
  %v213 = vpack.c.bf16 %v211, %v211
  %v214 = vpack.c.bf16 %v212, %v212
  %vm215 = vcmask 257024
  %216 = vst.msk [vmem:[%s8] sm:$0xf] %vm215, %v213
  %217 = vst.msk [vmem:[%s8 + $0x4] sm:$0xf] %vm215, %v214
  // Predicated region
  $region34: #{_lambda_.21} parent=0 // pred_check
    _
  $region35: #{_lambda_.21} parent=0 // pred_check_branch
    %219 = sbr.rel (0) target = $region37
  $region36: #{_lambda_.21} parent=0 // pred_region
    _
  $region37: #{_lambda_.21} parent=0 // pred_fallthru
    _
  // Predicated region
  $region38: #{_lambda_.21} parent=0 // pred_check
    _
  $region39: #{_lambda_.21} parent=0 // pred_check_branch
    %221 = sbr.rel (0) target = $region41
  $region40: #{_lambda_.21} parent=0 // pred_region
    _
  $region41: #{_lambda_.21} parent=0 // pred_fallthru
    _

// kernel: _lambda_.19
$region0: #{_lambda_.19}
  #allocation0 [shape = 'u32[]', space=smem, size = 0x4, offset = 0x4, fixed_abs, tag = 'smem constant byte address 0x4 - core index']
  #allocation1 [shape = 'u32[72,128]{1,0:T(1,128)}', space=vmem, size = 0x9000, scoped, tag = 'internal scratch']
  #allocation2 [shape = 'f32[16,96]{1,0:T(8,128)}', space=vmem, size = 0x2000, scoped, tag = 'scratch operand']
  %s0 = inlined_call_operand.vmem [shape: bf16[16,32], index: 0, kind: input, shape index: {}]
  %s1 = inlined_call_operand.vmem [shape: bf16[32,96], index: 1, kind: input, shape index: {}]
  %s2 = inlined_call_operand.vmem [shape: f32[1,96], index: 2, kind: input, shape index: {}]
  %s3 = inlined_call_operand.vmem [shape: bf16[16,96], index: 3, kind: output, shape index: {}]
  %s4 = sld [smem:[#allocation0]]
  $region30: #{_lambda_.19} parent=0
    _
  %s6 = ssub.s32 1, %s4
  %s7 = scalar_select 0, %s6, %s4
  // Predicated region
  $region2: #{_lambda_.19} parent=0 // pred_check
    _
  $region3: #{_lambda_.19} parent=0 // pred_check_branch
    %9 = sbr.rel (0) target = $region5
  $region4: #{_lambda_.19} parent=0 // pred_region
    _
  $region5: #{_lambda_.19} parent=0 // pred_fallthru
    _
  // Predicated region
  $region6: #{_lambda_.19} parent=0 // pred_check
    _
  $region7: #{_lambda_.19} parent=0 // pred_check_branch
    %11 = sbr.rel (0) target = $region9
  $region8: #{_lambda_.19} parent=0 // pred_region
    _
  $region9: #{_lambda_.19} parent=0 // pred_fallthru
    _
  // Predicated region
  $region10: #{_lambda_.19} parent=0 // pred_check
    _
  $region11: #{_lambda_.19} parent=0 // pred_check_branch
    %13 = sbr.rel (0) target = $region13
  $region12: #{_lambda_.19} parent=0 // pred_region
    _
  $region13: #{_lambda_.19} parent=0 // pred_fallthru
    _
  %p15 = scmp.eq.s32.totalorder 0, 0
  // Predicated region
  $region14: #{_lambda_.19} parent=0 // pred_check
    %p16 = pneg %p15
  $region15: #{_lambda_.19} parent=0 // pred_check_branch
    %18 = sbr.rel (%p16) target = $region17
  $region16: #{_lambda_.19} parent=0 // pred_region
    %vm19 = vcmask 785408
    %20 = vst.msk [vmem:[#allocation2] sm:$0xff] %vm19, 0.0
    %21 = vst.msk [vmem:[#allocation2 + $0x8] sm:$0xff] %vm19, 0.0
  $region17: #{_lambda_.19} parent=0 // pred_fallthru
    _
  %v22 = vld [vmem:[#allocation2] sm:$0xff]
  %v23 = vld [vmem:[#allocation2 + $0x8] sm:$0xff]
  %v24 = vld [vmem:[%s0] sm:$0xf]
  %v25 = vld [vmem:[%s0 + $0x4] sm:$0xf]
  %v26 = vld [vmem:[%s1] sm:$0xf]
  %v27 = vld [vmem:[%s1 + $0x4] sm:$0xf]
  %v28 = vld [vmem:[%s1 + $0x8] sm:$0xf]
  %v29 = vld [vmem:[%s1 + $0xc] sm:$0xf]
  %v32 = vunpack.c.l.b16 %v24
  %v33 = vunpack.c.l.b16 %v25
  %v34 = vpack.c.b16 %v33, %v32
  %v39 = vunpack.c.l.b16 %v26
  %v40 = vunpack.c.l.b16 %v27
  %v41 = vunpack.c.l.b16 %v28
  %v42 = vunpack.c.l.b16 %v29
  %v43 = vpack.c.b16 %v40, %v39
  %v44 = vpack.c.b16 %v42, %v41
  %vm47 = vcmask 261120
  %v49 = vsel %vm47, %v34, 0
  %51 = vmatpush.bf16.msra.mxu0 0
  %52 = vmatpush.bf16.msra.mxu0 0
  %53 = vmatpush.bf16.msra.mxu0 0
  %54 = vmatpush.bf16.msra.mxu0 0
  %55 = vmatpush.bf16.msra.mxu0 0
  %56 = vmatpush.bf16.msra.mxu0 0
  %57 = vmatpush.bf16.msra.mxu0 %v44
  %58 = vmatpush.bf16.msra.mxu0 %v43
  %59 = vmatmul.bf16.gmra.mxu0 %v49
  %v60 = vpop.f32.mrf.mxu0
  %v61 = vadd.f32 0.0, %v60
  %v62 = vpop.f32.mrf.mxu0
  %v63 = vadd.f32 0.0, %v62
  %64 = vdwg.mxu0
  %v65 = vadd.f32 %v22, %v61
  %v66 = vadd.f32 %v23, %v63
  %vm67 = vcmask 785408
  %68 = vst.msk [vmem:[#allocation2] sm:$0xff] %vm67, %v65
  %69 = vst.msk [vmem:[#allocation2 + $0x8] sm:$0xff] %vm67, %v66
  // Predicated region
  $region18: #{_lambda_.19} parent=0 // pred_check
    %p70 = pneg %p15
  $region19: #{_lambda_.19} parent=0 // pred_check_branch
    %72 = sbr.rel (%p70) target = $region21
  $region20: #{_lambda_.19} parent=0 // pred_region
    %v73 = vld [vmem:[#allocation2] sm:$0xff]
    %v74 = vld [vmem:[#allocation2 + $0x8] sm:$0xff]
    %v75 = vld [vmem:[%s2] sm:$0x1]
    %v77 = vperm.slane %v75, 0
    %v79 = vadd.f32 %v73, %v77
    %v80 = vadd.f32 %v74, %v77
    %v81 = vpack.c.bf16 %v79, %v79
    %v82 = vpack.c.bf16 %v80, %v80
    %vm83 = vcmask 781312
    %84 = vst.msk [vmem:[%s3] sm:$0xf] %vm83, %v81
    %85 = vst.msk [vmem:[%s3 + $0x4] sm:$0xf] %vm83, %v82
  $region21: #{_lambda_.19} parent=0 // pred_fallthru
    _
  // Predicated region
  $region22: #{_lambda_.19} parent=0 // pred_check
    _
  $region23: #{_lambda_.19} parent=0 // pred_check_branch
    %87 = sbr.rel (0) target = $region25
  $region24: #{_lambda_.19} parent=0 // pred_region
    _
  $region25: #{_lambda_.19} parent=0 // pred_fallthru
    _
  // Predicated region
  $region26: #{_lambda_.19} parent=0 // pred_check
    _
  $region27: #{_lambda_.19} parent=0 // pred_check_branch
    %89 = sbr.rel (0) target = $region29
  $region28: #{_lambda_.19} parent=0 // pred_region
    _
  $region29: #{_lambda_.19} parent=0 // pred_fallthru
    _

// kernel: _lambda_.20
$region0: #{_lambda_.20}
  #allocation0 [shape = 'u32[]', space=smem, size = 0x4, offset = 0x4, fixed_abs, tag = 'smem constant byte address 0x4 - core index']
  #allocation1 [shape = 'u32[72,128]{1,0:T(1,128)}', space=vmem, size = 0x9000, scoped, tag = 'internal scratch']
  #allocation2 [shape = 'bf16[8,32]{1,0:T(8,128)(2,1)}', space=vmem, size = 0x800, scoped, tag = 'scratch operand']
  %s0 = inlined_call_operand.vmem [shape: bf16[2,4,8,8], index: 0, kind: input, shape index: {}]
  %s1 = inlined_call_operand.vmem [shape: bf16[2,4,8,8], index: 1, kind: input, shape index: {}]
  %s2 = inlined_call_operand.vmem [shape: bf16[2,4,8,8], index: 2, kind: input, shape index: {}]
  %s3 = inlined_call_operand.vmem [shape: f32[2,1,8], index: 3, kind: input, shape index: {}]
  %s4 = inlined_call_operand.vmem [shape: bf16[2,8,32], index: 4, kind: input, shape index: {}]
  %s5 = inlined_call_operand.vmem [shape: f32[2,8,1], index: 5, kind: input, shape index: {}]
  %s6 = inlined_call_operand.vmem [shape: bf16[32,32], index: 6, kind: input, shape index: {}]
  %s7 = inlined_call_operand.vmem [shape: f32[1,32], index: 7, kind: input, shape index: {}, may-alias: {7,9}]
  %s8 = inlined_call_operand.vmem [shape: f32[1,32], index: 8, kind: input, shape index: {}]
  %s9 = inlined_call_operand.vmem [shape: f32[1,32], index: 9, kind: input, shape index: {}, may-alias: {7,9}]
  %s10 = inlined_call_operand.vmem [shape: bf16[2,8,32], index: 10, kind: output, shape index: {}]
  %s11 = sld [smem:[#allocation0]]
  $region73: #{_lambda_.20} parent=0
    _
  %s13 = ssub.s32 1, %s11
  %s14 = scalar_select 0, %s13, %s11
  loop: start=0, step=1, limit=4
  $region2: #{_lambda_.20} parent=0 // loop_pre_header
    _
  $region3: #{_lambda_.20} parent=0 // loop_header
    %s16 = sphi 0, %s20
    %p17 = scmp.ge.s32.totalorder %s16, 4
    %s23 = sphi 0, %s35
    %s24 = sphi 0, %s31
    %s25 = sphi 0, %s23
    %s26 = sphi 0, %s24
    %s27 = sphi 0, %s25
    %s28 = sphi 0, %s26
    %s40 = sphi 0, %s42
    %s43 = sphi 0, %s40
    %s44 = sphi 0, %s43
    %s60 = sphi 0, %s44
    %s66 = sphi 0, %s68
    %s69 = sphi 0, %s66
    %s70 = sphi 0, %s69
    %s86 = sphi 0, %s70
    %s92 = sphi 0, %s94
    %s95 = sphi 0, %s92
    %s96 = sphi 0, %s95
    %s112 = sphi 0, %s96
    %s118 = sphi 0, %s120
    %s121 = sphi 0, %s118
    %s122 = sphi 0, %s121
    %s138 = sphi 0, %s122
    %s146 = sphi 0, %s148
    %s149 = sphi 0, %s146
    %s150 = sphi 0, %s149
    %s166 = sphi 0, %s150
    %s174 = sphi 0, %s176
    %s177 = sphi 0, %s174
    %s178 = sphi 0, %s177
    %s194 = sphi 0, %s178
    %s198 = sphi 0, %s198
    %s200 = sphi 0, %s198
    %s201 = sphi 0, %s200
    %s215 = sphi 0, %s201
    %s219 = sphi 0, %s219
    %s221 = sphi 0, %s219
    %s222 = sphi 0, %s221
    %s236 = sphi 0, %s222
    %s240 = sphi 0, %s240
    %s242 = sphi 0, %s240
    %s243 = sphi 0, %s242
    %s257 = sphi 0, %s243
    %s261 = sphi 0, %s261
    %s263 = sphi 0, %s261
    %s264 = sphi 0, %s263
    %s278 = sphi 0, %s264
    %s286 = sphi 0, %s288
    %s289 = sphi 0, %s286
    %s290 = sphi 0, %s289
    %s306 = sphi 0, %s290
  $region4: #{_lambda_.20} parent=0 // loop_header_branch
    %19 = sbr.rel (%p17) target = $region8
  $region5: #{_lambda_.20} parent=0 // loop_body
    %s21 = ssub.s32 %s16, 1
    %s22 = ssub.s32 %s16, 2
    %s29 = sadd.s32 1, %s24
    %p30 = scmp.ge.s32.totalorder %s29, 1
    %s31 = scalar_select %p30, 0, %s29
    %s32 = sadd.s32 1, %s23
    %s33 = scalar_select %p30, %s32, %s23
    %p34 = scmp.ge.s32.totalorder %s33, 2
    %s35 = scalar_select %p34, 0, %s33
    %s36 = ssub.s32 %s23, %s35
    %s37 = ssub.s32 %s24, %s31
    %s38 = sor.u32 %s36, %s37
    %p39 = scmp.eq.s32.totalorder %s38, 0
    %s41 = sadd.s32 %s40, 1
    %s42 = scalar_select %p39, %s40, %s41
    %p45 = pneg %p39
    %p46 = scmp.eq.s32.totalorder %s16, 1
    %p47 = por %p45, %p46
    %p48 = scmp.ne.s32.totalorder %s40, %s43
    %p49 = scmp.eq.s32.totalorder %s16, 0
    %p50 = por %p48, %p49
    %p51 = scmp.ne.s32.totalorder %s40, %s43
    %p52 = scmp.eq.s32.totalorder %s21, 1
    %p53 = por %p51, %p52
    %p54 = scmp.ne.s32.totalorder %s43, %s44
    %p55 = scmp.eq.s32.totalorder %s21, 0
    %p56 = por %p54, %p55
    %p57 = scmp.ne.s32.totalorder %s43, %s44
    %p58 = scmp.eq.s32.totalorder %s22, 1
    %p59 = por %p57, %p58
    %p61 = scmp.ne.s32.totalorder %s44, %s60
    %p62 = scmp.eq.s32.totalorder %s22, 0
    %p63 = por %p61, %p62
    %s64 = ssub.s32 %s23, %s35
    %p65 = scmp.eq.s32.totalorder %s64, 0
    %s67 = sadd.s32 %s66, 1
    %s68 = scalar_select %p65, %s66, %s67
    %p71 = pneg %p65
    %p72 = scmp.eq.s32.totalorder %s16, 1
    %p73 = por %p71, %p72
    %p74 = scmp.ne.s32.totalorder %s66, %s69
    %p75 = scmp.eq.s32.totalorder %s16, 0
    %p76 = por %p74, %p75
    %p77 = scmp.ne.s32.totalorder %s66, %s69
    %p78 = scmp.eq.s32.totalorder %s21, 1
    %p79 = por %p77, %p78
    %p80 = scmp.ne.s32.totalorder %s69, %s70
    %p81 = scmp.eq.s32.totalorder %s21, 0
    %p82 = por %p80, %p81
    %p83 = scmp.ne.s32.totalorder %s69, %s70
    %p84 = scmp.eq.s32.totalorder %s22, 1
    %p85 = por %p83, %p84
    %p87 = scmp.ne.s32.totalorder %s70, %s86
    %p88 = scmp.eq.s32.totalorder %s22, 0
    %p89 = por %p87, %p88
    %s90 = ssub.s32 %s23, %s35
    %p91 = scmp.eq.s32.totalorder %s90, 0
    %s93 = sadd.s32 %s92, 1
    %s94 = scalar_select %p91, %s92, %s93
    %p97 = pneg %p91
    %p98 = scmp.eq.s32.totalorder %s16, 1
    %p99 = por %p97, %p98
    %p100 = scmp.ne.s32.totalorder %s92, %s95
    %p101 = scmp.eq.s32.totalorder %s16, 0
    %p102 = por %p100, %p101
    %p103 = scmp.ne.s32.totalorder %s92, %s95
    %p104 = scmp.eq.s32.totalorder %s21, 1
    %p105 = por %p103, %p104
    %p106 = scmp.ne.s32.totalorder %s95, %s96
    %p107 = scmp.eq.s32.totalorder %s21, 0
    %p108 = por %p106, %p107
    %p109 = scmp.ne.s32.totalorder %s95, %s96
    %p110 = scmp.eq.s32.totalorder %s22, 1
    %p111 = por %p109, %p110
    %p113 = scmp.ne.s32.totalorder %s96, %s112
    %p114 = scmp.eq.s32.totalorder %s22, 0
    %p115 = por %p113, %p114
    %s116 = ssub.s32 %s23, %s35
    %p117 = scmp.eq.s32.totalorder %s116, 0
    %s119 = sadd.s32 %s118, 1
    %s120 = scalar_select %p117, %s118, %s119
    %p123 = pneg %p117
    %p124 = scmp.eq.s32.totalorder %s16, 1
    %p125 = por %p123, %p124
    %p126 = scmp.ne.s32.totalorder %s118, %s121
    %p127 = scmp.eq.s32.totalorder %s16, 0
    %p128 = por %p126, %p127
    %p129 = scmp.ne.s32.totalorder %s118, %s121
    %p130 = scmp.eq.s32.totalorder %s21, 1
    %p131 = por %p129, %p130
    %p132 = scmp.ne.s32.totalorder %s121, %s122
    %p133 = scmp.eq.s32.totalorder %s21, 0
    %p134 = por %p132, %p133
    %p135 = scmp.ne.s32.totalorder %s121, %s122
    %p136 = scmp.eq.s32.totalorder %s22, 1
    %p137 = por %p135, %p136
    %p139 = scmp.ne.s32.totalorder %s122, %s138
    %p140 = scmp.eq.s32.totalorder %s22, 0
    %p141 = por %p139, %p140
    %s142 = ssub.s32 %s23, %s35
    %s143 = ssub.s32 %s24, %s31
    %s144 = sor.u32 %s142, %s143
    %p145 = scmp.eq.s32.totalorder %s144, 0
    %s147 = sadd.s32 %s146, 1
    %s148 = scalar_select %p145, %s146, %s147
    %p151 = pneg %p145
    %p152 = scmp.eq.s32.totalorder %s16, 1
    %p153 = por %p151, %p152
    %p154 = scmp.ne.s32.totalorder %s146, %s149
    %p155 = scmp.eq.s32.totalorder %s16, 0
    %p156 = por %p154, %p155
    %p157 = scmp.ne.s32.totalorder %s146, %s149
    %p158 = scmp.eq.s32.totalorder %s21, 1
    %p159 = por %p157, %p158
    %p160 = scmp.ne.s32.totalorder %s149, %s150
    %p161 = scmp.eq.s32.totalorder %s21, 0
    %p162 = por %p160, %p161
    %p163 = scmp.ne.s32.totalorder %s149, %s150
    %p164 = scmp.eq.s32.totalorder %s22, 1
    %p165 = por %p163, %p164
    %p167 = scmp.ne.s32.totalorder %s150, %s166
    %p168 = scmp.eq.s32.totalorder %s22, 0
    %p169 = por %p167, %p168
    %s170 = ssub.s32 %s23, %s35
    %s171 = ssub.s32 %s24, %s31
    %s172 = sor.u32 %s170, %s171
    %p173 = scmp.eq.s32.totalorder %s172, 0
    %s175 = sadd.s32 %s174, 1
    %s176 = scalar_select %p173, %s174, %s175
    %p179 = pneg %p173
    %p180 = scmp.eq.s32.totalorder %s16, 1
    %p181 = por %p179, %p180
    %p182 = scmp.ne.s32.totalorder %s174, %s177
    %p183 = scmp.eq.s32.totalorder %s16, 0
    %p184 = por %p182, %p183
    %p185 = scmp.ne.s32.totalorder %s174, %s177
    %p186 = scmp.eq.s32.totalorder %s21, 1
    %p187 = por %p185, %p186
    %p188 = scmp.ne.s32.totalorder %s177, %s178
    %p189 = scmp.eq.s32.totalorder %s21, 0
    %p190 = por %p188, %p189
    %p191 = scmp.ne.s32.totalorder %s177, %s178
    %p192 = scmp.eq.s32.totalorder %s22, 1
    %p193 = por %p191, %p192
    %p195 = scmp.ne.s32.totalorder %s178, %s194
    %p196 = scmp.eq.s32.totalorder %s22, 0
    %p197 = por %p195, %p196
    %s199 = sadd.s32 %s198, 1
    %p202 = scmp.eq.s32.totalorder %s16, 1
    %p203 = scmp.ne.s32.totalorder %s198, %s200
    %p204 = scmp.eq.s32.totalorder %s16, 0
    %p205 = por %p203, %p204
    %p206 = scmp.ne.s32.totalorder %s198, %s200
    %p207 = scmp.eq.s32.totalorder %s21, 1
    %p208 = por %p206, %p207
    %p209 = scmp.ne.s32.totalorder %s200, %s201
    %p210 = scmp.eq.s32.totalorder %s21, 0
    %p211 = por %p209, %p210
    %p212 = scmp.ne.s32.totalorder %s200, %s201
    %p213 = scmp.eq.s32.totalorder %s22, 1
    %p214 = por %p212, %p213
    %p216 = scmp.ne.s32.totalorder %s201, %s215
    %p217 = scmp.eq.s32.totalorder %s22, 0
    %p218 = por %p216, %p217
    %s220 = sadd.s32 %s219, 1
    %p223 = scmp.eq.s32.totalorder %s16, 1
    %p224 = scmp.ne.s32.totalorder %s219, %s221
    %p225 = scmp.eq.s32.totalorder %s16, 0
    %p226 = por %p224, %p225
    %p227 = scmp.ne.s32.totalorder %s219, %s221
    %p228 = scmp.eq.s32.totalorder %s21, 1
    %p229 = por %p227, %p228
    %p230 = scmp.ne.s32.totalorder %s221, %s222
    %p231 = scmp.eq.s32.totalorder %s21, 0
    %p232 = por %p230, %p231
    %p233 = scmp.ne.s32.totalorder %s221, %s222
    %p234 = scmp.eq.s32.totalorder %s22, 1
    %p235 = por %p233, %p234
    %p237 = scmp.ne.s32.totalorder %s222, %s236
    %p238 = scmp.eq.s32.totalorder %s22, 0
    %p239 = por %p237, %p238
    %s241 = sadd.s32 %s240, 1
    %p244 = scmp.eq.s32.totalorder %s16, 1
    %p245 = scmp.ne.s32.totalorder %s240, %s242
    %p246 = scmp.eq.s32.totalorder %s16, 0
    %p247 = por %p245, %p246
    %p248 = scmp.ne.s32.totalorder %s240, %s242
    %p249 = scmp.eq.s32.totalorder %s21, 1
    %p250 = por %p248, %p249
    %p251 = scmp.ne.s32.totalorder %s242, %s243
    %p252 = scmp.eq.s32.totalorder %s21, 0
    %p253 = por %p251, %p252
    %p254 = scmp.ne.s32.totalorder %s242, %s243
    %p255 = scmp.eq.s32.totalorder %s22, 1
    %p256 = por %p254, %p255
    %p258 = scmp.ne.s32.totalorder %s243, %s257
    %p259 = scmp.eq.s32.totalorder %s22, 0
    %p260 = por %p258, %p259
    %s262 = sadd.s32 %s261, 1
    %p265 = scmp.eq.s32.totalorder %s16, 1
    %p266 = scmp.ne.s32.totalorder %s261, %s263
    %p267 = scmp.eq.s32.totalorder %s16, 0
    %p268 = por %p266, %p267
    %p269 = scmp.ne.s32.totalorder %s261, %s263
    %p270 = scmp.eq.s32.totalorder %s21, 1
    %p271 = por %p269, %p270
    %p272 = scmp.ne.s32.totalorder %s263, %s264
    %p273 = scmp.eq.s32.totalorder %s21, 0
    %p274 = por %p272, %p273
    %p275 = scmp.ne.s32.totalorder %s263, %s264
    %p276 = scmp.eq.s32.totalorder %s22, 1
    %p277 = por %p275, %p276
    %p279 = scmp.ne.s32.totalorder %s264, %s278
    %p280 = scmp.eq.s32.totalorder %s22, 0
    %p281 = por %p279, %p280
    %s282 = ssub.s32 %s23, %s35
    %s283 = ssub.s32 %s24, %s31
    %s284 = sor.u32 %s282, %s283
    %p285 = scmp.eq.s32.totalorder %s284, 0
    %s287 = sadd.s32 %s286, 1
    %s288 = scalar_select %p285, %s286, %s287
    %p291 = pneg %p285
    %p292 = scmp.eq.s32.totalorder %s16, 1
    %p293 = por %p291, %p292
    %p294 = scmp.ne.s32.totalorder %s286, %s289
    %p295 = scmp.eq.s32.totalorder %s16, 0
    %p296 = por %p294, %p295
    %p297 = scmp.ne.s32.totalorder %s286, %s289
    %p298 = scmp.eq.s32.totalorder %s21, 1
    %p299 = por %p297, %p298
    %p300 = scmp.ne.s32.totalorder %s289, %s290
    %p301 = scmp.eq.s32.totalorder %s21, 0
    %p302 = por %p300, %p301
    %p303 = scmp.ne.s32.totalorder %s289, %s290
    %p304 = scmp.eq.s32.totalorder %s22, 1
    %p305 = por %p303, %p304
    %p307 = scmp.ne.s32.totalorder %s290, %s306
    %p308 = scmp.eq.s32.totalorder %s22, 0
    %p309 = por %p307, %p308
    %p310 = scmp.le.s32.totalorder 1, %s16
    %p311 = scmp.lt.s32.totalorder %s16, 3
    %p312 = pnand %p310, %p311
    %p313 = pneg %p312
    // Predicated region
    $region9: #{_lambda_.20} parent=5 // pred_check
      _
    $region10: #{_lambda_.20} parent=5 // pred_check_branch
      %315 = sbr.rel (%p312) target = $region12
    $region11: #{_lambda_.20} parent=5 // pred_region
      %s316 = ssub.s32 %s16, 1
      // Predicated region
      $region13: #{_lambda_.20} parent=11 // pred_check
        %p317 = pneg %p211
      $region14: #{_lambda_.20} parent=11 // pred_check_branch
        %319 = sbr.rel (%p317) target = $region16
      $region15: #{_lambda_.20} parent=11 // pred_region
        _
      $region16: #{_lambda_.20} parent=11 // pred_fallthru
        _
      // Predicated region
      $region17: #{_lambda_.20} parent=11 // pred_check
        %p320 = pneg %p232
      $region18: #{_lambda_.20} parent=11 // pred_check_branch
        %322 = sbr.rel (%p320) target = $region20
      $region19: #{_lambda_.20} parent=11 // pred_region
        _
      $region20: #{_lambda_.20} parent=11 // pred_fallthru
        _
      // Predicated region
      $region21: #{_lambda_.20} parent=11 // pred_check
        %p323 = pneg %p253
      $region22: #{_lambda_.20} parent=11 // pred_check_branch
        %325 = sbr.rel (%p323) target = $region24
      $region23: #{_lambda_.20} parent=11 // pred_region
        _
      $region24: #{_lambda_.20} parent=11 // pred_fallthru
        _
      // Predicated region
      $region25: #{_lambda_.20} parent=11 // pred_check
        %p326 = pneg %p274
      $region26: #{_lambda_.20} parent=11 // pred_check_branch
        %328 = sbr.rel (%p326) target = $region28
      $region27: #{_lambda_.20} parent=11 // pred_region
        _
      $region28: #{_lambda_.20} parent=11 // pred_fallthru
        _
    $region12: #{_lambda_.20} parent=5 // pred_fallthru
      _
    %p329 = scmp.lt.s32.totalorder %s16, 2
    // Predicated region
    $region29: #{_lambda_.20} parent=5 // pred_check
      %p330 = pneg %p329
    $region30: #{_lambda_.20} parent=5 // pred_check_branch
      %332 = sbr.rel (%p330) target = $region32
    $region31: #{_lambda_.20} parent=5 // pred_region
      // Predicated region
      $region33: #{_lambda_.20} parent=31 // pred_check
        %p333 = pneg %p50
      $region34: #{_lambda_.20} parent=31 // pred_check_branch
        %335 = sbr.rel (%p333) target = $region36
      $region35: #{_lambda_.20} parent=31 // pred_region
        %p336 = scmp.lt.s32.totalorder %s23, 1
        %s337 = scalar_select %p336, %s23, 1
        %p338 = scmp.lt.s32.totalorder %s24, 0
        %s339 = scalar_select %p338, %s24, 0
        %s340 = smul.addr %s337, 4
        %s341 = sadd.s32 %s339, %s340
        %s342 = smul.addr %s341, 4
        %s343 = scalar_lea.vmem %s0, %s342
      $region36: #{_lambda_.20} parent=31 // pred_fallthru
        _
      // Predicated region
      $region37: #{_lambda_.20} parent=31 // pred_check
        %p344 = pneg %p76
      $region38: #{_lambda_.20} parent=31 // pred_check_branch
        %346 = sbr.rel (%p344) target = $region40
      $region39: #{_lambda_.20} parent=31 // pred_region
        %p347 = scmp.lt.s32.totalorder %s23, 1
        %s348 = scalar_select %p347, %s23, 1
        %s349 = smul.addr %s348, 4
        %s350 = smul.addr %s349, 4
        %s351 = scalar_lea.vmem %s1, %s350
      $region40: #{_lambda_.20} parent=31 // pred_fallthru
        _
      // Predicated region
      $region41: #{_lambda_.20} parent=31 // pred_check
        %p352 = pneg %p102
      $region42: #{_lambda_.20} parent=31 // pred_check_branch
        %354 = sbr.rel (%p352) target = $region44
      $region43: #{_lambda_.20} parent=31 // pred_region
        %p355 = scmp.lt.s32.totalorder %s23, 1
        %s356 = scalar_select %p355, %s23, 1
        %s357 = smul.addr %s356, 4
        %s358 = smul.addr %s357, 4
        %s359 = scalar_lea.vmem %s2, %s358
      $region44: #{_lambda_.20} parent=31 // pred_fallthru
        _
      // Predicated region
      $region45: #{_lambda_.20} parent=31 // pred_check
        %p360 = pneg %p128
      $region46: #{_lambda_.20} parent=31 // pred_check_branch
        %362 = sbr.rel (%p360) target = $region48
      $region47: #{_lambda_.20} parent=31 // pred_region
        %p363 = scmp.lt.s32.totalorder %s23, 1
        %s364 = scalar_select %p363, %s23, 1
        %s365 = scalar_lea.vmem %s3, %s364
      $region48: #{_lambda_.20} parent=31 // pred_fallthru
        _
      // Predicated region
      $region49: #{_lambda_.20} parent=31 // pred_check
        %p366 = pneg %p156
      $region50: #{_lambda_.20} parent=31 // pred_check_branch
        %368 = sbr.rel (%p366) target = $region52
      $region51: #{_lambda_.20} parent=31 // pred_region
        %p369 = scmp.lt.s32.totalorder %s23, 1
        %s370 = scalar_select %p369, %s23, 1
        %p371 = scmp.lt.s32.totalorder %s24, 0
        %s372 = scalar_select %p371, %s24, 0
        %s373 = sadd.s32 %s372, %s370
        %s374 = smul.addr %s373, 4
        %s375 = scalar_lea.vmem %s4, %s374
      $region52: #{_lambda_.20} parent=31 // pred_fallthru
        _
      // Predicated region
      $region53: #{_lambda_.20} parent=31 // pred_check
        %p376 = pneg %p184
      $region54: #{_lambda_.20} parent=31 // pred_check_branch
        %378 = sbr.rel (%p376) target = $region56
      $region55: #{_lambda_.20} parent=31 // pred_region
        %p379 = scmp.lt.s32.totalorder %s23, 1
        %s380 = scalar_select %p379, %s23, 1
        %p381 = scmp.lt.s32.totalorder %s24, 0
        %s382 = scalar_select %p381, %s24, 0
        %s383 = sadd.s32 %s382, %s380
        %s384 = smul.addr %s383, 8
        %s385 = scalar_lea.vmem %s5, %s384
      $region56: #{_lambda_.20} parent=31 // pred_fallthru
        _
    $region32: #{_lambda_.20} parent=5 // pred_fallthru
      _
    %p386 = scmp.le.s32.totalorder 1, %s16
    %p387 = scmp.lt.s32.totalorder %s16, 3
    %p388 = pnand %p386, %p387
    %p389 = pneg %p388
    // Predicated region
    $region57: #{_lambda_.20} parent=5 // pred_check
      _
    $region58: #{_lambda_.20} parent=5 // pred_check_branch
      %391 = sbr.rel (%p388) target = $region60
    $region59: #{_lambda_.20} parent=5 // pred_region
      %s392 = ssub.s32 %s16, 1
      %p393 = scmp.lt.s32.totalorder %s25, 1
      %s394 = scalar_select %p393, %s25, 1
      %p395 = scmp.lt.s32.totalorder %s26, 0
      %s396 = scalar_select %p395, %s26, 0
      %s397 = smul.addr %s394, 4
      %s398 = sadd.s32 %s396, %s397
      %s399 = smul.addr %s398, 4
      %s400 = scalar_lea.vmem %s0, %s399
      %p401 = pneg %p56
      %p402 = pneg %p53
      %p403 = scmp.lt.s32.totalorder %s25, 1
      %s404 = scalar_select %p403, %s25, 1
      %s405 = smul.addr %s404, 4
      %s406 = smul.addr %s405, 4
      %s407 = scalar_lea.vmem %s1, %s406
      %p408 = pneg %p82
      %p409 = pneg %p79
      %p410 = scmp.lt.s32.totalorder %s25, 1
      %s411 = scalar_select %p410, %s25, 1
      %s412 = smul.addr %s411, 4
      %s413 = smul.addr %s412, 4
      %s414 = scalar_lea.vmem %s2, %s413
      %p415 = pneg %p108
      %p416 = pneg %p105
      %p417 = scmp.lt.s32.totalorder %s25, 1
      %s418 = scalar_select %p417, %s25, 1
      %s419 = scalar_lea.vmem %s3, %s418
      %p420 = pneg %p134
      %p421 = pneg %p131
      %p422 = scmp.lt.s32.totalorder %s25, 1
      %s423 = scalar_select %p422, %s25, 1
      %p424 = scmp.lt.s32.totalorder %s26, 0
      %s425 = scalar_select %p424, %s26, 0
      %s426 = sadd.s32 %s425, %s423
      %s427 = smul.addr %s426, 4
      %s428 = scalar_lea.vmem %s4, %s427
      %p429 = pneg %p162
      %p430 = pneg %p159
      %p431 = scmp.lt.s32.totalorder %s25, 1
      %s432 = scalar_select %p431, %s25, 1
      %p433 = scmp.lt.s32.totalorder %s26, 0
      %s434 = scalar_select %p433, %s26, 0
      %s435 = sadd.s32 %s434, %s432
      %s436 = smul.addr %s435, 8
      %s437 = scalar_lea.vmem %s5, %s436
      %p438 = pneg %p190
      %p439 = pneg %p187
      %p440 = pneg %p211
      %p441 = pneg %p208
      %p442 = pneg %p232
      %p443 = pneg %p229
      %p444 = pneg %p253
      %p445 = pneg %p250
      %p446 = pneg %p274
      %p447 = pneg %p271
      %p448 = pneg %p302
      %p449 = pneg %p299
      %p450 = scmp.lt.s32.totalorder %s25, 1
      %s451 = scalar_select %p450, %s25, 1
      %p452 = scmp.lt.s32.totalorder %s26, 0
      %s453 = scalar_select %p452, %s26, 0
      %s454 = sadd.s32 %s453, %s451
      %s455 = smul.addr %s454, 4
      %s456 = scalar_lea.vmem %s10, %s455
      %p457 = scmp.lt.s32.totalorder %s25, 1
      %s458 = scalar_select %p457, %s25, 1
      %p459 = scmp.lt.s32.totalorder %s26, 0
      %s460 = scalar_select %p459, %s26, 0
      %s461 = smul.addr %s458, 4
      %s462 = sadd.s32 %s460, %s461
      %s463 = smul.addr %s462, 4
      %s464 = scalar_lea.vmem %s0, %s463
      %p465 = scmp.lt.s32.totalorder %s25, 1
      %s466 = scalar_select %p465, %s25, 1
      %s467 = smul.addr %s466, 4
      %s468 = smul.addr %s467, 4
      %s469 = scalar_lea.vmem %s1, %s468
      %p470 = scmp.lt.s32.totalorder %s25, 1
      %s471 = scalar_select %p470, %s25, 1
      %s472 = smul.addr %s471, 4
      %s473 = smul.addr %s472, 4
      %s474 = scalar_lea.vmem %s2, %s473
      %p475 = scmp.lt.s32.totalorder %s25, 1
      %s476 = scalar_select %p475, %s25, 1
      %s477 = scalar_lea.vmem %s3, %s476
      %p478 = scmp.lt.s32.totalorder %s25, 1
      %s479 = scalar_select %p478, %s25, 1
      %p480 = scmp.lt.s32.totalorder %s26, 0
      %s481 = scalar_select %p480, %s26, 0
      %s482 = sadd.s32 %s481, %s479
      %s483 = smul.addr %s482, 4
      %s484 = scalar_lea.vmem %s4, %s483
      %p485 = scmp.lt.s32.totalorder %s25, 1
      %s486 = scalar_select %p485, %s25, 1
      %p487 = scmp.lt.s32.totalorder %s26, 0
      %s488 = scalar_select %p487, %s26, 0
      %s489 = sadd.s32 %s488, %s486
      %s490 = smul.addr %s489, 8
      %s491 = scalar_lea.vmem %s5, %s490
      %p492 = scmp.lt.s32.totalorder %s25, 1
      %s493 = scalar_select %p492, %s25, 1
      %p494 = scmp.lt.s32.totalorder %s26, 0
      %s495 = scalar_select %p494, %s26, 0
      %s496 = sadd.s32 %s495, %s493
      %s497 = smul.addr %s496, 4
      %s498 = scalar_lea.vmem %s10, %s497
      %v500 = vld [vmem:[%s477] sm:$0x1]
      %v501 = vld [vmem:[%s464] sm:$0xf]
      %v502 = vld [vmem:[%s469] sm:$0xf]
      %v503 = vld [vmem:[%s474] sm:$0xf]
      %v505 = vperm.slane %v500, 0
      %vm507 = vcmask 64512
      %v509 = vsel %vm507, %v501, 0
      %v512 = vsel %vm507, %v502, 0
      %514 = vmatpush.bf16.xpose.msra.mxu0 0
      %515 = vmatpush.bf16.xpose.msra.mxu0 0
      %516 = vmatpush.bf16.xpose.msra.mxu0 0
      %517 = vmatpush.bf16.xpose.msra.mxu0 0
      %518 = vmatpush.bf16.xpose.msra.mxu0 0
      %519 = vmatpush.bf16.xpose.msra.mxu0 0
      %520 = vmatpush.bf16.xpose.msra.mxu0 0
      %521 = vmatpush.bf16.xpose.msra.mxu0 %v512
      %522 = vmatmul.bf16.gmra.mxu0 %v509
      %v523 = vpop.f32.mrf.mxu0
      %v524 = vadd.f32 %v505, %v523
      %v525 = vpop.f32.mrf.mxu0
      %526 = vdwg.mxu0
      %v527 = vsel %vm507, %v524, -inf
      %528 = vmax.xlane.f32.xlu0 %v527
      %v529 = vpop.xlane.xlu0 %528
      %v530 = vsub.f32 %v524, %v529
      %v531 = vmul.f32 %v530, 1.442695
      %v532 = vpow.pop %v531
      %v533 = vsel %vm507, %v532, 0.0
      %534 = vadd.xlane.f32.xlu0 %v533
      %v535 = vpop.xlane.xlu0 %534
      %v536 = vrcp.pop %v535
      %v537 = vmul.f32 %v532, %v536
      %v538 = vpack.c.bf16 %v537, %v537
      %v540 = vsel %vm507, %v538, 0
      %vm542 = vcmask 1043456
      %v544 = vsel %vm542, %v503, 0
      %546 = vmatpush.bf16.msra.mxu0 0
      %547 = vmatpush.bf16.msra.mxu0 0
      %548 = vmatpush.bf16.msra.mxu0 0
      %549 = vmatpush.bf16.msra.mxu0 0
      %550 = vmatpush.bf16.msra.mxu0 0
      %551 = vmatpush.bf16.msra.mxu0 0
      %552 = vmatpush.bf16.msra.mxu0 0
      %553 = vmatpush.bf16.msra.mxu0 %v544
      %554 = vmatmul.bf16.gmra.mxu0 %v540
      %v555 = vpop.f32.mrf.mxu0
      %v556 = vadd.f32 0.0, %v555
      %v557 = vpop.f32.mrf.mxu0
      %558 = vdwg.mxu0
      %v559 = vpack.c.bf16 %v556, %v556
      %vm560 = vcmask 60416
      %561 = vst.msk [vmem:[#allocation2] sm:$0xf] %vm560, %v559
      %s562 = scalar_lea.vmem %s464, 4
      %v563 = vld [vmem:[%s562] sm:$0xf]
      %s564 = scalar_lea.vmem %s469, 4
      %v565 = vld [vmem:[%s564] sm:$0xf]
      %s566 = scalar_lea.vmem %s474, 4
      %v567 = vld [vmem:[%s566] sm:$0xf]
      %v569 = vsel %vm507, %v563, 0
      %v572 = vsel %vm507, %v565, 0
      %574 = vmatpush.bf16.xpose.msra.mxu0 0
      %575 = vmatpush.bf16.xpose.msra.mxu0 0
      %576 = vmatpush.bf16.xpose.msra.mxu0 0
      %577 = vmatpush.bf16.xpose.msra.mxu0 0
      %578 = vmatpush.bf16.xpose.msra.mxu0 0
      %579 = vmatpush.bf16.xpose.msra.mxu0 0
      %580 = vmatpush.bf16.xpose.msra.mxu0 0
      %581 = vmatpush.bf16.xpose.msra.mxu0 %v572
      %582 = vmatmul.bf16.gmra.mxu0 %v569
      %v583 = vpop.f32.mrf.mxu0
      %v584 = vadd.f32 %v505, %v583
      %v585 = vpop.f32.mrf.mxu0
      %586 = vdwg.mxu0
      %v587 = vsel %vm507, %v584, -inf
      %588 = vmax.xlane.f32.xlu0 %v587
      %v589 = vpop.xlane.xlu0 %588
      %v590 = vsub.f32 %v584, %v589
      %v591 = vmul.f32 %v590, 1.442695
      %v592 = vpow.pop %v591
      %v593 = vsel %vm507, %v592, 0.0
      %594 = vadd.xlane.f32.xlu0 %v593
      %v595 = vpop.xlane.xlu0 %594
      %v596 = vrcp.pop %v595
      %v597 = vmul.f32 %v592, %v596
      %v598 = vpack.c.bf16 %v597, %v597
      %v600 = vsel %vm507, %v598, 0
      %v603 = vsel %vm542, %v567, 0
      %605 = vmatpush.bf16.msra.mxu0 0
      %606 = vmatpush.bf16.msra.mxu0 0
      %607 = vmatpush.bf16.msra.mxu0 0
      %608 = vmatpush.bf16.msra.mxu0 0
      %609 = vmatpush.bf16.msra.mxu0 0
      %610 = vmatpush.bf16.msra.mxu0 0
      %611 = vmatpush.bf16.msra.mxu0 0
      %612 = vmatpush.bf16.msra.mxu0 %v603
      %613 = vmatmul.bf16.gmra.mxu0 %v600
      %v614 = vpop.f32.mrf.mxu0
      %v615 = vadd.f32 0.0, %v614
      %v616 = vpop.f32.mrf.mxu0
      %617 = vdwg.mxu0
      %v618 = vpack.c.bf16 %v615, %v615
      %620 = vrot.lane.b32.xlu0 %v618, 8
      %v621 = vpop.permute.xlu0 %620
      %vm623 = vcmask 126016
      %624 = vst.msk [vmem:[#allocation2] sm:$0xf] %vm623, %v621
      %s625 = scalar_lea.vmem %s464, 8
      %v626 = vld [vmem:[%s625] sm:$0xf]
      %s627 = scalar_lea.vmem %s469, 8
      %v628 = vld [vmem:[%s627] sm:$0xf]
      %s629 = scalar_lea.vmem %s474, 8
      %v630 = vld [vmem:[%s629] sm:$0xf]
      %v632 = vsel %vm507, %v626, 0
      %v635 = vsel %vm507, %v628, 0
      %637 = vmatpush.bf16.xpose.msra.mxu0 0
      %638 = vmatpush.bf16.xpose.msra.mxu0 0
      %639 = vmatpush.bf16.xpose.msra.mxu0 0
      %640 = vmatpush.bf16.xpose.msra.mxu0 0
      %641 = vmatpush.bf16.xpose.msra.mxu0 0
      %642 = vmatpush.bf16.xpose.msra.mxu0 0
      %643 = vmatpush.bf16.xpose.msra.mxu0 0
      %644 = vmatpush.bf16.xpose.msra.mxu0 %v635
      %645 = vmatmul.bf16.gmra.mxu0 %v632
      %v646 = vpop.f32.mrf.mxu0
      %v647 = vadd.f32 %v505, %v646
      %v648 = vpop.f32.mrf.mxu0
      %649 = vdwg.mxu0
      %v650 = vsel %vm507, %v647, -inf
      %651 = vmax.xlane.f32.xlu0 %v650
      %v652 = vpop.xlane.xlu0 %651
      %v653 = vsub.f32 %v647, %v652
      %v654 = vmul.f32 %v653, 1.442695
      %v655 = vpow.pop %v654
      %v656 = vsel %vm507, %v655, 0.0
      %657 = vadd.xlane.f32.xlu0 %v656
      %v658 = vpop.xlane.xlu0 %657
      %v659 = vrcp.pop %v658
      %v660 = vmul.f32 %v655, %v659
      %v661 = vpack.c.bf16 %v660, %v660
      %v663 = vsel %vm507, %v661, 0
      %v666 = vsel %vm542, %v630, 0
      %668 = vmatpush.bf16.msra.mxu0 0
      %669 = vmatpush.bf16.msra.mxu0 0
      %670 = vmatpush.bf16.msra.mxu0 0
      %671 = vmatpush.bf16.msra.mxu0 0
      %672 = vmatpush.bf16.msra.mxu0 0
      %673 = vmatpush.bf16.msra.mxu0 0
      %674 = vmatpush.bf16.msra.mxu0 0
      %675 = vmatpush.bf16.msra.mxu0 %v666
      %676 = vmatmul.bf16.gmra.mxu0 %v663
      %v677 = vpop.f32.mrf.mxu0
      %v678 = vadd.f32 0.0, %v677
      %v679 = vpop.f32.mrf.mxu0
      %680 = vdwg.mxu0
      %v681 = vpack.c.bf16 %v678, %v678
      %683 = vrot.lane.b32.xlu0 %v681, 16
      %v684 = vpop.permute.xlu0 %683
      %vm686 = vcmask 191616
      %687 = vst.msk [vmem:[#allocation2] sm:$0xf] %vm686, %v684
      %s688 = scalar_lea.vmem %s464, 12
      %v689 = vld [vmem:[%s688] sm:$0xf]
      %s690 = scalar_lea.vmem %s469, 12
      %v691 = vld [vmem:[%s690] sm:$0xf]
      %s692 = scalar_lea.vmem %s474, 12
      %v693 = vld [vmem:[%s692] sm:$0xf]
      %v695 = vsel %vm507, %v689, 0
      %v698 = vsel %vm507, %v691, 0
      %700 = vmatpush.bf16.xpose.msra.mxu0 0
      %701 = vmatpush.bf16.xpose.msra.mxu0 0
      %702 = vmatpush.bf16.xpose.msra.mxu0 0
      %703 = vmatpush.bf16.xpose.msra.mxu0 0
      %704 = vmatpush.bf16.xpose.msra.mxu0 0
      %705 = vmatpush.bf16.xpose.msra.mxu0 0
      %706 = vmatpush.bf16.xpose.msra.mxu0 0
      %707 = vmatpush.bf16.xpose.msra.mxu0 %v698
      %708 = vmatmul.bf16.gmra.mxu0 %v695
      %v709 = vpop.f32.mrf.mxu0
      %v710 = vadd.f32 %v505, %v709
      %v711 = vpop.f32.mrf.mxu0
      %712 = vdwg.mxu0
      %v713 = vsel %vm507, %v710, -inf
      %714 = vmax.xlane.f32.xlu0 %v713
      %v715 = vpop.xlane.xlu0 %714
      %v716 = vsub.f32 %v710, %v715
      %v717 = vmul.f32 %v716, 1.442695
      %v718 = vpow.pop %v717
      %v719 = vsel %vm507, %v718, 0.0
      %720 = vadd.xlane.f32.xlu0 %v719
      %v721 = vpop.xlane.xlu0 %720
      %v722 = vrcp.pop %v721
      %v723 = vmul.f32 %v718, %v722
      %v724 = vpack.c.bf16 %v723, %v723
      %v726 = vsel %vm507, %v724, 0
      %v729 = vsel %vm542, %v693, 0
      %731 = vmatpush.bf16.msra.mxu0 0
      %732 = vmatpush.bf16.msra.mxu0 0
      %733 = vmatpush.bf16.msra.mxu0 0
      %734 = vmatpush.bf16.msra.mxu0 0
      %735 = vmatpush.bf16.msra.mxu0 0
      %736 = vmatpush.bf16.msra.mxu0 0
      %737 = vmatpush.bf16.msra.mxu0 0
      %738 = vmatpush.bf16.msra.mxu0 %v729
      %739 = vmatmul.bf16.gmra.mxu0 %v726
      %v740 = vpop.f32.mrf.mxu0
      %v741 = vadd.f32 0.0, %v740
      %v742 = vpop.f32.mrf.mxu0
      %743 = vdwg.mxu0
      %v744 = vpack.c.bf16 %v741, %v741
      %746 = vrot.lane.b32.xlu0 %v744, 24
      %v747 = vpop.permute.xlu0 %746
      %vm749 = vcmask 257216
      %750 = vst.msk [vmem:[#allocation2] sm:$0xf] %vm749, %v747
      %v751 = vld [vmem:[#allocation2] sm:$0xf]
      %v752 = vld [vmem:[%s6] sm:$0xf]
      %v753 = vld [vmem:[%s6 + $0x4] sm:$0xf]
      %v754 = vld [vmem:[%s6 + $0x8] sm:$0xf]
      %v755 = vld [vmem:[%s6 + $0xc] sm:$0xf]
      %v756 = vld [vmem:[%s7] sm:$0x1]
      %v758 = vperm.slane %v756, 0
      %v764 = vunpack.c.l.b16 %v752
      %v765 = vunpack.c.l.b16 %v753
      %v766 = vunpack.c.l.b16 %v754
      %v767 = vunpack.c.l.b16 %v755
      %v768 = vpack.c.b16 %v765, %v764
      %v769 = vpack.c.b16 %v767, %v766
      %vm772 = vcmask 261120
      %v774 = vsel %vm772, %v751, 0
      %776 = vmatpush.bf16.msra.mxu0 0
      %777 = vmatpush.bf16.msra.mxu0 0
      %778 = vmatpush.bf16.msra.mxu0 0
      %779 = vmatpush.bf16.msra.mxu0 0
      %780 = vmatpush.bf16.msra.mxu0 0
      %781 = vmatpush.bf16.msra.mxu0 0
      %782 = vmatpush.bf16.msra.mxu0 %v769
      %783 = vmatpush.bf16.msra.mxu0 %v768
      %784 = vmatmul.bf16.gmra.mxu0 %v774
      %v785 = vpop.f32.mrf.mxu0
      %v786 = vadd.f32 %v758, %v785
      %v787 = vpop.f32.mrf.mxu0
      %788 = vdwg.mxu0
      %v789 = vld [vmem:[%s484] sm:$0xf]
      %v790 = vunpack.c.l.bf16 %v789
      %v791 = vadd.f32 %v786, %v790
      %v792 = vsel %vm772, %v791, 0.0
      %793 = vadd.xlane.f32.xlu0 %v792
      %v794 = vpop.xlane.xlu0 %793
      %v795 = vrcp.pop 32.0
      %v796 = vmul.f32 32.0, %v795
      %v797 = vsub.f32 1.0, %v796
      %v798 = vmul.f32 %v795, %v797
      %v799 = vadd.f32 %v795, %v798
      %vm800 = vweird.f32 %v795
      %v801 = vsel %vm800, %v795, %v799
      %v802 = vmul.f32 %v794, %v801
      %v803 = vsub.f32 %v791, %v802
      %v804 = vmul.f32 %v803, %v803
      %v805 = vsel %vm772, %v804, 0.0
      %806 = vadd.xlane.f32.xlu0 %v805
      %v807 = vpop.xlane.xlu0 %806
      %v808 = vmul.f32 %v807, %v801
      %v809 = vadd.f32 %v808, 1e-05
      %v810 = vrsqrt.pop %v809
      %v811 = vmul.f32 %v810, %v809
      %v812 = vmul.f32 %v811, %v810
      %v813 = vmul.f32 0.5, %v812
      %v814 = vsub.f32 1.5, %v813
      %v815 = vmul.f32 %v810, %v814
      %vm816 = vweird.f32 %v809
      %vm817 = vweird.f32 %v810
      %vm818 = vmor %vm816, %vm817
      %v819 = vsel %vm818, %v810, %v815
      %v820 = vmul.f32 %v803, %v819
      %v821 = vld [vmem:[%s8] sm:$0x1]
      %v823 = vperm.slane %v821, 0
      %v825 = vmul.f32 %v820, %v823
      %v826 = vld [vmem:[%s9] sm:$0x1]
      %v828 = vperm.slane %v826, 0
      %v830 = vadd.f32 %v825, %v828
      %v831 = vld [vmem:[%s491] sm:$0xff]
      %833 = vset.pattern.permute.xlu0 0
      %834 = vperm.xlu0 %833, %v831
      %v835 = vpop.permute.xlu0 %834
      %v837 = vmul.f32 %v830, %v835
      %v838 = vpack.c.bf16 %v837, %v837
      %vm839 = vcmask 257024
      %840 = vst.msk [vmem:[%s498] sm:$0xf] %vm839, %v838
      %p841 = scmp.lt.s32.totalorder %s25, 1
      %s842 = scalar_select %p841, %s25, 1
      %p843 = scmp.lt.s32.totalorder %s26, 0
      %s844 = scalar_select %p843, %s26, 0
      %s845 = sadd.s32 %s844, %s842
      %s846 = smul.addr %s845, 4
      %s847 = scalar_lea.vmem %s10, %s846
      // Predicated region
      $region61: #{_lambda_.20} parent=59 // pred_check
        %p848 = pneg %p299
      $region62: #{_lambda_.20} parent=59 // pred_check_branch
        %850 = sbr.rel (%p848) target = $region64
      $region63: #{_lambda_.20} parent=59 // pred_region
        _
      $region64: #{_lambda_.20} parent=59 // pred_fallthru
        _
    $region60: #{_lambda_.20} parent=5 // pred_fallthru
      _
    %p851 = scmp.le.s32.totalorder 2, %s16
    // Predicated region
    $region65: #{_lambda_.20} parent=5 // pred_check
      %p852 = pneg %p851
    $region66: #{_lambda_.20} parent=5 // pred_check_branch
      %854 = sbr.rel (%p852) target = $region68
    $region67: #{_lambda_.20} parent=5 // pred_region
      %s855 = ssub.s32 %s16, 2
      // Predicated region
      $region69: #{_lambda_.20} parent=67 // pred_check
        %p856 = pneg %p305
      $region70: #{_lambda_.20} parent=67 // pred_check_branch
        %858 = sbr.rel (%p856) target = $region72
      $region71: #{_lambda_.20} parent=67 // pred_region
        %p859 = scmp.lt.s32.totalorder %s27, 1
        %s860 = scalar_select %p859, %s27, 1
        %p861 = scmp.lt.s32.totalorder %s28, 0
        %s862 = scalar_select %p861, %s28, 0
        %s863 = sadd.s32 %s862, %s860
        %s864 = smul.addr %s863, 4
        %s865 = scalar_lea.vmem %s10, %s864
      $region72: #{_lambda_.20} parent=67 // pred_fallthru
        _
    $region68: #{_lambda_.20} parent=5 // pred_fallthru
      _
  $region6: #{_lambda_.20} parent=0 // loop_footer
    %s20 = sadd.s32 1, %s16
  $region7: #{_lambda_.20} parent=0 // loop_footer_branch
    %15 = sbr.rel target = $region3
  $region8: #{_lambda_.20} parent=0 // loop_exit
    _

// kernel: _lambda_.25
$region0: #{_lambda_.25}
  #allocation0 [shape = 'u32[]', space=smem, size = 0x4, offset = 0x4, fixed_abs, tag = 'smem constant byte address 0x4 - core index']
  #allocation1 [shape = 'u32[72,128]{1,0:T(1,128)}', space=vmem, size = 0x9000, scoped, tag = 'internal scratch']
  #allocation2 [shape = 'f32[14,96]{1,0:T(8,128)}', space=vmem, size = 0x2000, scoped, tag = 'scratch operand']
  %s0 = inlined_call_operand.vmem [shape: bf16[14,32], index: 0, kind: input, shape index: {}]
  %s1 = inlined_call_operand.vmem [shape: bf16[32,96], index: 1, kind: input, shape index: {}]
  %s2 = inlined_call_operand.vmem [shape: f32[1,96], index: 2, kind: input, shape index: {}]
  %s3 = inlined_call_operand.vmem [shape: bf16[14,96], index: 3, kind: output, shape index: {}]
  %s4 = sld [smem:[#allocation0]]
  $region30: #{_lambda_.25} parent=0
    _
  %s6 = ssub.s32 1, %s4
  %s7 = scalar_select 0, %s6, %s4
  // Predicated region
  $region2: #{_lambda_.25} parent=0 // pred_check
    _
  $region3: #{_lambda_.25} parent=0 // pred_check_branch
    %9 = sbr.rel (0) target = $region5
  $region4: #{_lambda_.25} parent=0 // pred_region
    _
  $region5: #{_lambda_.25} parent=0 // pred_fallthru
    _
  // Predicated region
  $region6: #{_lambda_.25} parent=0 // pred_check
    _
  $region7: #{_lambda_.25} parent=0 // pred_check_branch
    %11 = sbr.rel (0) target = $region9
  $region8: #{_lambda_.25} parent=0 // pred_region
    _
  $region9: #{_lambda_.25} parent=0 // pred_fallthru
    _
  // Predicated region
  $region10: #{_lambda_.25} parent=0 // pred_check
    _
  $region11: #{_lambda_.25} parent=0 // pred_check_branch
    %13 = sbr.rel (0) target = $region13
  $region12: #{_lambda_.25} parent=0 // pred_region
    _
  $region13: #{_lambda_.25} parent=0 // pred_fallthru
    _
  %p15 = scmp.eq.s32.totalorder 0, 0
  // Predicated region
  $region14: #{_lambda_.25} parent=0 // pred_check
    %p16 = pneg %p15
  $region15: #{_lambda_.25} parent=0 // pred_check_branch
    %18 = sbr.rel (%p16) target = $region17
  $region16: #{_lambda_.25} parent=0 // pred_region
    %vm19 = vcmask 785408
    %20 = vst.msk [vmem:[#allocation2] sm:$0xff] %vm19, 0.0
    %vm21 = vcmask 783360
    %22 = vst.msk [vmem:[#allocation2 + $0x8] sm:$0x3f] %vm21, 0.0
  $region17: #{_lambda_.25} parent=0 // pred_fallthru
    _
  %v23 = vld [vmem:[#allocation2] sm:$0xff]
  %v24 = vld [vmem:[#allocation2 + $0x8] sm:$0x3f]
  %v25 = vld [vmem:[%s0] sm:$0xf]
  %v26 = vld [vmem:[%s0 + $0x4] sm:$0x7]
  %v27 = vld [vmem:[%s1] sm:$0xf]
  %v28 = vld [vmem:[%s1 + $0x4] sm:$0xf]
  %v29 = vld [vmem:[%s1 + $0x8] sm:$0xf]
  %v30 = vld [vmem:[%s1 + $0xc] sm:$0xf]
  %v33 = vunpack.c.l.b16 %v25
  %v34 = vunpack.c.l.b16 %v26
  %v35 = vpack.c.b16 %v34, %v33
  %v40 = vunpack.c.l.b16 %v27
  %v41 = vunpack.c.l.b16 %v28
  %v42 = vunpack.c.l.b16 %v29
  %v43 = vunpack.c.l.b16 %v30
  %v44 = vpack.c.b16 %v41, %v40
  %v45 = vpack.c.b16 %v43, %v42
  %vm48 = vcmask 261120
  %v50 = vsel %vm48, %v35, 0
  %52 = vmatpush.bf16.msra.mxu0 0
  %53 = vmatpush.bf16.msra.mxu0 0
  %54 = vmatpush.bf16.msra.mxu0 0
  %55 = vmatpush.bf16.msra.mxu0 0
  %56 = vmatpush.bf16.msra.mxu0 0
  %57 = vmatpush.bf16.msra.mxu0 0
  %58 = vmatpush.bf16.msra.mxu0 %v45
  %59 = vmatpush.bf16.msra.mxu0 %v44
  %60 = vmatmul.bf16.gmra.mxu0 %v50
  %v61 = vpop.f32.mrf.mxu0
  %v62 = vadd.f32 0.0, %v61
  %v63 = vpop.f32.mrf.mxu0
  %v64 = vadd.f32 0.0, %v63
  %65 = vdwg.mxu0
  %v66 = vadd.f32 %v23, %v62
  %v67 = vadd.f32 %v24, %v64
  %vm68 = vcmask 785408
  %69 = vst.msk [vmem:[#allocation2] sm:$0xff] %vm68, %v66
  %vm70 = vcmask 783360
  %71 = vst.msk [vmem:[#allocation2 + $0x8] sm:$0x3f] %vm70, %v67
  // Predicated region
  $region18: #{_lambda_.25} parent=0 // pred_check
    %p72 = pneg %p15
  $region19: #{_lambda_.25} parent=0 // pred_check_branch
    %74 = sbr.rel (%p72) target = $region21
  $region20: #{_lambda_.25} parent=0 // pred_region
    %v75 = vld [vmem:[#allocation2] sm:$0xff]
    %v76 = vld [vmem:[#allocation2 + $0x8] sm:$0x3f]
    %v77 = vld [vmem:[%s2] sm:$0x1]
    %v79 = vperm.slane %v77, 0
    %v81 = vadd.f32 %v75, %v79
    %v82 = vadd.f32 %v76, %v79
    %v83 = vpack.c.bf16 %v81, %v81
    %v84 = vpack.c.bf16 %v82, %v82
    %vm85 = vcmask 781312
    %86 = vst.msk [vmem:[%s3] sm:$0xf] %vm85, %v83
    %vm87 = vcmask 780288
    %88 = vst.msk [vmem:[%s3 + $0x4] sm:$0x7] %vm87, %v84
  $region21: #{_lambda_.25} parent=0 // pred_fallthru
    _
  // Predicated region
  $region22: #{_lambda_.25} parent=0 // pred_check
    _
  $region23: #{_lambda_.25} parent=0 // pred_check_branch
    %90 = sbr.rel (0) target = $region25
  $region24: #{_lambda_.25} parent=0 // pred_region
    _
  $region25: #{_lambda_.25} parent=0 // pred_fallthru
    _
  // Predicated region
  $region26: #{_lambda_.25} parent=0 // pred_check
    _
  $region27: #{_lambda_.25} parent=0 // pred_check_branch
    %92 = sbr.rel (0) target = $region29
  $region28: #{_lambda_.25} parent=0 // pred_region
    _
  $region29: #{_lambda_.25} parent=0 // pred_fallthru
    _

// kernel: _lambda_.27
$region0: #{_lambda_.27}
  #allocation0 [shape = 'u32[]', space=smem, size = 0x4, offset = 0x4, fixed_abs, tag = 'smem constant byte address 0x4 - core index']
  #allocation1 [shape = 'u32[72,128]{1,0:T(1,128)}', space=vmem, size = 0x9000, scoped, tag = 'internal scratch']
  #allocation2 [shape = 'f32[14,32]{1,0:T(8,128)}', space=vmem, size = 0x2000, scoped, tag = 'scratch operand']
  %s0 = inlined_call_operand.vmem [shape: bf16[14,32], index: 0, kind: input, shape index: {}]
  %s1 = inlined_call_operand.vmem [shape: bf16[32,32], index: 1, kind: input, shape index: {}]
  %s2 = inlined_call_operand.vmem [shape: f32[1,32], index: 2, kind: input, shape index: {}]
  %s3 = inlined_call_operand.vmem [shape: bf16[14,32], index: 3, kind: output, shape index: {}]
  %s4 = sld [smem:[#allocation0]]
  $region30: #{_lambda_.27} parent=0
    _
  %s6 = ssub.s32 1, %s4
  %s7 = scalar_select 0, %s6, %s4
  // Predicated region
  $region2: #{_lambda_.27} parent=0 // pred_check
    _
  $region3: #{_lambda_.27} parent=0 // pred_check_branch
    %9 = sbr.rel (0) target = $region5
  $region4: #{_lambda_.27} parent=0 // pred_region
    _
  $region5: #{_lambda_.27} parent=0 // pred_fallthru
    _
  // Predicated region
  $region6: #{_lambda_.27} parent=0 // pred_check
    _
  $region7: #{_lambda_.27} parent=0 // pred_check_branch
    %11 = sbr.rel (0) target = $region9
  $region8: #{_lambda_.27} parent=0 // pred_region
    _
  $region9: #{_lambda_.27} parent=0 // pred_fallthru
    _
  // Predicated region
  $region10: #{_lambda_.27} parent=0 // pred_check
    _
  $region11: #{_lambda_.27} parent=0 // pred_check_branch
    %13 = sbr.rel (0) target = $region13
  $region12: #{_lambda_.27} parent=0 // pred_region
    _
  $region13: #{_lambda_.27} parent=0 // pred_fallthru
    _
  %p15 = scmp.eq.s32.totalorder 0, 0
  // Predicated region
  $region14: #{_lambda_.27} parent=0 // pred_check
    %p16 = pneg %p15
  $region15: #{_lambda_.27} parent=0 // pred_check_branch
    %18 = sbr.rel (%p16) target = $region17
  $region16: #{_lambda_.27} parent=0 // pred_region
    %vm19 = vcmask 261120
    %20 = vst.msk [vmem:[#allocation2] sm:$0xff] %vm19, 0.0
    %vm21 = vcmask 259072
    %22 = vst.msk [vmem:[#allocation2 + $0x8] sm:$0x3f] %vm21, 0.0
  $region17: #{_lambda_.27} parent=0 // pred_fallthru
    _
  %v23 = vld [vmem:[#allocation2] sm:$0xff]
  %v24 = vld [vmem:[#allocation2 + $0x8] sm:$0x3f]
  %v25 = vld [vmem:[%s0] sm:$0xf]
  %v26 = vld [vmem:[%s0 + $0x4] sm:$0x7]
  %v27 = vld [vmem:[%s1] sm:$0xf]
  %v28 = vld [vmem:[%s1 + $0x4] sm:$0xf]
  %v29 = vld [vmem:[%s1 + $0x8] sm:$0xf]
  %v30 = vld [vmem:[%s1 + $0xc] sm:$0xf]
  %v33 = vunpack.c.l.b16 %v25
  %v34 = vunpack.c.l.b16 %v26
  %v35 = vpack.c.b16 %v34, %v33
  %v40 = vunpack.c.l.b16 %v27
  %v41 = vunpack.c.l.b16 %v28
  %v42 = vunpack.c.l.b16 %v29
  %v43 = vunpack.c.l.b16 %v30
  %v44 = vpack.c.b16 %v41, %v40
  %v45 = vpack.c.b16 %v43, %v42
  %vm48 = vcmask 261120
  %v50 = vsel %vm48, %v35, 0
  %52 = vmatpush.bf16.msra.mxu0 0
  %53 = vmatpush.bf16.msra.mxu0 0
  %54 = vmatpush.bf16.msra.mxu0 0
  %55 = vmatpush.bf16.msra.mxu0 0
  %56 = vmatpush.bf16.msra.mxu0 0
  %57 = vmatpush.bf16.msra.mxu0 0
  %58 = vmatpush.bf16.msra.mxu0 %v45
  %59 = vmatpush.bf16.msra.mxu0 %v44
  %60 = vmatmul.bf16.gmra.mxu0 %v50
  %v61 = vpop.f32.mrf.mxu0
  %v62 = vadd.f32 0.0, %v61
  %v63 = vpop.f32.mrf.mxu0
  %v64 = vadd.f32 0.0, %v63
  %65 = vdwg.mxu0
  %v66 = vadd.f32 %v23, %v62
  %v67 = vadd.f32 %v24, %v64
  %68 = vst.msk [vmem:[#allocation2] sm:$0xff] %vm48, %v66
  %vm69 = vcmask 259072
  %70 = vst.msk [vmem:[#allocation2 + $0x8] sm:$0x3f] %vm69, %v67
  // Predicated region
  $region18: #{_lambda_.27} parent=0 // pred_check
    %p71 = pneg %p15
  $region19: #{_lambda_.27} parent=0 // pred_check_branch
    %73 = sbr.rel (%p71) target = $region21
  $region20: #{_lambda_.27} parent=0 // pred_region
    %v74 = vld [vmem:[#allocation2] sm:$0xff]
    %v75 = vld [vmem:[#allocation2 + $0x8] sm:$0x3f]
    %v76 = vld [vmem:[%s2] sm:$0x1]
    %v78 = vperm.slane %v76, 0
    %v80 = vadd.f32 %v74, %v78
    %v81 = vadd.f32 %v75, %v78
    %v82 = vpack.c.bf16 %v80, %v80
    %v83 = vpack.c.bf16 %v81, %v81
    %vm84 = vcmask 257024
    %85 = vst.msk [vmem:[%s3] sm:$0xf] %vm84, %v82
    %vm86 = vcmask 256000
    %87 = vst.msk [vmem:[%s3 + $0x4] sm:$0x7] %vm86, %v83
  $region21: #{_lambda_.27} parent=0 // pred_fallthru
    _
  // Predicated region
  $region22: #{_lambda_.27} parent=0 // pred_check
    _
  $region23: #{_lambda_.27} parent=0 // pred_check_branch
    %89 = sbr.rel (0) target = $region25
  $region24: #{_lambda_.27} parent=0 // pred_region
    _
  $region25: #{_lambda_.27} parent=0 // pred_fallthru
    _
  // Predicated region
  $region26: #{_lambda_.27} parent=0 // pred_check
    _
  $region27: #{_lambda_.27} parent=0 // pred_check_branch
    %91 = sbr.rel (0) target = $region29
  $region28: #{_lambda_.27} parent=0 // pred_region
    _
  $region29: #{_lambda_.27} parent=0 // pred_fallthru
    _

// kernel: _lambda_.29
$region0: #{_lambda_.29}
  #allocation0 [shape = 'u32[]', space=smem, size = 0x4, offset = 0x4, fixed_abs, tag = 'smem constant byte address 0x4 - core index']
  #allocation1 [shape = 'u32[72,128]{1,0:T(1,128)}', space=vmem, size = 0x9000, scoped, tag = 'internal scratch']
  #allocation2 [shape = 'bf16[7,32]{1,0:T(8,128)(2,1)}', space=vmem, size = 0x800, scoped, tag = 'scratch operand']
  %s0 = inlined_call_operand.vmem [shape: bf16[2,4,7,8], index: 0, kind: input, shape index: {}]
  %s1 = inlined_call_operand.vmem [shape: bf16[2,4,8,8], index: 1, kind: input, shape index: {}]
  %s2 = inlined_call_operand.vmem [shape: bf16[2,4,8,8], index: 2, kind: input, shape index: {}]
  %s3 = inlined_call_operand.vmem [shape: f32[2,1,8], index: 3, kind: input, shape index: {}]
  %s4 = inlined_call_operand.vmem [shape: bf16[2,7,32], index: 4, kind: input, shape index: {}]
  %s5 = inlined_call_operand.vmem [shape: f32[2,7,1], index: 5, kind: input, shape index: {}]
  %s6 = inlined_call_operand.vmem [shape: bf16[32,32], index: 6, kind: input, shape index: {}]
  %s7 = inlined_call_operand.vmem [shape: f32[1,32], index: 7, kind: input, shape index: {}, may-alias: {7,9}]
  %s8 = inlined_call_operand.vmem [shape: f32[1,32], index: 8, kind: input, shape index: {}]
  %s9 = inlined_call_operand.vmem [shape: f32[1,32], index: 9, kind: input, shape index: {}, may-alias: {7,9}]
  %s10 = inlined_call_operand.vmem [shape: bf16[2,7,32], index: 10, kind: output, shape index: {}]
  %s11 = sld [smem:[#allocation0]]
  $region73: #{_lambda_.29} parent=0
    _
  %s13 = ssub.s32 1, %s11
  %s14 = scalar_select 0, %s13, %s11
  loop: start=0, step=1, limit=4
  $region2: #{_lambda_.29} parent=0 // loop_pre_header
    _
  $region3: #{_lambda_.29} parent=0 // loop_header
    %s16 = sphi 0, %s20
    %p17 = scmp.ge.s32.totalorder %s16, 4
    %s23 = sphi 0, %s35
    %s24 = sphi 0, %s31
    %s25 = sphi 0, %s23
    %s26 = sphi 0, %s24
    %s27 = sphi 0, %s25
    %s28 = sphi 0, %s26
    %s40 = sphi 0, %s42
    %s43 = sphi 0, %s40
    %s44 = sphi 0, %s43
    %s60 = sphi 0, %s44
    %s66 = sphi 0, %s68
    %s69 = sphi 0, %s66
    %s70 = sphi 0, %s69
    %s86 = sphi 0, %s70
    %s92 = sphi 0, %s94
    %s95 = sphi 0, %s92
    %s96 = sphi 0, %s95
    %s112 = sphi 0, %s96
    %s118 = sphi 0, %s120
    %s121 = sphi 0, %s118
    %s122 = sphi 0, %s121
    %s138 = sphi 0, %s122
    %s146 = sphi 0, %s148
    %s149 = sphi 0, %s146
    %s150 = sphi 0, %s149
    %s166 = sphi 0, %s150
    %s174 = sphi 0, %s176
    %s177 = sphi 0, %s174
    %s178 = sphi 0, %s177
    %s194 = sphi 0, %s178
    %s198 = sphi 0, %s198
    %s200 = sphi 0, %s198
    %s201 = sphi 0, %s200
    %s215 = sphi 0, %s201
    %s219 = sphi 0, %s219
    %s221 = sphi 0, %s219
    %s222 = sphi 0, %s221
    %s236 = sphi 0, %s222
    %s240 = sphi 0, %s240
    %s242 = sphi 0, %s240
    %s243 = sphi 0, %s242
    %s257 = sphi 0, %s243
    %s261 = sphi 0, %s261
    %s263 = sphi 0, %s261
    %s264 = sphi 0, %s263
    %s278 = sphi 0, %s264
    %s286 = sphi 0, %s288
    %s289 = sphi 0, %s286
    %s290 = sphi 0, %s289
    %s306 = sphi 0, %s290
  $region4: #{_lambda_.29} parent=0 // loop_header_branch
    %19 = sbr.rel (%p17) target = $region8
  $region5: #{_lambda_.29} parent=0 // loop_body
    %s21 = ssub.s32 %s16, 1
    %s22 = ssub.s32 %s16, 2
    %s29 = sadd.s32 1, %s24
    %p30 = scmp.ge.s32.totalorder %s29, 1
    %s31 = scalar_select %p30, 0, %s29
    %s32 = sadd.s32 1, %s23
    %s33 = scalar_select %p30, %s32, %s23
    %p34 = scmp.ge.s32.totalorder %s33, 2
    %s35 = scalar_select %p34, 0, %s33
    %s36 = ssub.s32 %s23, %s35
    %s37 = ssub.s32 %s24, %s31
    %s38 = sor.u32 %s36, %s37
    %p39 = scmp.eq.s32.totalorder %s38, 0
    %s41 = sadd.s32 %s40, 1
    %s42 = scalar_select %p39, %s40, %s41
    %p45 = pneg %p39
    %p46 = scmp.eq.s32.totalorder %s16, 1
    %p47 = por %p45, %p46
    %p48 = scmp.ne.s32.totalorder %s40, %s43
    %p49 = scmp.eq.s32.totalorder %s16, 0
    %p50 = por %p48, %p49
    %p51 = scmp.ne.s32.totalorder %s40, %s43
    %p52 = scmp.eq.s32.totalorder %s21, 1
    %p53 = por %p51, %p52
    %p54 = scmp.ne.s32.totalorder %s43, %s44
    %p55 = scmp.eq.s32.totalorder %s21, 0
    %p56 = por %p54, %p55
    %p57 = scmp.ne.s32.totalorder %s43, %s44
    %p58 = scmp.eq.s32.totalorder %s22, 1
    %p59 = por %p57, %p58
    %p61 = scmp.ne.s32.totalorder %s44, %s60
    %p62 = scmp.eq.s32.totalorder %s22, 0
    %p63 = por %p61, %p62
    %s64 = ssub.s32 %s23, %s35
    %p65 = scmp.eq.s32.totalorder %s64, 0
    %s67 = sadd.s32 %s66, 1
    %s68 = scalar_select %p65, %s66, %s67
    %p71 = pneg %p65
    %p72 = scmp.eq.s32.totalorder %s16, 1
    %p73 = por %p71, %p72
    %p74 = scmp.ne.s32.totalorder %s66, %s69
    %p75 = scmp.eq.s32.totalorder %s16, 0
    %p76 = por %p74, %p75
    %p77 = scmp.ne.s32.totalorder %s66, %s69
    %p78 = scmp.eq.s32.totalorder %s21, 1
    %p79 = por %p77, %p78
    %p80 = scmp.ne.s32.totalorder %s69, %s70
    %p81 = scmp.eq.s32.totalorder %s21, 0
    %p82 = por %p80, %p81
    %p83 = scmp.ne.s32.totalorder %s69, %s70
    %p84 = scmp.eq.s32.totalorder %s22, 1
    %p85 = por %p83, %p84
    %p87 = scmp.ne.s32.totalorder %s70, %s86
    %p88 = scmp.eq.s32.totalorder %s22, 0
    %p89 = por %p87, %p88
    %s90 = ssub.s32 %s23, %s35
    %p91 = scmp.eq.s32.totalorder %s90, 0
    %s93 = sadd.s32 %s92, 1
    %s94 = scalar_select %p91, %s92, %s93
    %p97 = pneg %p91
    %p98 = scmp.eq.s32.totalorder %s16, 1
    %p99 = por %p97, %p98
    %p100 = scmp.ne.s32.totalorder %s92, %s95
    %p101 = scmp.eq.s32.totalorder %s16, 0
    %p102 = por %p100, %p101
    %p103 = scmp.ne.s32.totalorder %s92, %s95
    %p104 = scmp.eq.s32.totalorder %s21, 1
    %p105 = por %p103, %p104
    %p106 = scmp.ne.s32.totalorder %s95, %s96
    %p107 = scmp.eq.s32.totalorder %s21, 0
    %p108 = por %p106, %p107
    %p109 = scmp.ne.s32.totalorder %s95, %s96
    %p110 = scmp.eq.s32.totalorder %s22, 1
    %p111 = por %p109, %p110
    %p113 = scmp.ne.s32.totalorder %s96, %s112
    %p114 = scmp.eq.s32.totalorder %s22, 0
    %p115 = por %p113, %p114
    %s116 = ssub.s32 %s23, %s35
    %p117 = scmp.eq.s32.totalorder %s116, 0
    %s119 = sadd.s32 %s118, 1
    %s120 = scalar_select %p117, %s118, %s119
    %p123 = pneg %p117
    %p124 = scmp.eq.s32.totalorder %s16, 1
    %p125 = por %p123, %p124
    %p126 = scmp.ne.s32.totalorder %s118, %s121
    %p127 = scmp.eq.s32.totalorder %s16, 0
    %p128 = por %p126, %p127
    %p129 = scmp.ne.s32.totalorder %s118, %s121
    %p130 = scmp.eq.s32.totalorder %s21, 1
    %p131 = por %p129, %p130
    %p132 = scmp.ne.s32.totalorder %s121, %s122
    %p133 = scmp.eq.s32.totalorder %s21, 0
    %p134 = por %p132, %p133
    %p135 = scmp.ne.s32.totalorder %s121, %s122
    %p136 = scmp.eq.s32.totalorder %s22, 1
    %p137 = por %p135, %p136
    %p139 = scmp.ne.s32.totalorder %s122, %s138
    %p140 = scmp.eq.s32.totalorder %s22, 0
    %p141 = por %p139, %p140
    %s142 = ssub.s32 %s23, %s35
    %s143 = ssub.s32 %s24, %s31
    %s144 = sor.u32 %s142, %s143
    %p145 = scmp.eq.s32.totalorder %s144, 0
    %s147 = sadd.s32 %s146, 1
    %s148 = scalar_select %p145, %s146, %s147
    %p151 = pneg %p145
    %p152 = scmp.eq.s32.totalorder %s16, 1
    %p153 = por %p151, %p152
    %p154 = scmp.ne.s32.totalorder %s146, %s149
    %p155 = scmp.eq.s32.totalorder %s16, 0
    %p156 = por %p154, %p155
    %p157 = scmp.ne.s32.totalorder %s146, %s149
    %p158 = scmp.eq.s32.totalorder %s21, 1
    %p159 = por %p157, %p158
    %p160 = scmp.ne.s32.totalorder %s149, %s150
    %p161 = scmp.eq.s32.totalorder %s21, 0
    %p162 = por %p160, %p161
    %p163 = scmp.ne.s32.totalorder %s149, %s150
    %p164 = scmp.eq.s32.totalorder %s22, 1
    %p165 = por %p163, %p164
    %p167 = scmp.ne.s32.totalorder %s150, %s166
    %p168 = scmp.eq.s32.totalorder %s22, 0
    %p169 = por %p167, %p168
    %s170 = ssub.s32 %s23, %s35
    %s171 = ssub.s32 %s24, %s31
    %s172 = sor.u32 %s170, %s171
    %p173 = scmp.eq.s32.totalorder %s172, 0
    %s175 = sadd.s32 %s174, 1
    %s176 = scalar_select %p173, %s174, %s175
    %p179 = pneg %p173
    %p180 = scmp.eq.s32.totalorder %s16, 1
    %p181 = por %p179, %p180
    %p182 = scmp.ne.s32.totalorder %s174, %s177
    %p183 = scmp.eq.s32.totalorder %s16, 0
    %p184 = por %p182, %p183
    %p185 = scmp.ne.s32.totalorder %s174, %s177
    %p186 = scmp.eq.s32.totalorder %s21, 1
    %p187 = por %p185, %p186
    %p188 = scmp.ne.s32.totalorder %s177, %s178
    %p189 = scmp.eq.s32.totalorder %s21, 0
    %p190 = por %p188, %p189
    %p191 = scmp.ne.s32.totalorder %s177, %s178
    %p192 = scmp.eq.s32.totalorder %s22, 1
    %p193 = por %p191, %p192
    %p195 = scmp.ne.s32.totalorder %s178, %s194
    %p196 = scmp.eq.s32.totalorder %s22, 0
    %p197 = por %p195, %p196
    %s199 = sadd.s32 %s198, 1
    %p202 = scmp.eq.s32.totalorder %s16, 1
    %p203 = scmp.ne.s32.totalorder %s198, %s200
    %p204 = scmp.eq.s32.totalorder %s16, 0
    %p205 = por %p203, %p204
    %p206 = scmp.ne.s32.totalorder %s198, %s200
    %p207 = scmp.eq.s32.totalorder %s21, 1
    %p208 = por %p206, %p207
    %p209 = scmp.ne.s32.totalorder %s200, %s201
    %p210 = scmp.eq.s32.totalorder %s21, 0
    %p211 = por %p209, %p210
    %p212 = scmp.ne.s32.totalorder %s200, %s201
    %p213 = scmp.eq.s32.totalorder %s22, 1
    %p214 = por %p212, %p213
    %p216 = scmp.ne.s32.totalorder %s201, %s215
    %p217 = scmp.eq.s32.totalorder %s22, 0
    %p218 = por %p216, %p217
    %s220 = sadd.s32 %s219, 1
    %p223 = scmp.eq.s32.totalorder %s16, 1
    %p224 = scmp.ne.s32.totalorder %s219, %s221
    %p225 = scmp.eq.s32.totalorder %s16, 0
    %p226 = por %p224, %p225
    %p227 = scmp.ne.s32.totalorder %s219, %s221
    %p228 = scmp.eq.s32.totalorder %s21, 1
    %p229 = por %p227, %p228
    %p230 = scmp.ne.s32.totalorder %s221, %s222
    %p231 = scmp.eq.s32.totalorder %s21, 0
    %p232 = por %p230, %p231
    %p233 = scmp.ne.s32.totalorder %s221, %s222
    %p234 = scmp.eq.s32.totalorder %s22, 1
    %p235 = por %p233, %p234
    %p237 = scmp.ne.s32.totalorder %s222, %s236
    %p238 = scmp.eq.s32.totalorder %s22, 0
    %p239 = por %p237, %p238
    %s241 = sadd.s32 %s240, 1
    %p244 = scmp.eq.s32.totalorder %s16, 1
    %p245 = scmp.ne.s32.totalorder %s240, %s242
    %p246 = scmp.eq.s32.totalorder %s16, 0
    %p247 = por %p245, %p246
    %p248 = scmp.ne.s32.totalorder %s240, %s242
    %p249 = scmp.eq.s32.totalorder %s21, 1
    %p250 = por %p248, %p249
    %p251 = scmp.ne.s32.totalorder %s242, %s243
    %p252 = scmp.eq.s32.totalorder %s21, 0
    %p253 = por %p251, %p252
    %p254 = scmp.ne.s32.totalorder %s242, %s243
    %p255 = scmp.eq.s32.totalorder %s22, 1
    %p256 = por %p254, %p255
    %p258 = scmp.ne.s32.totalorder %s243, %s257
    %p259 = scmp.eq.s32.totalorder %s22, 0
    %p260 = por %p258, %p259
    %s262 = sadd.s32 %s261, 1
    %p265 = scmp.eq.s32.totalorder %s16, 1
    %p266 = scmp.ne.s32.totalorder %s261, %s263
    %p267 = scmp.eq.s32.totalorder %s16, 0
    %p268 = por %p266, %p267
    %p269 = scmp.ne.s32.totalorder %s261, %s263
    %p270 = scmp.eq.s32.totalorder %s21, 1
    %p271 = por %p269, %p270
    %p272 = scmp.ne.s32.totalorder %s263, %s264
    %p273 = scmp.eq.s32.totalorder %s21, 0
    %p274 = por %p272, %p273
    %p275 = scmp.ne.s32.totalorder %s263, %s264
    %p276 = scmp.eq.s32.totalorder %s22, 1
    %p277 = por %p275, %p276
    %p279 = scmp.ne.s32.totalorder %s264, %s278
    %p280 = scmp.eq.s32.totalorder %s22, 0
    %p281 = por %p279, %p280
    %s282 = ssub.s32 %s23, %s35
    %s283 = ssub.s32 %s24, %s31
    %s284 = sor.u32 %s282, %s283
    %p285 = scmp.eq.s32.totalorder %s284, 0
    %s287 = sadd.s32 %s286, 1
    %s288 = scalar_select %p285, %s286, %s287
    %p291 = pneg %p285
    %p292 = scmp.eq.s32.totalorder %s16, 1
    %p293 = por %p291, %p292
    %p294 = scmp.ne.s32.totalorder %s286, %s289
    %p295 = scmp.eq.s32.totalorder %s16, 0
    %p296 = por %p294, %p295
    %p297 = scmp.ne.s32.totalorder %s286, %s289
    %p298 = scmp.eq.s32.totalorder %s21, 1
    %p299 = por %p297, %p298
    %p300 = scmp.ne.s32.totalorder %s289, %s290
    %p301 = scmp.eq.s32.totalorder %s21, 0
    %p302 = por %p300, %p301
    %p303 = scmp.ne.s32.totalorder %s289, %s290
    %p304 = scmp.eq.s32.totalorder %s22, 1
    %p305 = por %p303, %p304
    %p307 = scmp.ne.s32.totalorder %s290, %s306
    %p308 = scmp.eq.s32.totalorder %s22, 0
    %p309 = por %p307, %p308
    %p310 = scmp.le.s32.totalorder 1, %s16
    %p311 = scmp.lt.s32.totalorder %s16, 3
    %p312 = pnand %p310, %p311
    %p313 = pneg %p312
    // Predicated region
    $region9: #{_lambda_.29} parent=5 // pred_check
      _
    $region10: #{_lambda_.29} parent=5 // pred_check_branch
      %315 = sbr.rel (%p312) target = $region12
    $region11: #{_lambda_.29} parent=5 // pred_region
      %s316 = ssub.s32 %s16, 1
      // Predicated region
      $region13: #{_lambda_.29} parent=11 // pred_check
        %p317 = pneg %p211
      $region14: #{_lambda_.29} parent=11 // pred_check_branch
        %319 = sbr.rel (%p317) target = $region16
      $region15: #{_lambda_.29} parent=11 // pred_region
        _
      $region16: #{_lambda_.29} parent=11 // pred_fallthru
        _
      // Predicated region
      $region17: #{_lambda_.29} parent=11 // pred_check
        %p320 = pneg %p232
      $region18: #{_lambda_.29} parent=11 // pred_check_branch
        %322 = sbr.rel (%p320) target = $region20
      $region19: #{_lambda_.29} parent=11 // pred_region
        _
      $region20: #{_lambda_.29} parent=11 // pred_fallthru
        _
      // Predicated region
      $region21: #{_lambda_.29} parent=11 // pred_check
        %p323 = pneg %p253
      $region22: #{_lambda_.29} parent=11 // pred_check_branch
        %325 = sbr.rel (%p323) target = $region24
      $region23: #{_lambda_.29} parent=11 // pred_region
        _
      $region24: #{_lambda_.29} parent=11 // pred_fallthru
        _
      // Predicated region
      $region25: #{_lambda_.29} parent=11 // pred_check
        %p326 = pneg %p274
      $region26: #{_lambda_.29} parent=11 // pred_check_branch
        %328 = sbr.rel (%p326) target = $region28
      $region27: #{_lambda_.29} parent=11 // pred_region
        _
      $region28: #{_lambda_.29} parent=11 // pred_fallthru
        _
    $region12: #{_lambda_.29} parent=5 // pred_fallthru
      _
    %p329 = scmp.lt.s32.totalorder %s16, 2
    // Predicated region
    $region29: #{_lambda_.29} parent=5 // pred_check
      %p330 = pneg %p329
    $region30: #{_lambda_.29} parent=5 // pred_check_branch
      %332 = sbr.rel (%p330) target = $region32
    $region31: #{_lambda_.29} parent=5 // pred_region
      // Predicated region
      $region33: #{_lambda_.29} parent=31 // pred_check
        %p333 = pneg %p50
      $region34: #{_lambda_.29} parent=31 // pred_check_branch
        %335 = sbr.rel (%p333) target = $region36
      $region35: #{_lambda_.29} parent=31 // pred_region
        %p336 = scmp.lt.s32.totalorder %s23, 1
        %s337 = scalar_select %p336, %s23, 1
        %p338 = scmp.lt.s32.totalorder %s24, 0
        %s339 = scalar_select %p338, %s24, 0
        %s340 = smul.addr %s337, 4
        %s341 = sadd.s32 %s339, %s340
        %s342 = smul.addr %s341, 4
        %s343 = scalar_lea.vmem %s0, %s342
      $region36: #{_lambda_.29} parent=31 // pred_fallthru
        _
      // Predicated region
      $region37: #{_lambda_.29} parent=31 // pred_check
        %p344 = pneg %p76
      $region38: #{_lambda_.29} parent=31 // pred_check_branch
        %346 = sbr.rel (%p344) target = $region40
      $region39: #{_lambda_.29} parent=31 // pred_region
        %p347 = scmp.lt.s32.totalorder %s23, 1
        %s348 = scalar_select %p347, %s23, 1
        %s349 = smul.addr %s348, 4
        %s350 = smul.addr %s349, 4
        %s351 = scalar_lea.vmem %s1, %s350
      $region40: #{_lambda_.29} parent=31 // pred_fallthru
        _
      // Predicated region
      $region41: #{_lambda_.29} parent=31 // pred_check
        %p352 = pneg %p102
      $region42: #{_lambda_.29} parent=31 // pred_check_branch
        %354 = sbr.rel (%p352) target = $region44
      $region43: #{_lambda_.29} parent=31 // pred_region
        %p355 = scmp.lt.s32.totalorder %s23, 1
        %s356 = scalar_select %p355, %s23, 1
        %s357 = smul.addr %s356, 4
        %s358 = smul.addr %s357, 4
        %s359 = scalar_lea.vmem %s2, %s358
      $region44: #{_lambda_.29} parent=31 // pred_fallthru
        _
      // Predicated region
      $region45: #{_lambda_.29} parent=31 // pred_check
        %p360 = pneg %p128
      $region46: #{_lambda_.29} parent=31 // pred_check_branch
        %362 = sbr.rel (%p360) target = $region48
      $region47: #{_lambda_.29} parent=31 // pred_region
        %p363 = scmp.lt.s32.totalorder %s23, 1
        %s364 = scalar_select %p363, %s23, 1
        %s365 = scalar_lea.vmem %s3, %s364
      $region48: #{_lambda_.29} parent=31 // pred_fallthru
        _
      // Predicated region
      $region49: #{_lambda_.29} parent=31 // pred_check
        %p366 = pneg %p156
      $region50: #{_lambda_.29} parent=31 // pred_check_branch
        %368 = sbr.rel (%p366) target = $region52
      $region51: #{_lambda_.29} parent=31 // pred_region
        %p369 = scmp.lt.s32.totalorder %s23, 1
        %s370 = scalar_select %p369, %s23, 1
        %p371 = scmp.lt.s32.totalorder %s24, 0
        %s372 = scalar_select %p371, %s24, 0
        %s373 = sadd.s32 %s372, %s370
        %s374 = smul.addr %s373, 4
        %s375 = scalar_lea.vmem %s4, %s374
      $region52: #{_lambda_.29} parent=31 // pred_fallthru
        _
      // Predicated region
      $region53: #{_lambda_.29} parent=31 // pred_check
        %p376 = pneg %p184
      $region54: #{_lambda_.29} parent=31 // pred_check_branch
        %378 = sbr.rel (%p376) target = $region56
      $region55: #{_lambda_.29} parent=31 // pred_region
        %p379 = scmp.lt.s32.totalorder %s23, 1
        %s380 = scalar_select %p379, %s23, 1
        %p381 = scmp.lt.s32.totalorder %s24, 0
        %s382 = scalar_select %p381, %s24, 0
        %s383 = sadd.s32 %s382, %s380
        %s384 = smul.addr %s383, 8
        %s385 = scalar_lea.vmem %s5, %s384
      $region56: #{_lambda_.29} parent=31 // pred_fallthru
        _
    $region32: #{_lambda_.29} parent=5 // pred_fallthru
      _
    %p386 = scmp.le.s32.totalorder 1, %s16
    %p387 = scmp.lt.s32.totalorder %s16, 3
    %p388 = pnand %p386, %p387
    %p389 = pneg %p388
    // Predicated region
    $region57: #{_lambda_.29} parent=5 // pred_check
      _
    $region58: #{_lambda_.29} parent=5 // pred_check_branch
      %391 = sbr.rel (%p388) target = $region60
    $region59: #{_lambda_.29} parent=5 // pred_region
      %s392 = ssub.s32 %s16, 1
      %p393 = scmp.lt.s32.totalorder %s25, 1
      %s394 = scalar_select %p393, %s25, 1
      %p395 = scmp.lt.s32.totalorder %s26, 0
      %s396 = scalar_select %p395, %s26, 0
      %s397 = smul.addr %s394, 4
      %s398 = sadd.s32 %s396, %s397
      %s399 = smul.addr %s398, 4
      %s400 = scalar_lea.vmem %s0, %s399
      %p401 = pneg %p56
      %p402 = pneg %p53
      %p403 = scmp.lt.s32.totalorder %s25, 1
      %s404 = scalar_select %p403, %s25, 1
      %s405 = smul.addr %s404, 4
      %s406 = smul.addr %s405, 4
      %s407 = scalar_lea.vmem %s1, %s406
      %p408 = pneg %p82
      %p409 = pneg %p79
      %p410 = scmp.lt.s32.totalorder %s25, 1
      %s411 = scalar_select %p410, %s25, 1
      %s412 = smul.addr %s411, 4
      %s413 = smul.addr %s412, 4
      %s414 = scalar_lea.vmem %s2, %s413
      %p415 = pneg %p108
      %p416 = pneg %p105
      %p417 = scmp.lt.s32.totalorder %s25, 1
      %s418 = scalar_select %p417, %s25, 1
      %s419 = scalar_lea.vmem %s3, %s418
      %p420 = pneg %p134
      %p421 = pneg %p131
      %p422 = scmp.lt.s32.totalorder %s25, 1
      %s423 = scalar_select %p422, %s25, 1
      %p424 = scmp.lt.s32.totalorder %s26, 0
      %s425 = scalar_select %p424, %s26, 0
      %s426 = sadd.s32 %s425, %s423
      %s427 = smul.addr %s426, 4
      %s428 = scalar_lea.vmem %s4, %s427
      %p429 = pneg %p162
      %p430 = pneg %p159
      %p431 = scmp.lt.s32.totalorder %s25, 1
      %s432 = scalar_select %p431, %s25, 1
      %p433 = scmp.lt.s32.totalorder %s26, 0
      %s434 = scalar_select %p433, %s26, 0
      %s435 = sadd.s32 %s434, %s432
      %s436 = smul.addr %s435, 8
      %s437 = scalar_lea.vmem %s5, %s436
      %p438 = pneg %p190
      %p439 = pneg %p187
      %p440 = pneg %p211
      %p441 = pneg %p208
      %p442 = pneg %p232
      %p443 = pneg %p229
      %p444 = pneg %p253
      %p445 = pneg %p250
      %p446 = pneg %p274
      %p447 = pneg %p271
      %p448 = pneg %p302
      %p449 = pneg %p299
      %p450 = scmp.lt.s32.totalorder %s25, 1
      %s451 = scalar_select %p450, %s25, 1
      %p452 = scmp.lt.s32.totalorder %s26, 0
      %s453 = scalar_select %p452, %s26, 0
      %s454 = sadd.s32 %s453, %s451
      %s455 = smul.addr %s454, 4
      %s456 = scalar_lea.vmem %s10, %s455
      %p457 = scmp.lt.s32.totalorder %s25, 1
      %s458 = scalar_select %p457, %s25, 1
      %p459 = scmp.lt.s32.totalorder %s26, 0
      %s460 = scalar_select %p459, %s26, 0
      %s461 = smul.addr %s458, 4
      %s462 = sadd.s32 %s460, %s461
      %s463 = smul.addr %s462, 4
      %s464 = scalar_lea.vmem %s0, %s463
      %p465 = scmp.lt.s32.totalorder %s25, 1
      %s466 = scalar_select %p465, %s25, 1
      %s467 = smul.addr %s466, 4
      %s468 = smul.addr %s467, 4
      %s469 = scalar_lea.vmem %s1, %s468
      %p470 = scmp.lt.s32.totalorder %s25, 1
      %s471 = scalar_select %p470, %s25, 1
      %s472 = smul.addr %s471, 4
      %s473 = smul.addr %s472, 4
      %s474 = scalar_lea.vmem %s2, %s473
      %p475 = scmp.lt.s32.totalorder %s25, 1
      %s476 = scalar_select %p475, %s25, 1
      %s477 = scalar_lea.vmem %s3, %s476
      %p478 = scmp.lt.s32.totalorder %s25, 1
      %s479 = scalar_select %p478, %s25, 1
      %p480 = scmp.lt.s32.totalorder %s26, 0
      %s481 = scalar_select %p480, %s26, 0
      %s482 = sadd.s32 %s481, %s479
      %s483 = smul.addr %s482, 4
      %s484 = scalar_lea.vmem %s4, %s483
      %p485 = scmp.lt.s32.totalorder %s25, 1
      %s486 = scalar_select %p485, %s25, 1
      %p487 = scmp.lt.s32.totalorder %s26, 0
      %s488 = scalar_select %p487, %s26, 0
      %s489 = sadd.s32 %s488, %s486
      %s490 = smul.addr %s489, 8
      %s491 = scalar_lea.vmem %s5, %s490
      %p492 = scmp.lt.s32.totalorder %s25, 1
      %s493 = scalar_select %p492, %s25, 1
      %p494 = scmp.lt.s32.totalorder %s26, 0
      %s495 = scalar_select %p494, %s26, 0
      %s496 = sadd.s32 %s495, %s493
      %s497 = smul.addr %s496, 4
      %s498 = scalar_lea.vmem %s10, %s497
      %v500 = vld [vmem:[%s477] sm:$0x1]
      %v501 = vld [vmem:[%s464] sm:$0xf]
      %v502 = vld [vmem:[%s469] sm:$0xf]
      %v503 = vld [vmem:[%s474] sm:$0xf]
      %v505 = vperm.slane %v500, 0
      %vm507 = vcmask 64512
      %v509 = vsel %vm507, %v501, 0
      %v512 = vsel %vm507, %v502, 0
      %514 = vmatpush.bf16.xpose.msra.mxu0 0
      %515 = vmatpush.bf16.xpose.msra.mxu0 0
      %516 = vmatpush.bf16.xpose.msra.mxu0 0
      %517 = vmatpush.bf16.xpose.msra.mxu0 0
      %518 = vmatpush.bf16.xpose.msra.mxu0 0
      %519 = vmatpush.bf16.xpose.msra.mxu0 0
      %520 = vmatpush.bf16.xpose.msra.mxu0 0
      %521 = vmatpush.bf16.xpose.msra.mxu0 %v512
      %522 = vmatmul.bf16.gmra.mxu0 %v509
      %v523 = vpop.f32.mrf.mxu0
      %v524 = vadd.f32 %v505, %v523
      %v525 = vpop.f32.mrf.mxu0
      %526 = vdwg.mxu0
      %vm527 = vcmask 63488
      %v528 = vsel %vm527, %v524, -inf
      %529 = vmax.xlane.f32.xlu0 %v528
      %v530 = vpop.xlane.xlu0 %529
      %v531 = vsub.f32 %v524, %v530
      %v532 = vmul.f32 %v531, 1.442695
      %v533 = vpow.pop %v532
      %v534 = vsel %vm527, %v533, 0.0
      %535 = vadd.xlane.f32.xlu0 %v534
      %v536 = vpop.xlane.xlu0 %535
      %v537 = vrcp.pop %v536
      %v538 = vmul.f32 %v533, %v537
      %v539 = vpack.c.bf16 %v538, %v538
      %v541 = vsel %vm507, %v539, 0
      %vm543 = vcmask 1043456
      %v545 = vsel %vm543, %v503, 0
      %547 = vmatpush.bf16.msra.mxu0 0
      %548 = vmatpush.bf16.msra.mxu0 0
      %549 = vmatpush.bf16.msra.mxu0 0
      %550 = vmatpush.bf16.msra.mxu0 0
      %551 = vmatpush.bf16.msra.mxu0 0
      %552 = vmatpush.bf16.msra.mxu0 0
      %553 = vmatpush.bf16.msra.mxu0 0
      %554 = vmatpush.bf16.msra.mxu0 %v545
      %555 = vmatmul.bf16.gmra.mxu0 %v541
      %v556 = vpop.f32.mrf.mxu0
      %v557 = vadd.f32 0.0, %v556
      %v558 = vpop.f32.mrf.mxu0
      %559 = vdwg.mxu0
      %v560 = vpack.c.bf16 %v557, %v557
      %vm561 = vcmask 60416
      %vm562 = vsmask.f32 3328
      %vm563 = vmand %vm561, %vm562
      %v564 = vld [vmem:[#allocation2] sm:$0xf]
      %v565 = vsel %vm563, %v560, %v564
      %566 = vst [vmem:[#allocation2] sm:$0xf] %v565
      %s567 = scalar_lea.vmem %s464, 4
      %v568 = vld [vmem:[%s567] sm:$0xf]
      %s569 = scalar_lea.vmem %s469, 4
      %v570 = vld [vmem:[%s569] sm:$0xf]
      %s571 = scalar_lea.vmem %s474, 4
      %v572 = vld [vmem:[%s571] sm:$0xf]
      %v574 = vsel %vm507, %v568, 0
      %v577 = vsel %vm507, %v570, 0
      %579 = vmatpush.bf16.xpose.msra.mxu0 0
      %580 = vmatpush.bf16.xpose.msra.mxu0 0
      %581 = vmatpush.bf16.xpose.msra.mxu0 0
      %582 = vmatpush.bf16.xpose.msra.mxu0 0
      %583 = vmatpush.bf16.xpose.msra.mxu0 0
      %584 = vmatpush.bf16.xpose.msra.mxu0 0
      %585 = vmatpush.bf16.xpose.msra.mxu0 0
      %586 = vmatpush.bf16.xpose.msra.mxu0 %v577
      %587 = vmatmul.bf16.gmra.mxu0 %v574
      %v588 = vpop.f32.mrf.mxu0
      %v589 = vadd.f32 %v505, %v588
      %v590 = vpop.f32.mrf.mxu0
      %591 = vdwg.mxu0
      %v592 = vsel %vm527, %v589, -inf
      %593 = vmax.xlane.f32.xlu0 %v592
      %v594 = vpop.xlane.xlu0 %593
      %v595 = vsub.f32 %v589, %v594
      %v596 = vmul.f32 %v595, 1.442695
      %v597 = vpow.pop %v596
      %v598 = vsel %vm527, %v597, 0.0
      %599 = vadd.xlane.f32.xlu0 %v598
      %v600 = vpop.xlane.xlu0 %599
      %v601 = vrcp.pop %v600
      %v602 = vmul.f32 %v597, %v601
      %v603 = vpack.c.bf16 %v602, %v602
      %v605 = vsel %vm507, %v603, 0
      %v608 = vsel %vm543, %v572, 0
      %610 = vmatpush.bf16.msra.mxu0 0
      %611 = vmatpush.bf16.msra.mxu0 0
      %612 = vmatpush.bf16.msra.mxu0 0
      %613 = vmatpush.bf16.msra.mxu0 0
      %614 = vmatpush.bf16.msra.mxu0 0
      %615 = vmatpush.bf16.msra.mxu0 0
      %616 = vmatpush.bf16.msra.mxu0 0
      %617 = vmatpush.bf16.msra.mxu0 %v608
      %618 = vmatmul.bf16.gmra.mxu0 %v605
      %v619 = vpop.f32.mrf.mxu0
      %v620 = vadd.f32 0.0, %v619
      %v621 = vpop.f32.mrf.mxu0
      %622 = vdwg.mxu0
      %v623 = vpack.c.bf16 %v620, %v620
      %625 = vrot.lane.b32.xlu0 %v623, 8
      %v626 = vpop.permute.xlu0 %625
      %vm628 = vcmask 126016
      %vm629 = vmand %vm628, %vm562
      %v630 = vld [vmem:[#allocation2] sm:$0xf]
      %v631 = vsel %vm629, %v626, %v630
      %632 = vst [vmem:[#allocation2] sm:$0xf] %v631
      %s633 = scalar_lea.vmem %s464, 8
      %v634 = vld [vmem:[%s633] sm:$0xf]
      %s635 = scalar_lea.vmem %s469, 8
      %v636 = vld [vmem:[%s635] sm:$0xf]
      %s637 = scalar_lea.vmem %s474, 8
      %v638 = vld [vmem:[%s637] sm:$0xf]
      %v640 = vsel %vm507, %v634, 0
      %v643 = vsel %vm507, %v636, 0
      %645 = vmatpush.bf16.xpose.msra.mxu0 0
      %646 = vmatpush.bf16.xpose.msra.mxu0 0
      %647 = vmatpush.bf16.xpose.msra.mxu0 0
      %648 = vmatpush.bf16.xpose.msra.mxu0 0
      %649 = vmatpush.bf16.xpose.msra.mxu0 0
      %650 = vmatpush.bf16.xpose.msra.mxu0 0
      %651 = vmatpush.bf16.xpose.msra.mxu0 0
      %652 = vmatpush.bf16.xpose.msra.mxu0 %v643
      %653 = vmatmul.bf16.gmra.mxu0 %v640
      %v654 = vpop.f32.mrf.mxu0
      %v655 = vadd.f32 %v505, %v654
      %v656 = vpop.f32.mrf.mxu0
      %657 = vdwg.mxu0
      %v658 = vsel %vm527, %v655, -inf
      %659 = vmax.xlane.f32.xlu0 %v658
      %v660 = vpop.xlane.xlu0 %659
      %v661 = vsub.f32 %v655, %v660
      %v662 = vmul.f32 %v661, 1.442695
      %v663 = vpow.pop %v662
      %v664 = vsel %vm527, %v663, 0.0
      %665 = vadd.xlane.f32.xlu0 %v664
      %v666 = vpop.xlane.xlu0 %665
      %v667 = vrcp.pop %v666
      %v668 = vmul.f32 %v663, %v667
      %v669 = vpack.c.bf16 %v668, %v668
      %v671 = vsel %vm507, %v669, 0
      %v674 = vsel %vm543, %v638, 0
      %676 = vmatpush.bf16.msra.mxu0 0
      %677 = vmatpush.bf16.msra.mxu0 0
      %678 = vmatpush.bf16.msra.mxu0 0
      %679 = vmatpush.bf16.msra.mxu0 0
      %680 = vmatpush.bf16.msra.mxu0 0
      %681 = vmatpush.bf16.msra.mxu0 0
      %682 = vmatpush.bf16.msra.mxu0 0
      %683 = vmatpush.bf16.msra.mxu0 %v674
      %684 = vmatmul.bf16.gmra.mxu0 %v671
      %v685 = vpop.f32.mrf.mxu0
      %v686 = vadd.f32 0.0, %v685
      %v687 = vpop.f32.mrf.mxu0
      %688 = vdwg.mxu0
      %v689 = vpack.c.bf16 %v686, %v686
      %691 = vrot.lane.b32.xlu0 %v689, 16
      %v692 = vpop.permute.xlu0 %691
      %vm694 = vcmask 191616
      %vm695 = vmand %vm694, %vm562
      %v696 = vld [vmem:[#allocation2] sm:$0xf]
      %v697 = vsel %vm695, %v692, %v696
      %698 = vst [vmem:[#allocation2] sm:$0xf] %v697
      %s699 = scalar_lea.vmem %s464, 12
      %v700 = vld [vmem:[%s699] sm:$0xf]
      %s701 = scalar_lea.vmem %s469, 12
      %v702 = vld [vmem:[%s701] sm:$0xf]
      %s703 = scalar_lea.vmem %s474, 12
      %v704 = vld [vmem:[%s703] sm:$0xf]
      %v706 = vsel %vm507, %v700, 0
      %v709 = vsel %vm507, %v702, 0
      %711 = vmatpush.bf16.xpose.msra.mxu0 0
      %712 = vmatpush.bf16.xpose.msra.mxu0 0
      %713 = vmatpush.bf16.xpose.msra.mxu0 0
      %714 = vmatpush.bf16.xpose.msra.mxu0 0
      %715 = vmatpush.bf16.xpose.msra.mxu0 0
      %716 = vmatpush.bf16.xpose.msra.mxu0 0
      %717 = vmatpush.bf16.xpose.msra.mxu0 0
      %718 = vmatpush.bf16.xpose.msra.mxu0 %v709
      %719 = vmatmul.bf16.gmra.mxu0 %v706
      %v720 = vpop.f32.mrf.mxu0
      %v721 = vadd.f32 %v505, %v720
      %v722 = vpop.f32.mrf.mxu0
      %723 = vdwg.mxu0
      %v724 = vsel %vm527, %v721, -inf
      %725 = vmax.xlane.f32.xlu0 %v724
      %v726 = vpop.xlane.xlu0 %725
      %v727 = vsub.f32 %v721, %v726
      %v728 = vmul.f32 %v727, 1.442695
      %v729 = vpow.pop %v728
      %v730 = vsel %vm527, %v729, 0.0
      %731 = vadd.xlane.f32.xlu0 %v730
      %v732 = vpop.xlane.xlu0 %731
      %v733 = vrcp.pop %v732
      %v734 = vmul.f32 %v729, %v733
      %v735 = vpack.c.bf16 %v734, %v734
      %v737 = vsel %vm507, %v735, 0
      %v740 = vsel %vm543, %v704, 0
      %742 = vmatpush.bf16.msra.mxu0 0
      %743 = vmatpush.bf16.msra.mxu0 0
      %744 = vmatpush.bf16.msra.mxu0 0
      %745 = vmatpush.bf16.msra.mxu0 0
      %746 = vmatpush.bf16.msra.mxu0 0
      %747 = vmatpush.bf16.msra.mxu0 0
      %748 = vmatpush.bf16.msra.mxu0 0
      %749 = vmatpush.bf16.msra.mxu0 %v740
      %750 = vmatmul.bf16.gmra.mxu0 %v737
      %v751 = vpop.f32.mrf.mxu0
      %v752 = vadd.f32 0.0, %v751
      %v753 = vpop.f32.mrf.mxu0
      %754 = vdwg.mxu0
      %v755 = vpack.c.bf16 %v752, %v752
      %757 = vrot.lane.b32.xlu0 %v755, 24
      %v758 = vpop.permute.xlu0 %757
      %vm760 = vcmask 257216
      %vm761 = vmand %vm760, %vm562
      %v762 = vld [vmem:[#allocation2] sm:$0xf]
      %v763 = vsel %vm761, %v758, %v762
      %764 = vst [vmem:[#allocation2] sm:$0xf] %v763
      %v765 = vld [vmem:[#allocation2] sm:$0xf]
      %v766 = vld [vmem:[%s6] sm:$0xf]
      %v767 = vld [vmem:[%s6 + $0x4] sm:$0xf]
      %v768 = vld [vmem:[%s6 + $0x8] sm:$0xf]
      %v769 = vld [vmem:[%s6 + $0xc] sm:$0xf]
      %v770 = vld [vmem:[%s7] sm:$0x1]
      %v772 = vperm.slane %v770, 0
      %v778 = vunpack.c.l.b16 %v766
      %v779 = vunpack.c.l.b16 %v767
      %v780 = vunpack.c.l.b16 %v768
      %v781 = vunpack.c.l.b16 %v769
      %v782 = vpack.c.b16 %v779, %v778
      %v783 = vpack.c.b16 %v781, %v780
      %vm786 = vcmask 261120
      %v788 = vsel %vm786, %v765, 0
      %790 = vmatpush.bf16.msra.mxu0 0
      %791 = vmatpush.bf16.msra.mxu0 0
      %792 = vmatpush.bf16.msra.mxu0 0
      %793 = vmatpush.bf16.msra.mxu0 0
      %794 = vmatpush.bf16.msra.mxu0 0
      %795 = vmatpush.bf16.msra.mxu0 0
      %796 = vmatpush.bf16.msra.mxu0 %v783
      %797 = vmatpush.bf16.msra.mxu0 %v782
      %798 = vmatmul.bf16.gmra.mxu0 %v788
      %v799 = vpop.f32.mrf.mxu0
      %v800 = vadd.f32 %v772, %v799
      %v801 = vpop.f32.mrf.mxu0
      %802 = vdwg.mxu0
      %v803 = vld [vmem:[%s484] sm:$0xf]
      %v804 = vunpack.c.l.bf16 %v803
      %v805 = vadd.f32 %v800, %v804
      %vm806 = vcmask 260096
      %v807 = vsel %vm806, %v805, 0.0
      %808 = vadd.xlane.f32.xlu0 %v807
      %v809 = vpop.xlane.xlu0 %808
      %v810 = vrcp.pop 32.0
      %v811 = vmul.f32 32.0, %v810
      %v812 = vsub.f32 1.0, %v811
      %v813 = vmul.f32 %v810, %v812
      %v814 = vadd.f32 %v810, %v813
      %vm815 = vweird.f32 %v810
      %v816 = vsel %vm815, %v810, %v814
      %v817 = vmul.f32 %v809, %v816
      %v818 = vsub.f32 %v805, %v817
      %v819 = vmul.f32 %v818, %v818
      %v820 = vsel %vm806, %v819, 0.0
      %821 = vadd.xlane.f32.xlu0 %v820
      %v822 = vpop.xlane.xlu0 %821
      %v823 = vmul.f32 %v822, %v816
      %v824 = vadd.f32 %v823, 1e-05
      %v825 = vrsqrt.pop %v824
      %v826 = vmul.f32 %v825, %v824
      %v827 = vmul.f32 %v826, %v825
      %v828 = vmul.f32 0.5, %v827
      %v829 = vsub.f32 1.5, %v828
      %v830 = vmul.f32 %v825, %v829
      %vm831 = vweird.f32 %v824
      %vm832 = vweird.f32 %v825
      %vm833 = vmor %vm831, %vm832
      %v834 = vsel %vm833, %v825, %v830
      %v835 = vmul.f32 %v818, %v834
      %v836 = vld [vmem:[%s8] sm:$0x1]
      %v838 = vperm.slane %v836, 0
      %v840 = vmul.f32 %v835, %v838
      %v841 = vld [vmem:[%s9] sm:$0x1]
      %v843 = vperm.slane %v841, 0
      %v845 = vadd.f32 %v840, %v843
      %v846 = vld [vmem:[%s491] sm:$0x7f]
      %848 = vset.pattern.permute.xlu0 0
      %849 = vperm.xlu0 %848, %v846
      %v850 = vpop.permute.xlu0 %849
      %v852 = vmul.f32 %v845, %v850
      %v853 = vpack.c.bf16 %v852, %v852
      %vm854 = vcmask 257024
      %vm855 = vmand %vm854, %vm562
      %v856 = vld [vmem:[%s498] sm:$0xf]
      %v857 = vsel %vm855, %v853, %v856
      %858 = vst [vmem:[%s498] sm:$0xf] %v857
      %p859 = scmp.lt.s32.totalorder %s25, 1
      %s860 = scalar_select %p859, %s25, 1
      %p861 = scmp.lt.s32.totalorder %s26, 0
      %s862 = scalar_select %p861, %s26, 0
      %s863 = sadd.s32 %s862, %s860
      %s864 = smul.addr %s863, 4
      %s865 = scalar_lea.vmem %s10, %s864
      // Predicated region
      $region61: #{_lambda_.29} parent=59 // pred_check
        %p866 = pneg %p299
      $region62: #{_lambda_.29} parent=59 // pred_check_branch
        %868 = sbr.rel (%p866) target = $region64
      $region63: #{_lambda_.29} parent=59 // pred_region
        _
      $region64: #{_lambda_.29} parent=59 // pred_fallthru
        _
    $region60: #{_lambda_.29} parent=5 // pred_fallthru
      _
    %p869 = scmp.le.s32.totalorder 2, %s16
    // Predicated region
    $region65: #{_lambda_.29} parent=5 // pred_check
      %p870 = pneg %p869
    $region66: #{_lambda_.29} parent=5 // pred_check_branch
      %872 = sbr.rel (%p870) target = $region68
    $region67: #{_lambda_.29} parent=5 // pred_region
      %s873 = ssub.s32 %s16, 2
      // Predicated region
      $region69: #{_lambda_.29} parent=67 // pred_check
        %p874 = pneg %p305
      $region70: #{_lambda_.29} parent=67 // pred_check_branch
        %876 = sbr.rel (%p874) target = $region72
      $region71: #{_lambda_.29} parent=67 // pred_region
        %p877 = scmp.lt.s32.totalorder %s27, 1
        %s878 = scalar_select %p877, %s27, 1
        %p879 = scmp.lt.s32.totalorder %s28, 0
        %s880 = scalar_select %p879, %s28, 0
        %s881 = sadd.s32 %s880, %s878
        %s882 = smul.addr %s881, 4
        %s883 = scalar_lea.vmem %s10, %s882
      $region72: #{_lambda_.29} parent=67 // pred_fallthru
        _
    $region68: #{_lambda_.29} parent=5 // pred_fallthru
      _
  $region6: #{_lambda_.29} parent=0 // loop_footer
    %s20 = sadd.s32 1, %s16
  $region7: #{_lambda_.29} parent=0 // loop_footer_branch
    %15 = sbr.rel target = $region3
  $region8: #{_lambda_.29} parent=0 // loop_exit
    _

// kernel: _lambda_.26
$region0: #{_lambda_.26}
  #allocation0 [shape = 'u32[]', space=smem, size = 0x4, offset = 0x4, fixed_abs, tag = 'smem constant byte address 0x4 - core index']
  #allocation1 [shape = 'u32[72,128]{1,0:T(1,128)}', space=vmem, size = 0x9000, scoped, tag = 'internal scratch']
  #allocation2 [shape = 'bf16[7,32]{1,0:T(8,128)(2,1)}', space=vmem, size = 0x800, scoped, tag = 'scratch operand']
  %s0 = inlined_call_operand.vmem [shape: bf16[2,4,7,8], index: 0, kind: input, shape index: {}]
  %s1 = inlined_call_operand.vmem [shape: bf16[2,4,7,8], index: 1, kind: input, shape index: {}]
  %s2 = inlined_call_operand.vmem [shape: bf16[2,4,7,8], index: 2, kind: input, shape index: {}]
  %s3 = inlined_call_operand.vmem [shape: f32[2,1,7], index: 3, kind: input, shape index: {}]
  %s4 = inlined_call_operand.vmem [shape: bf16[2,7,32], index: 4, kind: input, shape index: {}]
  %s5 = inlined_call_operand.vmem [shape: f32[2,7,1], index: 5, kind: input, shape index: {}]
  %s6 = inlined_call_operand.vmem [shape: bf16[32,32], index: 6, kind: input, shape index: {}]
  %s7 = inlined_call_operand.vmem [shape: f32[1,32], index: 7, kind: input, shape index: {}, may-alias: {7,9}]
  %s8 = inlined_call_operand.vmem [shape: f32[1,32], index: 8, kind: input, shape index: {}]
  %s9 = inlined_call_operand.vmem [shape: f32[1,32], index: 9, kind: input, shape index: {}, may-alias: {7,9}]
  %s10 = inlined_call_operand.vmem [shape: bf16[2,7,32], index: 10, kind: output, shape index: {}]
  %s11 = sld [smem:[#allocation0]]
  $region73: #{_lambda_.26} parent=0
    _
  %s13 = ssub.s32 1, %s11
  %s14 = scalar_select 0, %s13, %s11
  loop: start=0, step=1, limit=4
  $region2: #{_lambda_.26} parent=0 // loop_pre_header
    _
  $region3: #{_lambda_.26} parent=0 // loop_header
    %s16 = sphi 0, %s20
    %p17 = scmp.ge.s32.totalorder %s16, 4
    %s23 = sphi 0, %s35
    %s24 = sphi 0, %s31
    %s25 = sphi 0, %s23
    %s26 = sphi 0, %s24
    %s27 = sphi 0, %s25
    %s28 = sphi 0, %s26
    %s40 = sphi 0, %s42
    %s43 = sphi 0, %s40
    %s44 = sphi 0, %s43
    %s60 = sphi 0, %s44
    %s66 = sphi 0, %s68
    %s69 = sphi 0, %s66
    %s70 = sphi 0, %s69
    %s86 = sphi 0, %s70
    %s92 = sphi 0, %s94
    %s95 = sphi 0, %s92
    %s96 = sphi 0, %s95
    %s112 = sphi 0, %s96
    %s118 = sphi 0, %s120
    %s121 = sphi 0, %s118
    %s122 = sphi 0, %s121
    %s138 = sphi 0, %s122
    %s146 = sphi 0, %s148
    %s149 = sphi 0, %s146
    %s150 = sphi 0, %s149
    %s166 = sphi 0, %s150
    %s174 = sphi 0, %s176
    %s177 = sphi 0, %s174
    %s178 = sphi 0, %s177
    %s194 = sphi 0, %s178
    %s198 = sphi 0, %s198
    %s200 = sphi 0, %s198
    %s201 = sphi 0, %s200
    %s215 = sphi 0, %s201
    %s219 = sphi 0, %s219
    %s221 = sphi 0, %s219
    %s222 = sphi 0, %s221
    %s236 = sphi 0, %s222
    %s240 = sphi 0, %s240
    %s242 = sphi 0, %s240
    %s243 = sphi 0, %s242
    %s257 = sphi 0, %s243
    %s261 = sphi 0, %s261
    %s263 = sphi 0, %s261
    %s264 = sphi 0, %s263
    %s278 = sphi 0, %s264
    %s286 = sphi 0, %s288
    %s289 = sphi 0, %s286
    %s290 = sphi 0, %s289
    %s306 = sphi 0, %s290
  $region4: #{_lambda_.26} parent=0 // loop_header_branch
    %19 = sbr.rel (%p17) target = $region8
  $region5: #{_lambda_.26} parent=0 // loop_body
    %s21 = ssub.s32 %s16, 1
    %s22 = ssub.s32 %s16, 2
    %s29 = sadd.s32 1, %s24
    %p30 = scmp.ge.s32.totalorder %s29, 1
    %s31 = scalar_select %p30, 0, %s29
    %s32 = sadd.s32 1, %s23
    %s33 = scalar_select %p30, %s32, %s23
    %p34 = scmp.ge.s32.totalorder %s33, 2
    %s35 = scalar_select %p34, 0, %s33
    %s36 = ssub.s32 %s23, %s35
    %s37 = ssub.s32 %s24, %s31
    %s38 = sor.u32 %s36, %s37
    %p39 = scmp.eq.s32.totalorder %s38, 0
    %s41 = sadd.s32 %s40, 1
    %s42 = scalar_select %p39, %s40, %s41
    %p45 = pneg %p39
    %p46 = scmp.eq.s32.totalorder %s16, 1
    %p47 = por %p45, %p46
    %p48 = scmp.ne.s32.totalorder %s40, %s43
    %p49 = scmp.eq.s32.totalorder %s16, 0
    %p50 = por %p48, %p49
    %p51 = scmp.ne.s32.totalorder %s40, %s43
    %p52 = scmp.eq.s32.totalorder %s21, 1
    %p53 = por %p51, %p52
    %p54 = scmp.ne.s32.totalorder %s43, %s44
    %p55 = scmp.eq.s32.totalorder %s21, 0
    %p56 = por %p54, %p55
    %p57 = scmp.ne.s32.totalorder %s43, %s44
    %p58 = scmp.eq.s32.totalorder %s22, 1
    %p59 = por %p57, %p58
    %p61 = scmp.ne.s32.totalorder %s44, %s60
    %p62 = scmp.eq.s32.totalorder %s22, 0
    %p63 = por %p61, %p62
    %s64 = ssub.s32 %s23, %s35
    %p65 = scmp.eq.s32.totalorder %s64, 0
    %s67 = sadd.s32 %s66, 1
    %s68 = scalar_select %p65, %s66, %s67
    %p71 = pneg %p65
    %p72 = scmp.eq.s32.totalorder %s16, 1
    %p73 = por %p71, %p72
    %p74 = scmp.ne.s32.totalorder %s66, %s69
    %p75 = scmp.eq.s32.totalorder %s16, 0
    %p76 = por %p74, %p75
    %p77 = scmp.ne.s32.totalorder %s66, %s69
    %p78 = scmp.eq.s32.totalorder %s21, 1
    %p79 = por %p77, %p78
    %p80 = scmp.ne.s32.totalorder %s69, %s70
    %p81 = scmp.eq.s32.totalorder %s21, 0
    %p82 = por %p80, %p81
    %p83 = scmp.ne.s32.totalorder %s69, %s70
    %p84 = scmp.eq.s32.totalorder %s22, 1
    %p85 = por %p83, %p84
    %p87 = scmp.ne.s32.totalorder %s70, %s86
    %p88 = scmp.eq.s32.totalorder %s22, 0
    %p89 = por %p87, %p88
    %s90 = ssub.s32 %s23, %s35
    %p91 = scmp.eq.s32.totalorder %s90, 0
    %s93 = sadd.s32 %s92, 1
    %s94 = scalar_select %p91, %s92, %s93
    %p97 = pneg %p91
    %p98 = scmp.eq.s32.totalorder %s16, 1
    %p99 = por %p97, %p98
    %p100 = scmp.ne.s32.totalorder %s92, %s95
    %p101 = scmp.eq.s32.totalorder %s16, 0
    %p102 = por %p100, %p101
    %p103 = scmp.ne.s32.totalorder %s92, %s95
    %p104 = scmp.eq.s32.totalorder %s21, 1
    %p105 = por %p103, %p104
    %p106 = scmp.ne.s32.totalorder %s95, %s96
    %p107 = scmp.eq.s32.totalorder %s21, 0
    %p108 = por %p106, %p107
    %p109 = scmp.ne.s32.totalorder %s95, %s96
    %p110 = scmp.eq.s32.totalorder %s22, 1
    %p111 = por %p109, %p110
    %p113 = scmp.ne.s32.totalorder %s96, %s112
    %p114 = scmp.eq.s32.totalorder %s22, 0
    %p115 = por %p113, %p114
    %s116 = ssub.s32 %s23, %s35
    %p117 = scmp.eq.s32.totalorder %s116, 0
    %s119 = sadd.s32 %s118, 1
    %s120 = scalar_select %p117, %s118, %s119
    %p123 = pneg %p117
    %p124 = scmp.eq.s32.totalorder %s16, 1
    %p125 = por %p123, %p124
    %p126 = scmp.ne.s32.totalorder %s118, %s121
    %p127 = scmp.eq.s32.totalorder %s16, 0
    %p128 = por %p126, %p127
    %p129 = scmp.ne.s32.totalorder %s118, %s121
    %p130 = scmp.eq.s32.totalorder %s21, 1
    %p131 = por %p129, %p130
    %p132 = scmp.ne.s32.totalorder %s121, %s122
    %p133 = scmp.eq.s32.totalorder %s21, 0
    %p134 = por %p132, %p133
    %p135 = scmp.ne.s32.totalorder %s121, %s122
    %p136 = scmp.eq.s32.totalorder %s22, 1
    %p137 = por %p135, %p136
    %p139 = scmp.ne.s32.totalorder %s122, %s138
    %p140 = scmp.eq.s32.totalorder %s22, 0
    %p141 = por %p139, %p140
    %s142 = ssub.s32 %s23, %s35
    %s143 = ssub.s32 %s24, %s31
    %s144 = sor.u32 %s142, %s143
    %p145 = scmp.eq.s32.totalorder %s144, 0
    %s147 = sadd.s32 %s146, 1
    %s148 = scalar_select %p145, %s146, %s147
    %p151 = pneg %p145
    %p152 = scmp.eq.s32.totalorder %s16, 1
    %p153 = por %p151, %p152
    %p154 = scmp.ne.s32.totalorder %s146, %s149
    %p155 = scmp.eq.s32.totalorder %s16, 0
    %p156 = por %p154, %p155
    %p157 = scmp.ne.s32.totalorder %s146, %s149
    %p158 = scmp.eq.s32.totalorder %s21, 1
    %p159 = por %p157, %p158
    %p160 = scmp.ne.s32.totalorder %s149, %s150
    %p161 = scmp.eq.s32.totalorder %s21, 0
    %p162 = por %p160, %p161
    %p163 = scmp.ne.s32.totalorder %s149, %s150
    %p164 = scmp.eq.s32.totalorder %s22, 1
    %p165 = por %p163, %p164
    %p167 = scmp.ne.s32.totalorder %s150, %s166
    %p168 = scmp.eq.s32.totalorder %s22, 0
    %p169 = por %p167, %p168
    %s170 = ssub.s32 %s23, %s35
    %s171 = ssub.s32 %s24, %s31
    %s172 = sor.u32 %s170, %s171
    %p173 = scmp.eq.s32.totalorder %s172, 0
    %s175 = sadd.s32 %s174, 1
    %s176 = scalar_select %p173, %s174, %s175
    %p179 = pneg %p173
    %p180 = scmp.eq.s32.totalorder %s16, 1
    %p181 = por %p179, %p180
    %p182 = scmp.ne.s32.totalorder %s174, %s177
    %p183 = scmp.eq.s32.totalorder %s16, 0
    %p184 = por %p182, %p183
    %p185 = scmp.ne.s32.totalorder %s174, %s177
    %p186 = scmp.eq.s32.totalorder %s21, 1
    %p187 = por %p185, %p186
    %p188 = scmp.ne.s32.totalorder %s177, %s178
    %p189 = scmp.eq.s32.totalorder %s21, 0
    %p190 = por %p188, %p189
    %p191 = scmp.ne.s32.totalorder %s177, %s178
    %p192 = scmp.eq.s32.totalorder %s22, 1
    %p193 = por %p191, %p192
    %p195 = scmp.ne.s32.totalorder %s178, %s194
    %p196 = scmp.eq.s32.totalorder %s22, 0
    %p197 = por %p195, %p196
    %s199 = sadd.s32 %s198, 1
    %p202 = scmp.eq.s32.totalorder %s16, 1
    %p203 = scmp.ne.s32.totalorder %s198, %s200
    %p204 = scmp.eq.s32.totalorder %s16, 0
    %p205 = por %p203, %p204
    %p206 = scmp.ne.s32.totalorder %s198, %s200
    %p207 = scmp.eq.s32.totalorder %s21, 1
    %p208 = por %p206, %p207
    %p209 = scmp.ne.s32.totalorder %s200, %s201
    %p210 = scmp.eq.s32.totalorder %s21, 0
    %p211 = por %p209, %p210
    %p212 = scmp.ne.s32.totalorder %s200, %s201
    %p213 = scmp.eq.s32.totalorder %s22, 1
    %p214 = por %p212, %p213
    %p216 = scmp.ne.s32.totalorder %s201, %s215
    %p217 = scmp.eq.s32.totalorder %s22, 0
    %p218 = por %p216, %p217
    %s220 = sadd.s32 %s219, 1
    %p223 = scmp.eq.s32.totalorder %s16, 1
    %p224 = scmp.ne.s32.totalorder %s219, %s221
    %p225 = scmp.eq.s32.totalorder %s16, 0
    %p226 = por %p224, %p225
    %p227 = scmp.ne.s32.totalorder %s219, %s221
    %p228 = scmp.eq.s32.totalorder %s21, 1
    %p229 = por %p227, %p228
    %p230 = scmp.ne.s32.totalorder %s221, %s222
    %p231 = scmp.eq.s32.totalorder %s21, 0
    %p232 = por %p230, %p231
    %p233 = scmp.ne.s32.totalorder %s221, %s222
    %p234 = scmp.eq.s32.totalorder %s22, 1
    %p235 = por %p233, %p234
    %p237 = scmp.ne.s32.totalorder %s222, %s236
    %p238 = scmp.eq.s32.totalorder %s22, 0
    %p239 = por %p237, %p238
    %s241 = sadd.s32 %s240, 1
    %p244 = scmp.eq.s32.totalorder %s16, 1
    %p245 = scmp.ne.s32.totalorder %s240, %s242
    %p246 = scmp.eq.s32.totalorder %s16, 0
    %p247 = por %p245, %p246
    %p248 = scmp.ne.s32.totalorder %s240, %s242
    %p249 = scmp.eq.s32.totalorder %s21, 1
    %p250 = por %p248, %p249
    %p251 = scmp.ne.s32.totalorder %s242, %s243
    %p252 = scmp.eq.s32.totalorder %s21, 0
    %p253 = por %p251, %p252
    %p254 = scmp.ne.s32.totalorder %s242, %s243
    %p255 = scmp.eq.s32.totalorder %s22, 1
    %p256 = por %p254, %p255
    %p258 = scmp.ne.s32.totalorder %s243, %s257
    %p259 = scmp.eq.s32.totalorder %s22, 0
    %p260 = por %p258, %p259
    %s262 = sadd.s32 %s261, 1
    %p265 = scmp.eq.s32.totalorder %s16, 1
    %p266 = scmp.ne.s32.totalorder %s261, %s263
    %p267 = scmp.eq.s32.totalorder %s16, 0
    %p268 = por %p266, %p267
    %p269 = scmp.ne.s32.totalorder %s261, %s263
    %p270 = scmp.eq.s32.totalorder %s21, 1
    %p271 = por %p269, %p270
    %p272 = scmp.ne.s32.totalorder %s263, %s264
    %p273 = scmp.eq.s32.totalorder %s21, 0
    %p274 = por %p272, %p273
    %p275 = scmp.ne.s32.totalorder %s263, %s264
    %p276 = scmp.eq.s32.totalorder %s22, 1
    %p277 = por %p275, %p276
    %p279 = scmp.ne.s32.totalorder %s264, %s278
    %p280 = scmp.eq.s32.totalorder %s22, 0
    %p281 = por %p279, %p280
    %s282 = ssub.s32 %s23, %s35
    %s283 = ssub.s32 %s24, %s31
    %s284 = sor.u32 %s282, %s283
    %p285 = scmp.eq.s32.totalorder %s284, 0
    %s287 = sadd.s32 %s286, 1
    %s288 = scalar_select %p285, %s286, %s287
    %p291 = pneg %p285
    %p292 = scmp.eq.s32.totalorder %s16, 1
    %p293 = por %p291, %p292
    %p294 = scmp.ne.s32.totalorder %s286, %s289
    %p295 = scmp.eq.s32.totalorder %s16, 0
    %p296 = por %p294, %p295
    %p297 = scmp.ne.s32.totalorder %s286, %s289
    %p298 = scmp.eq.s32.totalorder %s21, 1
    %p299 = por %p297, %p298
    %p300 = scmp.ne.s32.totalorder %s289, %s290
    %p301 = scmp.eq.s32.totalorder %s21, 0
    %p302 = por %p300, %p301
    %p303 = scmp.ne.s32.totalorder %s289, %s290
    %p304 = scmp.eq.s32.totalorder %s22, 1
    %p305 = por %p303, %p304
    %p307 = scmp.ne.s32.totalorder %s290, %s306
    %p308 = scmp.eq.s32.totalorder %s22, 0
    %p309 = por %p307, %p308
    %p310 = scmp.le.s32.totalorder 1, %s16
    %p311 = scmp.lt.s32.totalorder %s16, 3
    %p312 = pnand %p310, %p311
    %p313 = pneg %p312
    // Predicated region
    $region9: #{_lambda_.26} parent=5 // pred_check
      _
    $region10: #{_lambda_.26} parent=5 // pred_check_branch
      %315 = sbr.rel (%p312) target = $region12
    $region11: #{_lambda_.26} parent=5 // pred_region
      %s316 = ssub.s32 %s16, 1
      // Predicated region
      $region13: #{_lambda_.26} parent=11 // pred_check
        %p317 = pneg %p211
      $region14: #{_lambda_.26} parent=11 // pred_check_branch
        %319 = sbr.rel (%p317) target = $region16
      $region15: #{_lambda_.26} parent=11 // pred_region
        _
      $region16: #{_lambda_.26} parent=11 // pred_fallthru
        _
      // Predicated region
      $region17: #{_lambda_.26} parent=11 // pred_check
        %p320 = pneg %p232
      $region18: #{_lambda_.26} parent=11 // pred_check_branch
        %322 = sbr.rel (%p320) target = $region20
      $region19: #{_lambda_.26} parent=11 // pred_region
        _
      $region20: #{_lambda_.26} parent=11 // pred_fallthru
        _
      // Predicated region
      $region21: #{_lambda_.26} parent=11 // pred_check
        %p323 = pneg %p253
      $region22: #{_lambda_.26} parent=11 // pred_check_branch
        %325 = sbr.rel (%p323) target = $region24
      $region23: #{_lambda_.26} parent=11 // pred_region
        _
      $region24: #{_lambda_.26} parent=11 // pred_fallthru
        _
      // Predicated region
      $region25: #{_lambda_.26} parent=11 // pred_check
        %p326 = pneg %p274
      $region26: #{_lambda_.26} parent=11 // pred_check_branch
        %328 = sbr.rel (%p326) target = $region28
      $region27: #{_lambda_.26} parent=11 // pred_region
        _
      $region28: #{_lambda_.26} parent=11 // pred_fallthru
        _
    $region12: #{_lambda_.26} parent=5 // pred_fallthru
      _
    %p329 = scmp.lt.s32.totalorder %s16, 2
    // Predicated region
    $region29: #{_lambda_.26} parent=5 // pred_check
      %p330 = pneg %p329
    $region30: #{_lambda_.26} parent=5 // pred_check_branch
      %332 = sbr.rel (%p330) target = $region32
    $region31: #{_lambda_.26} parent=5 // pred_region
      // Predicated region
      $region33: #{_lambda_.26} parent=31 // pred_check
        %p333 = pneg %p50
      $region34: #{_lambda_.26} parent=31 // pred_check_branch
        %335 = sbr.rel (%p333) target = $region36
      $region35: #{_lambda_.26} parent=31 // pred_region
        %p336 = scmp.lt.s32.totalorder %s23, 1
        %s337 = scalar_select %p336, %s23, 1
        %p338 = scmp.lt.s32.totalorder %s24, 0
        %s339 = scalar_select %p338, %s24, 0
        %s340 = smul.addr %s337, 4
        %s341 = sadd.s32 %s339, %s340
        %s342 = smul.addr %s341, 4
        %s343 = scalar_lea.vmem %s0, %s342
      $region36: #{_lambda_.26} parent=31 // pred_fallthru
        _
      // Predicated region
      $region37: #{_lambda_.26} parent=31 // pred_check
        %p344 = pneg %p76
      $region38: #{_lambda_.26} parent=31 // pred_check_branch
        %346 = sbr.rel (%p344) target = $region40
      $region39: #{_lambda_.26} parent=31 // pred_region
        %p347 = scmp.lt.s32.totalorder %s23, 1
        %s348 = scalar_select %p347, %s23, 1
        %s349 = smul.addr %s348, 4
        %s350 = smul.addr %s349, 4
        %s351 = scalar_lea.vmem %s1, %s350
      $region40: #{_lambda_.26} parent=31 // pred_fallthru
        _
      // Predicated region
      $region41: #{_lambda_.26} parent=31 // pred_check
        %p352 = pneg %p102
      $region42: #{_lambda_.26} parent=31 // pred_check_branch
        %354 = sbr.rel (%p352) target = $region44
      $region43: #{_lambda_.26} parent=31 // pred_region
        %p355 = scmp.lt.s32.totalorder %s23, 1
        %s356 = scalar_select %p355, %s23, 1
        %s357 = smul.addr %s356, 4
        %s358 = smul.addr %s357, 4
        %s359 = scalar_lea.vmem %s2, %s358
      $region44: #{_lambda_.26} parent=31 // pred_fallthru
        _
      // Predicated region
      $region45: #{_lambda_.26} parent=31 // pred_check
        %p360 = pneg %p128
      $region46: #{_lambda_.26} parent=31 // pred_check_branch
        %362 = sbr.rel (%p360) target = $region48
      $region47: #{_lambda_.26} parent=31 // pred_region
        %p363 = scmp.lt.s32.totalorder %s23, 1
        %s364 = scalar_select %p363, %s23, 1
        %s365 = scalar_lea.vmem %s3, %s364
      $region48: #{_lambda_.26} parent=31 // pred_fallthru
        _
      // Predicated region
      $region49: #{_lambda_.26} parent=31 // pred_check
        %p366 = pneg %p156
      $region50: #{_lambda_.26} parent=31 // pred_check_branch
        %368 = sbr.rel (%p366) target = $region52
      $region51: #{_lambda_.26} parent=31 // pred_region
        %p369 = scmp.lt.s32.totalorder %s23, 1
        %s370 = scalar_select %p369, %s23, 1
        %p371 = scmp.lt.s32.totalorder %s24, 0
        %s372 = scalar_select %p371, %s24, 0
        %s373 = sadd.s32 %s372, %s370
        %s374 = smul.addr %s373, 4
        %s375 = scalar_lea.vmem %s4, %s374
      $region52: #{_lambda_.26} parent=31 // pred_fallthru
        _
      // Predicated region
      $region53: #{_lambda_.26} parent=31 // pred_check
        %p376 = pneg %p184
      $region54: #{_lambda_.26} parent=31 // pred_check_branch
        %378 = sbr.rel (%p376) target = $region56
      $region55: #{_lambda_.26} parent=31 // pred_region
        %p379 = scmp.lt.s32.totalorder %s23, 1
        %s380 = scalar_select %p379, %s23, 1
        %p381 = scmp.lt.s32.totalorder %s24, 0
        %s382 = scalar_select %p381, %s24, 0
        %s383 = sadd.s32 %s382, %s380
        %s384 = smul.addr %s383, 8
        %s385 = scalar_lea.vmem %s5, %s384
      $region56: #{_lambda_.26} parent=31 // pred_fallthru
        _
    $region32: #{_lambda_.26} parent=5 // pred_fallthru
      _
    %p386 = scmp.le.s32.totalorder 1, %s16
    %p387 = scmp.lt.s32.totalorder %s16, 3
    %p388 = pnand %p386, %p387
    %p389 = pneg %p388
    // Predicated region
    $region57: #{_lambda_.26} parent=5 // pred_check
      _
    $region58: #{_lambda_.26} parent=5 // pred_check_branch
      %391 = sbr.rel (%p388) target = $region60
    $region59: #{_lambda_.26} parent=5 // pred_region
      %s392 = ssub.s32 %s16, 1
      %p393 = scmp.lt.s32.totalorder %s25, 1
      %s394 = scalar_select %p393, %s25, 1
      %p395 = scmp.lt.s32.totalorder %s26, 0
      %s396 = scalar_select %p395, %s26, 0
      %s397 = smul.addr %s394, 4
      %s398 = sadd.s32 %s396, %s397
      %s399 = smul.addr %s398, 4
      %s400 = scalar_lea.vmem %s0, %s399
      %p401 = pneg %p56
      %p402 = pneg %p53
      %p403 = scmp.lt.s32.totalorder %s25, 1
      %s404 = scalar_select %p403, %s25, 1
      %s405 = smul.addr %s404, 4
      %s406 = smul.addr %s405, 4
      %s407 = scalar_lea.vmem %s1, %s406
      %p408 = pneg %p82
      %p409 = pneg %p79
      %p410 = scmp.lt.s32.totalorder %s25, 1
      %s411 = scalar_select %p410, %s25, 1
      %s412 = smul.addr %s411, 4
      %s413 = smul.addr %s412, 4
      %s414 = scalar_lea.vmem %s2, %s413
      %p415 = pneg %p108
      %p416 = pneg %p105
      %p417 = scmp.lt.s32.totalorder %s25, 1
      %s418 = scalar_select %p417, %s25, 1
      %s419 = scalar_lea.vmem %s3, %s418
      %p420 = pneg %p134
      %p421 = pneg %p131
      %p422 = scmp.lt.s32.totalorder %s25, 1
      %s423 = scalar_select %p422, %s25, 1
      %p424 = scmp.lt.s32.totalorder %s26, 0
      %s425 = scalar_select %p424, %s26, 0
      %s426 = sadd.s32 %s425, %s423
      %s427 = smul.addr %s426, 4
      %s428 = scalar_lea.vmem %s4, %s427
      %p429 = pneg %p162
      %p430 = pneg %p159
      %p431 = scmp.lt.s32.totalorder %s25, 1
      %s432 = scalar_select %p431, %s25, 1
      %p433 = scmp.lt.s32.totalorder %s26, 0
      %s434 = scalar_select %p433, %s26, 0
      %s435 = sadd.s32 %s434, %s432
      %s436 = smul.addr %s435, 8
      %s437 = scalar_lea.vmem %s5, %s436
      %p438 = pneg %p190
      %p439 = pneg %p187
      %p440 = pneg %p211
      %p441 = pneg %p208
      %p442 = pneg %p232
      %p443 = pneg %p229
      %p444 = pneg %p253
      %p445 = pneg %p250
      %p446 = pneg %p274
      %p447 = pneg %p271
      %p448 = pneg %p302
      %p449 = pneg %p299
      %p450 = scmp.lt.s32.totalorder %s25, 1
      %s451 = scalar_select %p450, %s25, 1
      %p452 = scmp.lt.s32.totalorder %s26, 0
      %s453 = scalar_select %p452, %s26, 0
      %s454 = sadd.s32 %s453, %s451
      %s455 = smul.addr %s454, 4
      %s456 = scalar_lea.vmem %s10, %s455
      %p457 = scmp.lt.s32.totalorder %s25, 1
      %s458 = scalar_select %p457, %s25, 1
      %p459 = scmp.lt.s32.totalorder %s26, 0
      %s460 = scalar_select %p459, %s26, 0
      %s461 = smul.addr %s458, 4
      %s462 = sadd.s32 %s460, %s461
      %s463 = smul.addr %s462, 4
      %s464 = scalar_lea.vmem %s0, %s463
      %p465 = scmp.lt.s32.totalorder %s25, 1
      %s466 = scalar_select %p465, %s25, 1
      %s467 = smul.addr %s466, 4
      %s468 = smul.addr %s467, 4
      %s469 = scalar_lea.vmem %s1, %s468
      %p470 = scmp.lt.s32.totalorder %s25, 1
      %s471 = scalar_select %p470, %s25, 1
      %s472 = smul.addr %s471, 4
      %s473 = smul.addr %s472, 4
      %s474 = scalar_lea.vmem %s2, %s473
      %p475 = scmp.lt.s32.totalorder %s25, 1
      %s476 = scalar_select %p475, %s25, 1
      %s477 = scalar_lea.vmem %s3, %s476
      %p478 = scmp.lt.s32.totalorder %s25, 1
      %s479 = scalar_select %p478, %s25, 1
      %p480 = scmp.lt.s32.totalorder %s26, 0
      %s481 = scalar_select %p480, %s26, 0
      %s482 = sadd.s32 %s481, %s479
      %s483 = smul.addr %s482, 4
      %s484 = scalar_lea.vmem %s4, %s483
      %p485 = scmp.lt.s32.totalorder %s25, 1
      %s486 = scalar_select %p485, %s25, 1
      %p487 = scmp.lt.s32.totalorder %s26, 0
      %s488 = scalar_select %p487, %s26, 0
      %s489 = sadd.s32 %s488, %s486
      %s490 = smul.addr %s489, 8
      %s491 = scalar_lea.vmem %s5, %s490
      %p492 = scmp.lt.s32.totalorder %s25, 1
      %s493 = scalar_select %p492, %s25, 1
      %p494 = scmp.lt.s32.totalorder %s26, 0
      %s495 = scalar_select %p494, %s26, 0
      %s496 = sadd.s32 %s495, %s493
      %s497 = smul.addr %s496, 4
      %s498 = scalar_lea.vmem %s10, %s497
      %v500 = vld [vmem:[%s477] sm:$0x1]
      %s501 = smul.u32 %s26, 7
      %v502 = vlaneseq
      %v503 = vshrl.u32 %v502, 7
      %v504 = vstv %s501
      %v505 = vadd.s32 %v504, %v503
      %v506 = vlaneseq
      %v507 = vand.u32 %v506, 127
      %vm508 = vcmp.gt.s32.totalorder %v507, %v505
      %v509 = vsel %vm508, -1e+30, 0.0
      %v510 = vld [vmem:[%s464] sm:$0xf]
      %v511 = vld [vmem:[%s469] sm:$0xf]
      %v512 = vld [vmem:[%s474] sm:$0xf]
      %v514 = vperm.slane %v500, 0
      %vm516 = vcmask 64512
      %v518 = vsel %vm516, %v510, 0
      %v521 = vsel %vm516, %v511, 0
      %523 = vmatpush.bf16.xpose.msra.mxu0 0
      %524 = vmatpush.bf16.xpose.msra.mxu0 0
      %525 = vmatpush.bf16.xpose.msra.mxu0 0
      %526 = vmatpush.bf16.xpose.msra.mxu0 0
      %527 = vmatpush.bf16.xpose.msra.mxu0 0
      %528 = vmatpush.bf16.xpose.msra.mxu0 0
      %529 = vmatpush.bf16.xpose.msra.mxu0 0
      %530 = vmatpush.bf16.xpose.msra.mxu0 %v521
      %531 = vmatmul.bf16.gmra.mxu0 %v518
      %v532 = vpop.f32.mrf.mxu0
      %v533 = vadd.f32 %v514, %v532
      %v534 = vpop.f32.mrf.mxu0
      %535 = vdwg.mxu0
      %v536 = vadd.f32 %v533, %v509
      %vm537 = vcmask 55296
      %v538 = vsel %vm537, %v536, -inf
      %539 = vmax.xlane.f32.xlu0 %v538
      %v540 = vpop.xlane.xlu0 %539
      %v541 = vsub.f32 %v536, %v540
      %v542 = vmul.f32 %v541, 1.442695
      %v543 = vpow.pop %v542
      %v544 = vsel %vm537, %v543, 0.0
      %545 = vadd.xlane.f32.xlu0 %v544
      %v546 = vpop.xlane.xlu0 %545
      %v547 = vrcp.pop %v546
      %v548 = vmul.f32 %v543, %v547
      %v549 = vpack.c.bf16 %v548, %v548
      %vm550 = vcmask 56320
      %v552 = vsel %vm550, %v549, 0
      %vm554 = vcmask 1042432
      %vm555 = vcmask 1043456
      %v556 = vsel %vm554, 4294967295, 65535
      %v557 = vsel %vm555, %v556, 0
      %v559 = vand.u32 %v512, %v557
      %561 = vmatpush.bf16.msra.mxu0 0
      %562 = vmatpush.bf16.msra.mxu0 0
      %563 = vmatpush.bf16.msra.mxu0 0
      %564 = vmatpush.bf16.msra.mxu0 0
      %565 = vmatpush.bf16.msra.mxu0 0
      %566 = vmatpush.bf16.msra.mxu0 0
      %567 = vmatpush.bf16.msra.mxu0 0
      %568 = vmatpush.bf16.msra.mxu0 %v559
      %569 = vmatmul.bf16.gmra.mxu0 %v552
      %v570 = vpop.f32.mrf.mxu0
      %v571 = vadd.f32 0.0, %v570
      %v572 = vpop.f32.mrf.mxu0
      %573 = vdwg.mxu0
      %v574 = vpack.c.bf16 %v571, %v571
      %vm575 = vcmask 60416
      %vm576 = vsmask.f32 3328
      %vm577 = vmand %vm575, %vm576
      %v578 = vld [vmem:[#allocation2] sm:$0xf]
      %v579 = vsel %vm577, %v574, %v578
      %580 = vst [vmem:[#allocation2] sm:$0xf] %v579
      %s581 = scalar_lea.vmem %s464, 4
      %v582 = vld [vmem:[%s581] sm:$0xf]
      %s583 = scalar_lea.vmem %s469, 4
      %v584 = vld [vmem:[%s583] sm:$0xf]
      %s585 = scalar_lea.vmem %s474, 4
      %v586 = vld [vmem:[%s585] sm:$0xf]
      %v588 = vsel %vm516, %v582, 0
      %v591 = vsel %vm516, %v584, 0
      %593 = vmatpush.bf16.xpose.msra.mxu0 0
      %594 = vmatpush.bf16.xpose.msra.mxu0 0
      %595 = vmatpush.bf16.xpose.msra.mxu0 0
      %596 = vmatpush.bf16.xpose.msra.mxu0 0
      %597 = vmatpush.bf16.xpose.msra.mxu0 0
      %598 = vmatpush.bf16.xpose.msra.mxu0 0
      %599 = vmatpush.bf16.xpose.msra.mxu0 0
      %600 = vmatpush.bf16.xpose.msra.mxu0 %v591
      %601 = vmatmul.bf16.gmra.mxu0 %v588
      %v602 = vpop.f32.mrf.mxu0
      %v603 = vadd.f32 %v514, %v602
      %v604 = vpop.f32.mrf.mxu0
      %605 = vdwg.mxu0
      %v606 = vadd.f32 %v603, %v509
      %v607 = vsel %vm537, %v606, -inf
      %608 = vmax.xlane.f32.xlu0 %v607
      %v609 = vpop.xlane.xlu0 %608
      %v610 = vsub.f32 %v606, %v609
      %v611 = vmul.f32 %v610, 1.442695
      %v612 = vpow.pop %v611
      %v613 = vsel %vm537, %v612, 0.0
      %614 = vadd.xlane.f32.xlu0 %v613
      %v615 = vpop.xlane.xlu0 %614
      %v616 = vrcp.pop %v615
      %v617 = vmul.f32 %v612, %v616
      %v618 = vpack.c.bf16 %v617, %v617
      %v620 = vsel %vm550, %v618, 0
      %v623 = vand.u32 %v586, %v557
      %625 = vmatpush.bf16.msra.mxu0 0
      %626 = vmatpush.bf16.msra.mxu0 0
      %627 = vmatpush.bf16.msra.mxu0 0
      %628 = vmatpush.bf16.msra.mxu0 0
      %629 = vmatpush.bf16.msra.mxu0 0
      %630 = vmatpush.bf16.msra.mxu0 0
      %631 = vmatpush.bf16.msra.mxu0 0
      %632 = vmatpush.bf16.msra.mxu0 %v623
      %633 = vmatmul.bf16.gmra.mxu0 %v620
      %v634 = vpop.f32.mrf.mxu0
      %v635 = vadd.f32 0.0, %v634
      %v636 = vpop.f32.mrf.mxu0
      %637 = vdwg.mxu0
      %v638 = vpack.c.bf16 %v635, %v635
      %640 = vrot.lane.b32.xlu0 %v638, 8
      %v641 = vpop.permute.xlu0 %640
      %vm643 = vcmask 126016
      %vm644 = vmand %vm643, %vm576
      %v645 = vld [vmem:[#allocation2] sm:$0xf]
      %v646 = vsel %vm644, %v641, %v645
      %647 = vst [vmem:[#allocation2] sm:$0xf] %v646
      %s648 = scalar_lea.vmem %s464, 8
      %v649 = vld [vmem:[%s648] sm:$0xf]
      %s650 = scalar_lea.vmem %s469, 8
      %v651 = vld [vmem:[%s650] sm:$0xf]
      %s652 = scalar_lea.vmem %s474, 8
      %v653 = vld [vmem:[%s652] sm:$0xf]
      %v655 = vsel %vm516, %v649, 0
      %v658 = vsel %vm516, %v651, 0
      %660 = vmatpush.bf16.xpose.msra.mxu0 0
      %661 = vmatpush.bf16.xpose.msra.mxu0 0
      %662 = vmatpush.bf16.xpose.msra.mxu0 0
      %663 = vmatpush.bf16.xpose.msra.mxu0 0
      %664 = vmatpush.bf16.xpose.msra.mxu0 0
      %665 = vmatpush.bf16.xpose.msra.mxu0 0
      %666 = vmatpush.bf16.xpose.msra.mxu0 0
      %667 = vmatpush.bf16.xpose.msra.mxu0 %v658
      %668 = vmatmul.bf16.gmra.mxu0 %v655
      %v669 = vpop.f32.mrf.mxu0
      %v670 = vadd.f32 %v514, %v669
      %v671 = vpop.f32.mrf.mxu0
      %672 = vdwg.mxu0
      %v673 = vadd.f32 %v670, %v509
      %v674 = vsel %vm537, %v673, -inf
      %675 = vmax.xlane.f32.xlu0 %v674
      %v676 = vpop.xlane.xlu0 %675
      %v677 = vsub.f32 %v673, %v676
      %v678 = vmul.f32 %v677, 1.442695
      %v679 = vpow.pop %v678
      %v680 = vsel %vm537, %v679, 0.0
      %681 = vadd.xlane.f32.xlu0 %v680
      %v682 = vpop.xlane.xlu0 %681
      %v683 = vrcp.pop %v682
      %v684 = vmul.f32 %v679, %v683
      %v685 = vpack.c.bf16 %v684, %v684
      %v687 = vsel %vm550, %v685, 0
      %v690 = vand.u32 %v653, %v557
      %692 = vmatpush.bf16.msra.mxu0 0
      %693 = vmatpush.bf16.msra.mxu0 0
      %694 = vmatpush.bf16.msra.mxu0 0
      %695 = vmatpush.bf16.msra.mxu0 0
      %696 = vmatpush.bf16.msra.mxu0 0
      %697 = vmatpush.bf16.msra.mxu0 0
      %698 = vmatpush.bf16.msra.mxu0 0
      %699 = vmatpush.bf16.msra.mxu0 %v690
      %700 = vmatmul.bf16.gmra.mxu0 %v687
      %v701 = vpop.f32.mrf.mxu0
      %v702 = vadd.f32 0.0, %v701
      %v703 = vpop.f32.mrf.mxu0
      %704 = vdwg.mxu0
      %v705 = vpack.c.bf16 %v702, %v702
      %707 = vrot.lane.b32.xlu0 %v705, 16
      %v708 = vpop.permute.xlu0 %707
      %vm710 = vcmask 191616
      %vm711 = vmand %vm710, %vm576
      %v712 = vld [vmem:[#allocation2] sm:$0xf]
      %v713 = vsel %vm711, %v708, %v712
      %714 = vst [vmem:[#allocation2] sm:$0xf] %v713
      %s715 = scalar_lea.vmem %s464, 12
      %v716 = vld [vmem:[%s715] sm:$0xf]
      %s717 = scalar_lea.vmem %s469, 12
      %v718 = vld [vmem:[%s717] sm:$0xf]
      %s719 = scalar_lea.vmem %s474, 12
      %v720 = vld [vmem:[%s719] sm:$0xf]
      %v722 = vsel %vm516, %v716, 0
      %v725 = vsel %vm516, %v718, 0
      %727 = vmatpush.bf16.xpose.msra.mxu0 0
      %728 = vmatpush.bf16.xpose.msra.mxu0 0
      %729 = vmatpush.bf16.xpose.msra.mxu0 0
      %730 = vmatpush.bf16.xpose.msra.mxu0 0
      %731 = vmatpush.bf16.xpose.msra.mxu0 0
      %732 = vmatpush.bf16.xpose.msra.mxu0 0
      %733 = vmatpush.bf16.xpose.msra.mxu0 0
      %734 = vmatpush.bf16.xpose.msra.mxu0 %v725
      %735 = vmatmul.bf16.gmra.mxu0 %v722
      %v736 = vpop.f32.mrf.mxu0
      %v737 = vadd.f32 %v514, %v736
      %v738 = vpop.f32.mrf.mxu0
      %739 = vdwg.mxu0
      %v740 = vadd.f32 %v737, %v509
      %v741 = vsel %vm537, %v740, -inf
      %742 = vmax.xlane.f32.xlu0 %v741
      %v743 = vpop.xlane.xlu0 %742
      %v744 = vsub.f32 %v740, %v743
      %v745 = vmul.f32 %v744, 1.442695
      %v746 = vpow.pop %v745
      %v747 = vsel %vm537, %v746, 0.0
      %748 = vadd.xlane.f32.xlu0 %v747
      %v749 = vpop.xlane.xlu0 %748
      %v750 = vrcp.pop %v749
      %v751 = vmul.f32 %v746, %v750
      %v752 = vpack.c.bf16 %v751, %v751
      %v754 = vsel %vm550, %v752, 0
      %v757 = vand.u32 %v720, %v557
      %759 = vmatpush.bf16.msra.mxu0 0
      %760 = vmatpush.bf16.msra.mxu0 0
      %761 = vmatpush.bf16.msra.mxu0 0
      %762 = vmatpush.bf16.msra.mxu0 0
      %763 = vmatpush.bf16.msra.mxu0 0
      %764 = vmatpush.bf16.msra.mxu0 0
      %765 = vmatpush.bf16.msra.mxu0 0
      %766 = vmatpush.bf16.msra.mxu0 %v757
      %767 = vmatmul.bf16.gmra.mxu0 %v754
      %v768 = vpop.f32.mrf.mxu0
      %v769 = vadd.f32 0.0, %v768
      %v770 = vpop.f32.mrf.mxu0
      %771 = vdwg.mxu0
      %v772 = vpack.c.bf16 %v769, %v769
      %774 = vrot.lane.b32.xlu0 %v772, 24
      %v775 = vpop.permute.xlu0 %774
      %vm777 = vcmask 257216
      %vm778 = vmand %vm777, %vm576
      %v779 = vld [vmem:[#allocation2] sm:$0xf]
      %v780 = vsel %vm778, %v775, %v779
      %781 = vst [vmem:[#allocation2] sm:$0xf] %v780
      %v782 = vld [vmem:[#allocation2] sm:$0xf]
      %v783 = vld [vmem:[%s6] sm:$0xf]
      %v784 = vld [vmem:[%s6 + $0x4] sm:$0xf]
      %v785 = vld [vmem:[%s6 + $0x8] sm:$0xf]
      %v786 = vld [vmem:[%s6 + $0xc] sm:$0xf]
      %v787 = vld [vmem:[%s7] sm:$0x1]
      %v789 = vperm.slane %v787, 0
      %v795 = vunpack.c.l.b16 %v783
      %v796 = vunpack.c.l.b16 %v784
      %v797 = vunpack.c.l.b16 %v785
      %v798 = vunpack.c.l.b16 %v786
      %v799 = vpack.c.b16 %v796, %v795
      %v800 = vpack.c.b16 %v798, %v797
      %vm803 = vcmask 261120
      %v805 = vsel %vm803, %v782, 0
      %807 = vmatpush.bf16.msra.mxu0 0
      %808 = vmatpush.bf16.msra.mxu0 0
      %809 = vmatpush.bf16.msra.mxu0 0
      %810 = vmatpush.bf16.msra.mxu0 0
      %811 = vmatpush.bf16.msra.mxu0 0
      %812 = vmatpush.bf16.msra.mxu0 0
      %813 = vmatpush.bf16.msra.mxu0 %v800
      %814 = vmatpush.bf16.msra.mxu0 %v799
      %815 = vmatmul.bf16.gmra.mxu0 %v805
      %v816 = vpop.f32.mrf.mxu0
      %v817 = vadd.f32 %v789, %v816
      %v818 = vpop.f32.mrf.mxu0
      %819 = vdwg.mxu0
      %v820 = vld [vmem:[%s484] sm:$0xf]
      %v821 = vunpack.c.l.bf16 %v820
      %v822 = vadd.f32 %v817, %v821
      %vm823 = vcmask 260096
      %v824 = vsel %vm823, %v822, 0.0
      %825 = vadd.xlane.f32.xlu0 %v824
      %v826 = vpop.xlane.xlu0 %825
      %v827 = vrcp.pop 32.0
      %v828 = vmul.f32 32.0, %v827
      %v829 = vsub.f32 1.0, %v828
      %v830 = vmul.f32 %v827, %v829
      %v831 = vadd.f32 %v827, %v830
      %vm832 = vweird.f32 %v827
      %v833 = vsel %vm832, %v827, %v831
      %v834 = vmul.f32 %v826, %v833
      %v835 = vsub.f32 %v822, %v834
      %v836 = vmul.f32 %v835, %v835
      %v837 = vsel %vm823, %v836, 0.0
      %838 = vadd.xlane.f32.xlu0 %v837
      %v839 = vpop.xlane.xlu0 %838
      %v840 = vmul.f32 %v839, %v833
      %v841 = vadd.f32 %v840, 1e-05
      %v842 = vrsqrt.pop %v841
      %v843 = vmul.f32 %v842, %v841
      %v844 = vmul.f32 %v843, %v842
      %v845 = vmul.f32 0.5, %v844
      %v846 = vsub.f32 1.5, %v845
      %v847 = vmul.f32 %v842, %v846
      %vm848 = vweird.f32 %v841
      %vm849 = vweird.f32 %v842
      %vm850 = vmor %vm848, %vm849
      %v851 = vsel %vm850, %v842, %v847
      %v852 = vmul.f32 %v835, %v851
      %v853 = vld [vmem:[%s8] sm:$0x1]
      %v855 = vperm.slane %v853, 0
      %v857 = vmul.f32 %v852, %v855
      %v858 = vld [vmem:[%s9] sm:$0x1]
      %v860 = vperm.slane %v858, 0
      %v862 = vadd.f32 %v857, %v860
      %v863 = vld [vmem:[%s491] sm:$0x7f]
      %865 = vset.pattern.permute.xlu0 0
      %866 = vperm.xlu0 %865, %v863
      %v867 = vpop.permute.xlu0 %866
      %v869 = vmul.f32 %v862, %v867
      %v870 = vpack.c.bf16 %v869, %v869
      %vm871 = vcmask 257024
      %vm872 = vmand %vm871, %vm576
      %v873 = vld [vmem:[%s498] sm:$0xf]
      %v874 = vsel %vm872, %v870, %v873
      %875 = vst [vmem:[%s498] sm:$0xf] %v874
      %p876 = scmp.lt.s32.totalorder %s25, 1
      %s877 = scalar_select %p876, %s25, 1
      %p878 = scmp.lt.s32.totalorder %s26, 0
      %s879 = scalar_select %p878, %s26, 0
      %s880 = sadd.s32 %s879, %s877
      %s881 = smul.addr %s880, 4
      %s882 = scalar_lea.vmem %s10, %s881
      // Predicated region
      $region61: #{_lambda_.26} parent=59 // pred_check
        %p883 = pneg %p299
      $region62: #{_lambda_.26} parent=59 // pred_check_branch
        %885 = sbr.rel (%p883) target = $region64
      $region63: #{_lambda_.26} parent=59 // pred_region
        _
      $region64: #{_lambda_.26} parent=59 // pred_fallthru
        _
    $region60: #{_lambda_.26} parent=5 // pred_fallthru
      _
    %p886 = scmp.le.s32.totalorder 2, %s16
    // Predicated region
    $region65: #{_lambda_.26} parent=5 // pred_check
      %p887 = pneg %p886
    $region66: #{_lambda_.26} parent=5 // pred_check_branch
      %889 = sbr.rel (%p887) target = $region68
    $region67: #{_lambda_.26} parent=5 // pred_region
      %s890 = ssub.s32 %s16, 2
      // Predicated region
      $region69: #{_lambda_.26} parent=67 // pred_check
        %p891 = pneg %p305
      $region70: #{_lambda_.26} parent=67 // pred_check_branch
        %893 = sbr.rel (%p891) target = $region72
      $region71: #{_lambda_.26} parent=67 // pred_region
        %p894 = scmp.lt.s32.totalorder %s27, 1
        %s895 = scalar_select %p894, %s27, 1
        %p896 = scmp.lt.s32.totalorder %s28, 0
        %s897 = scalar_select %p896, %s28, 0
        %s898 = sadd.s32 %s897, %s895
        %s899 = smul.addr %s898, 4
        %s900 = scalar_lea.vmem %s10, %s899
      $region72: #{_lambda_.26} parent=67 // pred_fallthru
        _
    $region68: #{_lambda_.26} parent=5 // pred_fallthru
      _
  $region6: #{_lambda_.26} parent=0 // loop_footer
    %s20 = sadd.s32 1, %s16
  $region7: #{_lambda_.26} parent=0 // loop_footer_branch
    %15 = sbr.rel target = $region3
  $region8: #{_lambda_.26} parent=0 // loop_exit
    _

// kernel: _lambda_.30
$region0: #{_lambda_.30}
  #allocation0 [shape = 'u32[]', space=smem, size = 0x4, offset = 0x4, fixed_abs, tag = 'smem constant byte address 0x4 - core index']
  #allocation1 [shape = 'u32[72,128]{1,0:T(1,128)}', space=vmem, size = 0x9000, scoped, tag = 'internal scratch']
  %s0 = inlined_call_operand.vmem [shape: bf16[14,32], index: 0, kind: input, shape index: {}]
  %s1 = inlined_call_operand.vmem [shape: bf16[32,64], index: 1, kind: input, shape index: {}]
  %s2 = inlined_call_operand.vmem [shape: f32[1,64], index: 2, kind: input, shape index: {}]
  %s3 = inlined_call_operand.vmem [shape: bf16[64,32], index: 3, kind: input, shape index: {}]
  %s4 = inlined_call_operand.vmem [shape: f32[1,32], index: 4, kind: input, shape index: {}, may-alias: {4,6}]
  %s5 = inlined_call_operand.vmem [shape: f32[1,32], index: 5, kind: input, shape index: {}]
  %s6 = inlined_call_operand.vmem [shape: f32[1,32], index: 6, kind: input, shape index: {}, may-alias: {4,6}]
  %s7 = inlined_call_operand.vmem [shape: f32[14,1], index: 7, kind: input, shape index: {}]
  %s8 = inlined_call_operand.vmem [shape: bf16[14,32], index: 8, kind: output, shape index: {}]
  %s9 = sld [smem:[#allocation0]]
  $region42: #{_lambda_.30} parent=0
    _
  %s11 = ssub.s32 1, %s9
  %s12 = scalar_select 0, %s11, %s9
  // Predicated region
  $region2: #{_lambda_.30} parent=0 // pred_check
    _
  $region3: #{_lambda_.30} parent=0 // pred_check_branch
    %14 = sbr.rel (0) target = $region5
  $region4: #{_lambda_.30} parent=0 // pred_region
    _
  $region5: #{_lambda_.30} parent=0 // pred_fallthru
    _
  // Predicated region
  $region6: #{_lambda_.30} parent=0 // pred_check
    _
  $region7: #{_lambda_.30} parent=0 // pred_check_branch
    %16 = sbr.rel (0) target = $region9
  $region8: #{_lambda_.30} parent=0 // pred_region
    _
  $region9: #{_lambda_.30} parent=0 // pred_fallthru
    _
  // Predicated region
  $region10: #{_lambda_.30} parent=0 // pred_check
    _
  $region11: #{_lambda_.30} parent=0 // pred_check_branch
    %18 = sbr.rel (0) target = $region13
  $region12: #{_lambda_.30} parent=0 // pred_region
    _
  $region13: #{_lambda_.30} parent=0 // pred_fallthru
    _
  // Predicated region
  $region14: #{_lambda_.30} parent=0 // pred_check
    _
  $region15: #{_lambda_.30} parent=0 // pred_check_branch
    %20 = sbr.rel (0) target = $region17
  $region16: #{_lambda_.30} parent=0 // pred_region
    _
  $region17: #{_lambda_.30} parent=0 // pred_fallthru
    _
  // Predicated region
  $region18: #{_lambda_.30} parent=0 // pred_check
    _
  $region19: #{_lambda_.30} parent=0 // pred_check_branch
    %22 = sbr.rel (0) target = $region21
  $region20: #{_lambda_.30} parent=0 // pred_region
    _
  $region21: #{_lambda_.30} parent=0 // pred_fallthru
    _
  // Predicated region
  $region22: #{_lambda_.30} parent=0 // pred_check
    _
  $region23: #{_lambda_.30} parent=0 // pred_check_branch
    %24 = sbr.rel (0) target = $region25
  $region24: #{_lambda_.30} parent=0 // pred_region
    _
  $region25: #{_lambda_.30} parent=0 // pred_fallthru
    _
  // Predicated region
  $region26: #{_lambda_.30} parent=0 // pred_check
    _
  $region27: #{_lambda_.30} parent=0 // pred_check_branch
    %26 = sbr.rel (0) target = $region29
  $region28: #{_lambda_.30} parent=0 // pred_region
    _
  $region29: #{_lambda_.30} parent=0 // pred_fallthru
    _
  // Predicated region
  $region30: #{_lambda_.30} parent=0 // pred_check
    _
  $region31: #{_lambda_.30} parent=0 // pred_check_branch
    %28 = sbr.rel (0) target = $region33
  $region32: #{_lambda_.30} parent=0 // pred_region
    _
  $region33: #{_lambda_.30} parent=0 // pred_fallthru
    _
  %v30 = vld [vmem:[%s0] sm:$0xf]
  %v31 = vld [vmem:[%s0 + $0x4] sm:$0x7]
  %v32 = vld [vmem:[%s1] sm:$0xf]
  %v33 = vld [vmem:[%s1 + $0x4] sm:$0xf]
  %v34 = vld [vmem:[%s1 + $0x8] sm:$0xf]
  %v35 = vld [vmem:[%s1 + $0xc] sm:$0xf]
  %v36 = vld [vmem:[%s2] sm:$0x1]
  %v38 = vperm.slane %v36, 0
  %v42 = vunpack.c.l.b16 %v30
  %v43 = vunpack.c.l.b16 %v31
  %v44 = vpack.c.b16 %v43, %v42
  %v49 = vunpack.c.l.b16 %v32
  %v50 = vunpack.c.l.b16 %v33
  %v51 = vunpack.c.l.b16 %v34
  %v52 = vunpack.c.l.b16 %v35
  %v53 = vpack.c.b16 %v50, %v49
  %v54 = vpack.c.b16 %v52, %v51
  %vm57 = vcmask 261120
  %v59 = vsel %vm57, %v44, 0
  %61 = vmatpush.bf16.msra.mxu0 0
  %62 = vmatpush.bf16.msra.mxu0 0
  %63 = vmatpush.bf16.msra.mxu0 0
  %64 = vmatpush.bf16.msra.mxu0 0
  %65 = vmatpush.bf16.msra.mxu0 0
  %66 = vmatpush.bf16.msra.mxu0 0
  %67 = vmatpush.bf16.msra.mxu0 %v54
  %68 = vmatpush.bf16.msra.mxu0 %v53
  %69 = vmatmul.bf16.gmra.mxu0 %v59
  %v70 = vpop.f32.mrf.mxu0
  %v71 = vadd.f32 %v38, %v70
  %v72 = vpop.f32.mrf.mxu0
  %v73 = vadd.f32 %v38, %v72
  %74 = vdwg.mxu0
  %v75 = vmax.f32 %v71, 0.0
  %v76 = vmax.f32 %v73, 0.0
  %v77 = vpack.c.bf16 %v76, %v75
  %v78 = vld [vmem:[%s3] sm:$0xf]
  %v79 = vld [vmem:[%s3 + $0x4] sm:$0xf]
  %v80 = vld [vmem:[%s3 + $0x8] sm:$0xf]
  %v81 = vld [vmem:[%s3 + $0xc] sm:$0xf]
  %v82 = vld [vmem:[%s3 + $0x10] sm:$0xf]
  %v83 = vld [vmem:[%s3 + $0x14] sm:$0xf]
  %v84 = vld [vmem:[%s3 + $0x18] sm:$0xf]
  %v85 = vld [vmem:[%s3 + $0x1c] sm:$0xf]
  %v86 = vld [vmem:[%s4] sm:$0x1]
  %v88 = vperm.slane %v86, 0
  %v98 = vunpack.c.l.b16 %v78
  %v99 = vunpack.c.l.b16 %v79
  %v100 = vunpack.c.l.b16 %v80
  %v101 = vunpack.c.l.b16 %v81
  %v102 = vunpack.c.l.b16 %v82
  %v103 = vunpack.c.l.b16 %v83
  %v104 = vunpack.c.l.b16 %v84
  %v105 = vunpack.c.l.b16 %v85
  %v106 = vpack.c.b16 %v99, %v98
  %v107 = vpack.c.b16 %v101, %v100
  %v108 = vpack.c.b16 %v103, %v102
  %v109 = vpack.c.b16 %v105, %v104
  %vm114 = vcmask 523264
  %v116 = vsel %vm114, %v77, 0
  %118 = vmatpush.bf16.msra.mxu0 0
  %119 = vmatpush.bf16.msra.mxu0 0
  %120 = vmatpush.bf16.msra.mxu0 0
  %121 = vmatpush.bf16.msra.mxu0 0
  %122 = vmatpush.bf16.msra.mxu0 %v109
  %123 = vmatpush.bf16.msra.mxu0 %v108
  %124 = vmatpush.bf16.msra.mxu0 %v107
  %125 = vmatpush.bf16.msra.mxu0 %v106
  %126 = vmatmul.bf16.gmra.mxu0 %v116
  %v127 = vpop.f32.mrf.mxu0
  %v128 = vadd.f32 %v88, %v127
  %v129 = vpop.f32.mrf.mxu0
  %v130 = vadd.f32 %v88, %v129
  %131 = vdwg.mxu0
  %v132 = vunpack.c.l.bf16 %v30
  %v133 = vunpack.c.l.bf16 %v31
  %v134 = vadd.f32 %v128, %v132
  %v135 = vadd.f32 %v130, %v133
  %v136 = vsel %vm57, %v134, 0.0
  %137 = vadd.xlane.f32.xlu0 %v136
  %v138 = vpop.xlane.xlu0 %137
  %vm139 = vcmask 259072
  %v140 = vsel %vm139, %v135, 0.0
  %141 = vadd.xlane.f32.xlu0 %v140
  %v142 = vpop.xlane.xlu0 %141
  %v143 = vrcp.pop 32.0
  %v144 = vmul.f32 32.0, %v143
  %v145 = vsub.f32 1.0, %v144
  %v146 = vmul.f32 %v143, %v145
  %v147 = vadd.f32 %v143, %v146
  %vm148 = vweird.f32 %v143
  %v149 = vsel %vm148, %v143, %v147
  %v150 = vmul.f32 %v138, %v149
  %v151 = vmul.f32 %v142, %v149
  %v152 = vsub.f32 %v134, %v150
  %v153 = vsub.f32 %v135, %v151
  %v154 = vmul.f32 %v152, %v152
  %v155 = vmul.f32 %v153, %v153
  %v156 = vsel %vm57, %v154, 0.0
  %157 = vadd.xlane.f32.xlu0 %v156
  %v158 = vpop.xlane.xlu0 %157
  %v159 = vsel %vm139, %v155, 0.0
  %160 = vadd.xlane.f32.xlu0 %v159
  %v161 = vpop.xlane.xlu0 %160
  %v162 = vmul.f32 %v158, %v149
  %v163 = vmul.f32 %v161, %v149
  %v164 = vadd.f32 %v162, 1e-05
  %v165 = vadd.f32 %v163, 1e-05
  %v166 = vrsqrt.pop %v164
  %v167 = vmul.f32 %v166, %v164
  %v168 = vmul.f32 %v167, %v166
  %v169 = vmul.f32 0.5, %v168
  %v170 = vsub.f32 1.5, %v169
  %v171 = vmul.f32 %v166, %v170
  %vm172 = vweird.f32 %v164
  %vm173 = vweird.f32 %v166
  %vm174 = vmor %vm172, %vm173
  %v175 = vsel %vm174, %v166, %v171
  %v176 = vrsqrt.pop %v165
  %v177 = vmul.f32 %v176, %v165
  %v178 = vmul.f32 %v177, %v176
  %v179 = vmul.f32 0.5, %v178
  %v180 = vsub.f32 1.5, %v179
  %v181 = vmul.f32 %v176, %v180
  %vm182 = vweird.f32 %v165
  %vm183 = vweird.f32 %v176
  %vm184 = vmor %vm182, %vm183
  %v185 = vsel %vm184, %v176, %v181
  %v186 = vmul.f32 %v152, %v175
  %v187 = vmul.f32 %v153, %v185
  %v188 = vld [vmem:[%s5] sm:$0x1]
  %v190 = vperm.slane %v188, 0
  %v192 = vmul.f32 %v186, %v190
  %v193 = vmul.f32 %v187, %v190
  %v194 = vld [vmem:[%s6] sm:$0x1]
  %v196 = vperm.slane %v194, 0
  %v198 = vadd.f32 %v192, %v196
  %v199 = vadd.f32 %v193, %v196
  %v200 = vld [vmem:[%s7] sm:$0xff]
  %v201 = vld [vmem:[%s7 + $0x8] sm:$0x3f]
  %203 = vset.pattern.permute.xlu0 0
  %204 = vperm.xlu0 %203, %v200
  %v205 = vpop.permute.xlu0 %204
  %208 = vset.pattern.permute.xlu0 0
  %209 = vperm.xlu0 %208, %v201
  %v210 = vpop.permute.xlu0 %209
  %v212 = vmul.f32 %v198, %v205
  %v213 = vmul.f32 %v199, %v210
  %v214 = vpack.c.bf16 %v212, %v212
  %v215 = vpack.c.bf16 %v213, %v213
  %vm216 = vcmask 257024
  %217 = vst.msk [vmem:[%s8] sm:$0xf] %vm216, %v214
  %vm218 = vcmask 256000
  %219 = vst.msk [vmem:[%s8 + $0x4] sm:$0x7] %vm218, %v215
  // Predicated region
  $region34: #{_lambda_.30} parent=0 // pred_check
    _
  $region35: #{_lambda_.30} parent=0 // pred_check_branch
    %221 = sbr.rel (0) target = $region37
  $region36: #{_lambda_.30} parent=0 // pred_region
    _
  $region37: #{_lambda_.30} parent=0 // pred_fallthru
    _
  // Predicated region
  $region38: #{_lambda_.30} parent=0 // pred_check
    _
  $region39: #{_lambda_.30} parent=0 // pred_check_branch
    %223 = sbr.rel (0) target = $region41
  $region40: #{_lambda_.30} parent=0 // pred_region
    _
  $region41: #{_lambda_.30} parent=0 // pred_fallthru
    _

// kernel: _lambda_.37
$region0: #{_lambda_.37}
  #allocation0 [shape = 'u32[]', space=smem, size = 0x4, offset = 0x4, fixed_abs, tag = 'smem constant byte address 0x4 - core index']
  #allocation1 [shape = 'u32[72,128]{1,0:T(1,128)}', space=vmem, size = 0x9000, scoped, tag = 'internal scratch']
  #allocation2 [shape = 'f32[14,128]{1,0:T(8,128)}', space=vmem, size = 0x2000, scoped, tag = 'scratch operand']
  %s0 = inlined_call_operand.vmem [shape: bf16[14,32], index: 0, kind: input, shape index: {}]
  %s1 = inlined_call_operand.vmem [shape: bf16[32,128], index: 1, kind: input, shape index: {}]
  %s2 = inlined_call_operand.vmem [shape: f32[1,128], index: 2, kind: input, shape index: {}]
  %s3 = inlined_call_operand.hbm [shape: f32[14,128], index: 3, kind: output, shape index: {}]
  %s4 = sld [smem:[#allocation0]]
  $region30: #{_lambda_.37} parent=0
    _
  %s6 = ssub.s32 1, %s4
  %s7 = scalar_select 0, %s6, %s4
  $region1: #{_lambda_.37} parent=0
    #allocation3 [shape = 'u8[8192]{0}', space=vmem, size = 0x2000, scoped, tag = 'output window, operand 0, single buffered']
    #allocation4 [shape = 's32[1]{0}', space=sflag, size = 0x4, scoped, tag = 'scoped memory for _lambda_.37']
    %8 = vsyncpa [#allocation4], 0
    // Predicated region
    $region2: #{_lambda_.37} parent=1 // pred_check
      _
    $region3: #{_lambda_.37} parent=1 // pred_check_branch
      %10 = sbr.rel (0) target = $region5
    $region4: #{_lambda_.37} parent=1 // pred_region
      _
    $region5: #{_lambda_.37} parent=1 // pred_fallthru
      _
    // Predicated region
    $region6: #{_lambda_.37} parent=1 // pred_check
      _
    $region7: #{_lambda_.37} parent=1 // pred_check_branch
      %12 = sbr.rel (0) target = $region9
    $region8: #{_lambda_.37} parent=1 // pred_region
      _
    $region9: #{_lambda_.37} parent=1 // pred_fallthru
      _
    // Predicated region
    $region10: #{_lambda_.37} parent=1 // pred_check
      _
    $region11: #{_lambda_.37} parent=1 // pred_check_branch
      %14 = sbr.rel (0) target = $region13
    $region12: #{_lambda_.37} parent=1 // pred_region
      _
    $region13: #{_lambda_.37} parent=1 // pred_fallthru
      _
    %p16 = scmp.eq.s32.totalorder 0, 0
    // Predicated region
    $region14: #{_lambda_.37} parent=1 // pred_check
      %p17 = pneg %p16
    $region15: #{_lambda_.37} parent=1 // pred_check_branch
      %19 = sbr.rel (%p17) target = $region17
    $region16: #{_lambda_.37} parent=1 // pred_region
      %20 = vst [vmem:[#allocation2] sm:$0xff] 0.0
      %21 = vst [vmem:[#allocation2 + $0x8] sm:$0x3f] 0.0
    $region17: #{_lambda_.37} parent=1 // pred_fallthru
      _
    %v22 = vld [vmem:[#allocation2] sm:$0xff]
    %v23 = vld [vmem:[#allocation2 + $0x8] sm:$0x3f]
    %v24 = vld [vmem:[%s0] sm:$0xf]
    %v25 = vld [vmem:[%s0 + $0x4] sm:$0x7]
    %v26 = vld [vmem:[%s1] sm:$0xf]
    %v27 = vld [vmem:[%s1 + $0x4] sm:$0xf]
    %v28 = vld [vmem:[%s1 + $0x8] sm:$0xf]
    %v29 = vld [vmem:[%s1 + $0xc] sm:$0xf]
    %v32 = vunpack.c.l.b16 %v24
    %v33 = vunpack.c.l.b16 %v25
    %v34 = vpack.c.b16 %v33, %v32
    %v39 = vunpack.c.l.b16 %v26
    %v40 = vunpack.c.l.b16 %v27
    %v41 = vunpack.c.l.b16 %v28
    %v42 = vunpack.c.l.b16 %v29
    %v43 = vpack.c.b16 %v40, %v39
    %v44 = vpack.c.b16 %v42, %v41
    %vm47 = vcmask 261120
    %v49 = vsel %vm47, %v34, 0
    %51 = vmatpush.bf16.msra.mxu0 0
    %52 = vmatpush.bf16.msra.mxu0 0
    %53 = vmatpush.bf16.msra.mxu0 0
    %54 = vmatpush.bf16.msra.mxu0 0
    %55 = vmatpush.bf16.msra.mxu0 0
    %56 = vmatpush.bf16.msra.mxu0 0
    %57 = vmatpush.bf16.msra.mxu0 %v44
    %58 = vmatpush.bf16.msra.mxu0 %v43
    %59 = vmatmul.bf16.gmra.mxu0 %v49
    %v60 = vpop.f32.mrf.mxu0
    %v61 = vadd.f32 0.0, %v60
    %v62 = vpop.f32.mrf.mxu0
    %v63 = vadd.f32 0.0, %v62
    %64 = vdwg.mxu0
    %v65 = vadd.f32 %v22, %v61
    %v66 = vadd.f32 %v23, %v63
    %67 = vst [vmem:[#allocation2] sm:$0xff] %v65
    %68 = vst [vmem:[#allocation2 + $0x8] sm:$0x3f] %v66
    // Predicated region
    $region18: #{_lambda_.37} parent=1 // pred_check
      %p69 = pneg %p16
    $region19: #{_lambda_.37} parent=1 // pred_check_branch
      %71 = sbr.rel (%p69) target = $region21
    $region20: #{_lambda_.37} parent=1 // pred_region
      %v72 = vld [vmem:[#allocation2] sm:$0xff]
      %v73 = vld [vmem:[#allocation2 + $0x8] sm:$0x3f]
      %v74 = vld [vmem:[%s2] sm:$0x1]
      %v76 = vperm.slane %v74, 0
      %v78 = vadd.f32 %v72, %v76
      %v79 = vadd.f32 %v73, %v76
      %v80 = vmul.f32 %v78, 0.17677669
      %v81 = vmul.f32 %v79, 0.17677669
      %82 = vst [vmem:[#allocation3] sm:$0xff] %v80
      %83 = vst [vmem:[#allocation3 + $0x8] sm:$0x3f] %v81
    $region21: #{_lambda_.37} parent=1 // pred_fallthru
      _
    // Predicated region
    $region22: #{_lambda_.37} parent=1 // pred_check
      _
    $region23: #{_lambda_.37} parent=1 // pred_check_branch
      %85 = sbr.rel (0) target = $region25
    $region24: #{_lambda_.37} parent=1 // pred_region
      %87 = vsyncadd [#allocation4], 0
      %s88 = sshll.u32 [#allocation3], 4
      %s89 = int_to_ptr.vmem [resolvable:$true] %s88
      %s90 = sshll.u32 %s3, 4
      %s91 = int_to_ptr.hbm [resolvable:$true] %s90
      %96 = dma.vmem_to_hbm [thread:$0]  %s89, 256, %s91, [#allocation4], 128, 128, 8
    $region25: #{_lambda_.37} parent=1 // pred_fallthru
      _
    // Predicated region
    $region26: #{_lambda_.37} parent=1 // pred_check
      _
    $region27: #{_lambda_.37} parent=1 // pred_check_branch
      %98 = sbr.rel (0) target = $region29
    $region28: #{_lambda_.37} parent=1 // pred_region
      %100 = dma.done [#allocation4], 256
    $region29: #{_lambda_.37} parent=1 // pred_fallthru
      _
    %101 = vsyncpa [#allocation4], 1

</llo_original>
